<compile_context>
chip_gen: v5e
topology: v5e:2x2
jax: 0.10.0
libtpu: 0.0.40
codegen_flags: <defaults>
</compile_context>

<pallas_src>
import functools
import math

import jax
import jax.numpy as jnp
import numpy as np
from jax.experimental import pallas as pl
from jax.experimental.pallas import tpu as pltpu

MASK_VALUE = -2.0
LN_EPS = 1e-5


# ---------------------------------------------------------------------------
# In-kernel helpers
# ---------------------------------------------------------------------------
def _layer_norm(x, gamma, beta):
    mu = jnp.mean(x, axis=-1, keepdims=True)
    var = jnp.mean((x - mu) ** 2, axis=-1, keepdims=True)
    return (x - mu) * jax.lax.rsqrt(var + LN_EPS) * gamma + beta


def _fused_bigru_scan(xp, whh, bhh, *, T, B, H, y_ref=None):
    """Scan of 4 GRU directions fused into one 4H-wide packed hidden state.

    xp  : (T*B, 3*4H) f32, gate-major packed input projection (b_ih already added),
          rows in time-major order.
    whh : (4H, 3*4H) bf16, block-diagonal gate-major recurrent weight.
    bhh : (1, 3*4H) f32.
    Packed lane layout (width 4H): [v-fwd | l-fwd | v-bwd | l-bwd], H lanes each.
    Backward directions consume xp rows in reverse time order (selected per step with a
    static lane mask), so fwd and bwd advance together with zero extra serial steps.

    If y_ref is given, the full bidirectional sequence output (packed layout, time-major)
    is written into it.  Returns (h_final, h_bwd_at_last_time_step).
    """
    W = 4 * H
    GW = 3 * W
    lane = jax.lax.broadcasted_iota(jnp.int32, (1, GW), 1)
    fwd_mask = (lane % W) < (2 * H)        # fwd streams sit in the low half of each gate block

    h = jnp.zeros((B, W), jnp.float32)
    h_bwd_last = None
    for k in range(T):                     # T is small & static -> unrolled
        row_f = xp[k * B:(k + 1) * B, :]
        row_b = xp[(T - 1 - k) * B:(T - k) * B, :]
        xk = jnp.where(fwd_mask, row_f, row_b)                 # off the h-carry chain
        hp = jnp.dot(h.astype(jnp.bfloat16), whh,
                     preferred_element_type=jnp.float32) + bhh  # (B, 3*4H), one MXU pass
        r = jax.nn.sigmoid(xk[:, 0:W] + hp[:, 0:W])
        z = jax.nn.sigmoid(xk[:, W:2 * W] + hp[:, W:2 * W])
        n = jnp.tanh(xk[:, 2 * W:3 * W] + r * hp[:, 2 * W:3 * W])
        h = (1.0 - z) * n + z * h
        if k == 0:
            h_bwd_last = h[:, 2 * H:W]     # bwd hidden after seeing x[T-1] only
        if y_ref is not None:
            # fwd lanes hold time step k, bwd lanes hold time step T-1-k
            y_ref[k * B:(k + 1) * B, 0:2 * H] = h[:, 0:2 * H]
            y_ref[(T - 1 - k) * B:(T - k) * B, 2 * H:W] = h[:, 2 * H:W]
    return h, h_bwd_last


def rnn_model_kernel(x_ref, w_ref, b_ref, ln_ref, fcw_ref, fcb_ref,
                     o_ref, y1_ref, y2_ref, *, T, B, H):
    W = 4 * H
    f32 = jnp.float32
    bf16 = jnp.bfloat16

    b = b_ref[...]                                 # (6, 3*4H): rows 0-2 b_ih, 3-5 b_hh
    x = x_ref[...]                                 # (T*B, 4H): [vitals | labs | 0-pad]
    x = jnp.where(x == MASK_VALUE, 0.0, x)

    # ---- layer 1 ----
    xp = jnp.dot(x.astype(bf16), w_ref[0], preferred_element_type=f32) + b[0:1]
    _fused_bigru_scan(xp, w_ref[3], b[3:4], T=T, B=B, H=H, y_ref=y1_ref)

    # ---- layer 2 ----
    xp = jnp.dot(y1_ref[...].astype(bf16), w_ref[1], preferred_element_type=f32) + b[1:2]
    _fused_bigru_scan(xp, w_ref[4], b[4:5], T=T, B=B, H=H, y_ref=y2_ref)

    # ---- layer 3 (only the last time step is consumed) ----
    xp = jnp.dot(y2_ref[...].astype(bf16), w_ref[2], preferred_element_type=f32) + b[2:3]
    h3, h3_bwd = _fused_bigru_scan(xp, w_ref[5], b[5:6], T=T, B=B, H=H)

    # Last-time-step features back in PyTorch order: [vfwd|vbwd] and [lfwd|lbwd].
    v_feat = jnp.concatenate([h3[:, 0:H], h3_bwd[:, 0:H]], axis=1)            # (B, 2H)
    l_feat = jnp.concatenate([h3[:, H:2 * H], h3_bwd[:, H:2 * H]], axis=1)    # (B, 2H)

    ln = ln_ref[...]                               # (2, 4H): [gamma_v|gamma_l], [beta_v|beta_l]
    v_feat = _layer_norm(v_feat, ln[0:1, 0:2 * H], ln[1:2, 0:2 * H])
    l_feat = _layer_norm(l_feat, ln[0:1, 2 * H:4 * H], ln[1:2, 2 * H:4 * H])
    # vitals_dropout / labs_dropout are identity in eval mode.
    merged = jnp.concatenate([v_feat, l_feat], axis=1)                        # (B, 4H)

    fcw = fcw_ref[...]
    fcb = fcb_ref[...]
    x1 = jnp.maximum(jnp.dot(merged, fcw[0:4 * H, 0:H],
                             preferred_element_type=f32) + fcb[0:1, 0:H], 0.0)
    x2 = jnp.maximum(jnp.dot(x1, fcw[4 * H:5 * H, 0:H // 2],
                             preferred_element_type=f32) + fcb[1:2, 0:H // 2], 0.0)
    out = jax.nn.sigmoid(jnp.dot(x2, fcw[5 * H:5 * H + H // 2, 0:1],
                                 preferred_element_type=f32) + fcb[2:3, 0:1])
    o_ref[...] = out.astype(o_ref.dtype)


# ---------------------------------------------------------------------------
# Host-side packing (fused, gate-major, block-diagonal weights; few big operands)
# ---------------------------------------------------------------------------
def _pack_params(params):
    H = params["vitals"]["gru"][0]["whh"].shape[1]
    Dv = params["vitals"]["gru"][0]["wih"].shape[1]
    Dl = params["labs"]["gru"][0]["wih"].shape[1]
    W = 4 * H                 # packed hidden width: [v-fwd | l-fwd | v-bwd | l-bwd]
    GW = 3 * W                # gate-major: r | z | n, each W lanes wide
    assert Dv + Dl <= W, "layer-1 inputs must fit in the packed width"

    # (source, direction index, packed slot)
    streams = [("vitals", 0, 0), ("labs", 0, 1), ("vitals", 1, 2), ("labs", 1, 3)]

    w_ih = np.zeros((3, W, GW), np.float32)
    w_hh = np.zeros((3, W, GW), np.float32)
    b_ih = np.zeros((3, GW), np.float32)
    b_hh = np.zeros((3, GW), np.float32)

    for l in range(3):
        for src, d, slot in streams:
            layer = params[src]["gru"][l]
            wih = np.asarray(layer["wih"][d])                 # (in_dim, 3H), gates r|z|n
            whh = np.asarray(layer["whh"][d])                 # (H, 3H)
            bih = np.asarray(layer["bih"][d]).reshape(-1)     # (3H,)
            bhh = np.asarray(layer["bhh"][d]).reshape(-1)
            o = slot * H
            for g in range(3):
                col = g * W + o
                w_hh[l, o:o + H, col:col + H] = whh[:, g * H:(g + 1) * H]
                b_hh[l, col:col + H] = bhh[g * H:(g + 1) * H]
                b_ih[l, col:col + H] = bih[g * H:(g + 1) * H]
                if l == 0:
                    r0 = 0 if src == "vitals" else Dv
                    w_ih[l, r0:r0 + wih.shape[0], col:col + H] = wih[:, g * H:(g + 1) * H]
                else:
                    rf = (0 if src == "vitals" else 1) * H    # prev fwd output lanes
                    rb = (2 if src == "vitals" else 3) * H    # prev bwd output lanes
                    w_ih[l, rf:rf + H, col:col + H] = wih[0:H, g * H:(g + 1) * H]
                    w_ih[l, rb:rb + H, col:col + H] = wih[H:2 * H, g * H:(g + 1) * H]

    ln = np.zeros((2, W), np.float32)
    ln[0, 0:2 * H] = np.asarray(params["vitals"]["ln_g"]).reshape(-1)
    ln[0, 2 * H:W] = np.asarray(params["labs"]["ln_g"]).reshape(-1)
    ln[1, 0:2 * H] = np.asarray(params["vitals"]["ln_b"]).reshape(-1)
    ln[1, 2 * H:W] = np.asarray(params["labs"]["ln_b"]).reshape(-1)

    fc_w = np.zeros((4 * H + H + H // 2, H), np.float32)
    fc_w[0:4 * H, 0:H] = np.asarray(params["fc1_w"])
    fc_w[4 * H:5 * H, 0:H // 2] = np.asarray(params["fc2_w"])
    fc_w[5 * H:5 * H + H // 2, 0:1] = np.asarray(params["out_w"])
    fc_b = np.zeros((3, H), np.float32)
    fc_b[0, 0:H] = np.asarray(params["fc1_b"]).reshape(-1)
    fc_b[1, 0:H // 2] = np.asarray(params["fc2_b"]).reshape(-1)
    fc_b[2, 0:1] = np.asarray(params["out_b"]).reshape(-1)

    return dict(
        w=jnp.asarray(np.concatenate([w_ih, w_hh], axis=0), dtype=jnp.bfloat16),  # (6,4H,3*4H)
        b=jnp.asarray(np.concatenate([b_ih, b_hh], axis=0), dtype=jnp.float32),   # (6,3*4H)
        ln=jnp.asarray(ln),
        fc_w=jnp.asarray(fc_w),
        fc_b=jnp.asarray(fc_b),
        H=H,
    )


def _pack_inputs(vitals, labs, W):
    """(B,T,Dv)+(B,T,Dl) -> one time-major flattened (T*B, W) f32 buffer (zero-padded)."""
    if vitals.ndim == 2:
        vitals = vitals[:, None, :]
    if labs.ndim == 2:
        labs = labs[:, None, :]
    B, T, Dv = vitals.shape
    Bl, Tl, Dl = labs.shape
    assert B == Bl
    # TODO(synk): support Tv != Tl (would need two separate fused scans of length Tv / Tl).
    assert T == Tl, "fused kernel assumes both streams share the sequence length"
    v2 = jnp.transpose(vitals, (1, 0, 2)).reshape(T * B, Dv)
    l2 = jnp.transpose(labs, (1, 0, 2)).reshape(T * B, Dl)
    x = jnp.concatenate([v2, l2], axis=1).astype(jnp.float32)
    x = jnp.pad(x, ((0, 0), (0, W - Dv - Dl)))
    return x, T, B


def rnn_model_forward(vitals, labs, params):
    """Pallas forward. vitals: (B, T, 7) or (B, 7); labs: (B, T, 16) or (B, 16)."""
    packed = _pack_params(params)
    H = packed["H"]
    W = 4 * H
    x, T, B = _pack_inputs(vitals, labs, W)

    kernel = functools.partial(rnn_model_kernel, T=T, B=B, H=H)
    return pl.pallas_call(
        kernel,
        out_shape=jax.ShapeDtypeStruct((B, 1), jnp.float32),
        scratch_shapes=[pltpu.VMEM((T * B, W), jnp.float32),   # layer-1 sequence output
                        pltpu.VMEM((T * B, W), jnp.float32)],  # layer-2 sequence output
    )(x, packed["w"], packed["b"], packed["ln"], packed["fc_w"], packed["fc_b"])


# ---------------------------------------------------------------------------
# Independent (unfused) pure-JAX reference — validates the packing end to end.
# Same numerics intent as the kernel: bf16 MXU inputs, f32 everything else.
# ---------------------------------------------------------------------------
def _gru_cell_ref(x_t, h, wih, whh, bih, bhh):
    H = h.shape[-1]
    bf16 = jnp.bfloat16
    xp = jnp.dot(x_t.astype(bf16), wih.astype(bf16), preferred_element_type=jnp.float32) + bih
    hp = jnp.dot(h.astype(bf16), whh.astype(bf16), preferred_element_type=jnp.float32) + bhh
    r = jax.nn.sigmoid(xp[:, 0:H] + hp[:, 0:H])
    z = jax.nn.sigmoid(xp[:, H:2 * H] + hp[:, H:2 * H])
    n = jnp.tanh(xp[:, 2 * H:3 * H] + r * hp[:, 2 * H:3 * H])
    return (1.0 - z) * n + z * h


def _bigru_ref(x, layer):
    """x: (B, T, in) -> (B, T, 2H)."""
    B, T, _ = x.shape
    H = layer["whh"].shape[1]
    outs_f, outs_b = [], [None] * T
    h = jnp.zeros((B, H), jnp.float32)
    for t in range(T):
        h = _gru_cell_ref(x[:, t], h, layer["wih"][0], layer["whh"][0],
                          layer["bih"][0], layer["bhh"][0])
        outs_f.append(h)
    h = jnp.zeros((B, H), jnp.float32)
    for t in range(T - 1, -1, -1):
        h = _gru_cell_ref(x[:, t], h, layer["wih"][1], layer["whh"][1],
                          layer["bih"][1], layer["bhh"][1])
        outs_b[t] = h
    return jnp.stack(
        [jnp.concatenate([outs_f[t], outs_b[t]], axis=-1) for t in range(T)], axis=1)


def rnn_model_reference(vitals, labs, params):
    def stream(x, p):
        x = jnp.where(x == MASK_VALUE, 0.0, x).astype(jnp.float32)
        if x.ndim == 2:
            x = x[:, None, :]
        for layer in p["gru"]:
            x = _bigru_ref(x, layer)
        return _layer_norm(x[:, -1, :], p["ln_g"], p["ln_b"])

    v = stream(vitals, params["vitals"])
    l = stream(labs, params["labs"])
    merged = jnp.concatenate([v, l], axis=-1)
    x = jnp.maximum(jnp.dot(merged, params["fc1_w"],
                            preferred_element_type=jnp.float32) + params["fc1_b"], 0.0)
    x = jnp.maximum(jnp.dot(x, params["fc2_w"],
                            preferred_element_type=jnp.float32) + params["fc2_b"], 0.0)
    return jax.nn.sigmoid(jnp.dot(x, params["out_w"],
                                  preferred_element_type=jnp.float32) + params["out_b"])


# ---------------------------------------------------------------------------
# Parameter init (PyTorch-style uniform(-1/sqrt(fan), +); weights pre-transposed for x@W)
# ---------------------------------------------------------------------------
def init_params(key, vitals_input_dim=7, labs_input_dim=16, hidden_dim=32):
    H = hidden_dim

    def uniform(k, shape, bound):
        return jax.random.uniform(k, shape, jnp.float32, -bound, bound)

    def gru_layer(k, in_dim):
        ks = jax.random.split(k, 4)
        b = 1.0 / math.sqrt(H)
        return {
            "wih": uniform(ks[0], (2, in_dim, 3 * H), b),   # [fwd, bwd], gate order r|z|n
            "whh": uniform(ks[1], (2, H, 3 * H), b),
            "bih": uniform(ks[2], (2, 1, 3 * H), b),
            "bhh": uniform(ks[3], (2, 1, 3 * H), b),
        }

    def stream_params(k, in_dim):
        ks = jax.random.split(k, 3)
        return {
            "gru": [gru_layer(ks[0], in_dim),
                    gru_layer(ks[1], 2 * H),
                    gru_layer(ks[2], 2 * H)],
            "ln_g": jnp.ones((1, 2 * H), jnp.float32),      # nn.LayerNorm defaults
            "ln_b": jnp.zeros((1, 2 * H), jnp.float32),
        }

    kv, kl, k1, k2, k3, k4, k5, k6 = jax.random.split(key, 8)
    return {
        "vitals": stream_params(kv, vitals_input_dim),
        "labs": stream_params(kl, labs_input_dim),
        "fc1_w": uniform(k1, (4 * H, H), 1.0 / math.sqrt(4 * H)),
        "fc1_b": uniform(k2, (1, H), 1.0 / math.sqrt(4 * H)),
        "fc2_w": uniform(k3, (H, H // 2), 1.0 / math.sqrt(H)),
        "fc2_b": uniform(k4, (1, H // 2), 1.0 / math.sqrt(H)),
        "out_w": uniform(k5, (H // 2, 1), 1.0 / math.sqrt(H // 2)),
        "out_b": uniform(k6, (1, 1), 1.0 / math.sqrt(H // 2)),
    }


if __name__ == "__main__":
    B, T = 8, 8
    VITALS_DIM, LABS_DIM, HIDDEN = 7, 16, 32

    key = jax.random.PRNGKey(0)
    kv, kl, km1, km2, kp = jax.random.split(key, 5)
    vitals = jax.random.normal(kv, (B, T, VITALS_DIM), jnp.float32)
    labs = jax.random.normal(kl, (B, T, LABS_DIM), jnp.float32)
    # Sprinkle in mask_value entries so the masking branch is exercised.
    vitals = jnp.where(jax.random.bernoulli(km1, 0.15, vitals.shape), MASK_VALUE, vitals)
    labs = jnp.where(jax.random.bernoulli(km2, 0.15, labs.shape), MASK_VALUE, labs)

    params = init_params(kp, VITALS_DIM, LABS_DIM, HIDDEN)

    out = jax.block_until_ready(rnn_model_forward(vitals, labs, params))

    assert out.shape == (B, 1) and out.dtype == jnp.float32
    assert bool(jnp.all(jnp.isfinite(out)))
    assert bool(jnp.all((out > 0.0) & (out < 1.0)))          # sigmoid output range

    # Parity against an independent, unfused per-stream implementation (same bf16-matmul
    # / f32-elsewhere numerics); validates the fused block-diagonal packing end to end.
    with jax.default_matmul_precision("highest"):
        ref = jax.block_until_ready(jax.jit(rnn_model_reference)(vitals, labs, params))
    assert bool(jnp.allclose(out, ref, atol=1e-3, rtol=1e-3)), \
        f"max abs diff {float(jnp.max(jnp.abs(out - ref)))}"

    print("KERNEL_OK")
</pallas_src>

<mosaic_0001>
module attributes {stable_mosaic.version = 11 : i64} {
  func.func @rnn_model_kernel(%arg0: memref<64x128xf32, #tpu.memory_space<vmem>>, %arg1: memref<6x128x384xbf16, #tpu.memory_space<vmem>>, %arg2: memref<6x384xf32, #tpu.memory_space<vmem>>, %arg3: memref<2x128xf32, #tpu.memory_space<vmem>>, %arg4: memref<176x32xf32, #tpu.memory_space<vmem>>, %arg5: memref<3x32xf32, #tpu.memory_space<vmem>>, %arg6: memref<8x1xf32, #tpu.memory_space<vmem>>, %arg7: memref<64x128xf32, #tpu.memory_space<vmem>>, %arg8: memref<64x128xf32, #tpu.memory_space<vmem>>) attributes {dimension_semantics = [], scalar_prefetch = 0 : i64, scratch_operands = 2 : i64, tpu.core_type = #tpu.core_type<tc>} {
    %c0 = arith.constant 0 : index
    %c0_0 = arith.constant 0 : index
    %0 = vector.load %arg2[%c0, %c0_0] : memref<6x384xf32, #tpu.memory_space<vmem>>, vector<6x384xf32>
    %c0_1 = arith.constant 0 : index
    %c0_2 = arith.constant 0 : index
    %1 = vector.load %arg0[%c0_1, %c0_2] : memref<64x128xf32, #tpu.memory_space<vmem>>, vector<64x128xf32>
    %cst = arith.constant -2.000000e+00 : f32
    %2 = vector.broadcast %cst : f32 to vector<64x128xf32>
    %3 = arith.cmpf oeq, %1, %2 : vector<64x128xf32>
    %cst_3 = arith.constant 0.000000e+00 : f32
    %4 = vector.broadcast %cst_3 : f32 to vector<64x128xf32>
    %5 = arith.select %3, %4, %1 : vector<64x128xi1>, vector<64x128xf32>
    %6 = arith.truncf %5 : vector<64x128xf32> to vector<64x128xbf16>
    %c0_4 = arith.constant 0 : index
    %c0_5 = arith.constant 0 : index
    %c0_6 = arith.constant 0 : index
    %7 = vector.load %arg1[%c0_4, %c0_5, %c0_6] : memref<6x128x384xbf16, #tpu.memory_space<vmem>>, vector<1x128x384xbf16>
    %8 = vector.shape_cast %7 : vector<1x128x384xbf16> to vector<128x384xbf16>
    %cst_7 = arith.constant dense<0.000000e+00> : vector<64x384xf32>
    %9 = tpu.matmul %6, %8, %cst_7 {dimension_numbers = #tpu.dot_dimension_numbers<[1], [0], [0], [1], [0, 0, 1, 1], [], []>} : vector<64x128xbf16>, vector<128x384xbf16>, vector<64x384xf32> -> vector<64x384xf32>
    %10 = vector.extract_strided_slice %0 {offsets = [0, 0], sizes = [1, 384], strides = [1, 1]} : vector<6x384xf32> to vector<1x384xf32>
    %11 = vector.broadcast %10 : vector<1x384xf32> to vector<64x384xf32>
    %12 = arith.addf %9, %11 : vector<64x384xf32>
    %c3 = arith.constant 3 : index
    %c0_8 = arith.constant 0 : index
    %c0_9 = arith.constant 0 : index
    %13 = vector.load %arg1[%c3, %c0_8, %c0_9] : memref<6x128x384xbf16, #tpu.memory_space<vmem>>, vector<1x128x384xbf16>
    %14 = vector.shape_cast %13 : vector<1x128x384xbf16> to vector<128x384xbf16>
    %15 = vector.extract_strided_slice %0 {offsets = [3, 0], sizes = [1, 384], strides = [1, 1]} : vector<6x384xf32> to vector<1x384xf32>
    %16 = tpu.iota {dimensions = array<i32: 1>} : vector<1x384xi32>
    %c128_i32 = arith.constant 128 : i32
    %c0_i32 = arith.constant 0 : i32
    %17 = arith.cmpi eq, %c128_i32, %c0_i32 : i32
    %c1_i32 = arith.constant 1 : i32
    %18 = arith.select %17, %c1_i32, %c128_i32 : i32
    %19 = vector.broadcast %18 : i32 to vector<1x384xi32>
    %20 = arith.remsi %16, %19 : vector<1x384xi32>
    %c0_i32_10 = arith.constant 0 : i32
    %21 = vector.broadcast %c0_i32_10 : i32 to vector<1x384xi32>
    %22 = arith.cmpi ne, %20, %21 : vector<1x384xi32>
    %c0_i32_11 = arith.constant 0 : i32
    %23 = vector.broadcast %c0_i32_11 : i32 to vector<1x384xi32>
    %24 = arith.cmpi slt, %20, %23 : vector<1x384xi32>
    %c0_i32_12 = arith.constant 0 : i32
    %25 = arith.cmpi slt, %18, %c0_i32_12 : i32
    %26 = vector.broadcast %25 : i1 to vector<1x384xi1>
    %27 = vector.broadcast %26 : vector<1x384xi1> to vector<1x384xi1>
    %28 = arith.xori %24, %27 : vector<1x384xi1>
    %29 = arith.andi %28, %22 : vector<1x384xi1>
    %30 = vector.broadcast %18 : i32 to vector<1x384xi32>
    %31 = arith.addi %20, %30 : vector<1x384xi32>
    %32 = arith.select %29, %31, %20 : vector<1x384xi1>, vector<1x384xi32>
    %c64_i32 = arith.constant 64 : i32
    %33 = vector.broadcast %c64_i32 : i32 to vector<1x384xi32>
    %34 = arith.cmpi slt, %32, %33 : vector<1x384xi32>
    %cst_13 = arith.constant 0.000000e+00 : f32
    %35 = vector.broadcast %cst_13 : f32 to vector<8x128xf32>
    %36 = vector.extract_strided_slice %12 {offsets = [0, 0], sizes = [8, 384], strides = [1, 1]} : vector<64x384xf32> to vector<8x384xf32>
    %37 = vector.extract_strided_slice %12 {offsets = [56, 0], sizes = [8, 384], strides = [1, 1]} : vector<64x384xf32> to vector<8x384xf32>
    %38 = vector.shape_cast %34 : vector<1x384xi1> to vector<1x384xi1>
    %39 = vector.broadcast %38 : vector<1x384xi1> to vector<8x384xi1>
    %40 = arith.select %39, %36, %37 : vector<8x384xi1>, vector<8x384xf32>
    %41 = arith.truncf %35 : vector<8x128xf32> to vector<8x128xbf16>
    %cst_14 = arith.constant dense<0.000000e+00> : vector<8x384xf32>
    %42 = tpu.matmul %41, %14, %cst_14 {dimension_numbers = #tpu.dot_dimension_numbers<[1], [0], [0], [1], [0, 0, 1, 1], [], []>} : vector<8x128xbf16>, vector<128x384xbf16>, vector<8x384xf32> -> vector<8x384xf32>
    %43 = vector.broadcast %15 : vector<1x384xf32> to vector<8x384xf32>
    %44 = arith.addf %42, %43 : vector<8x384xf32>
    %45 = vector.extract_strided_slice %40 {offsets = [0, 0], sizes = [8, 128], strides = [1, 1]} : vector<8x384xf32> to vector<8x128xf32>
    %46 = vector.extract_strided_slice %44 {offsets = [0, 0], sizes = [8, 128], strides = [1, 1]} : vector<8x384xf32> to vector<8x128xf32>
    %47 = arith.addf %45, %46 : vector<8x128xf32>
    %48 = arith.negf %47 : vector<8x128xf32>
    %49 = math.exp %48 : vector<8x128xf32>
    %cst_15 = arith.constant 1.000000e+00 : f32
    %50 = vector.broadcast %cst_15 : f32 to vector<8x128xf32>
    %51 = arith.addf %50, %49 : vector<8x128xf32>
    %52 = arith.divf %50, %51 : vector<8x128xf32>
    %53 = vector.extract_strided_slice %40 {offsets = [0, 128], sizes = [8, 128], strides = [1, 1]} : vector<8x384xf32> to vector<8x128xf32>
    %54 = vector.extract_strided_slice %44 {offsets = [0, 128], sizes = [8, 128], strides = [1, 1]} : vector<8x384xf32> to vector<8x128xf32>
    %55 = arith.addf %53, %54 : vector<8x128xf32>
    %56 = arith.negf %55 : vector<8x128xf32>
    %57 = math.exp %56 : vector<8x128xf32>
    %cst_16 = arith.constant 1.000000e+00 : f32
    %58 = vector.broadcast %cst_16 : f32 to vector<8x128xf32>
    %59 = arith.addf %58, %57 : vector<8x128xf32>
    %60 = arith.divf %58, %59 : vector<8x128xf32>
    %61 = vector.extract_strided_slice %40 {offsets = [0, 256], sizes = [8, 128], strides = [1, 1]} : vector<8x384xf32> to vector<8x128xf32>
    %62 = vector.extract_strided_slice %44 {offsets = [0, 256], sizes = [8, 128], strides = [1, 1]} : vector<8x384xf32> to vector<8x128xf32>
    %63 = arith.mulf %52, %62 : vector<8x128xf32>
    %64 = arith.addf %61, %63 : vector<8x128xf32>
    %65 = math.tanh %64 : vector<8x128xf32>
    %cst_17 = arith.constant 1.000000e+00 : f32
    %66 = vector.broadcast %cst_17 : f32 to vector<8x128xf32>
    %67 = arith.subf %66, %60 : vector<8x128xf32>
    %68 = arith.mulf %67, %65 : vector<8x128xf32>
    %69 = arith.mulf %60, %35 : vector<8x128xf32>
    %70 = arith.addf %68, %69 : vector<8x128xf32>
    %71 = vector.extract_strided_slice %70 {offsets = [0, 0], sizes = [8, 64], strides = [1, 1]} : vector<8x128xf32> to vector<8x64xf32>
    %c0_18 = arith.constant 0 : index
    %c0_19 = arith.constant 0 : index
    %72 = vector.load %arg7[%c0_18, %c0_19] : memref<64x128xf32, #tpu.memory_space<vmem>>, vector<8x64xf32>
    tpu.vector_store %arg7[%c0_18, %c0_19], %71 {strides = array<i32>} : memref<64x128xf32, #tpu.memory_space<vmem>>, vector<8x64xf32>,
    %73 = vector.extract_strided_slice %70 {offsets = [0, 64], sizes = [8, 64], strides = [1, 1]} : vector<8x128xf32> to vector<8x64xf32>
    %c56 = arith.constant 56 : index
    %c64 = arith.constant 64 : index
    %74 = vector.load %arg7[%c56, %c64] : memref<64x128xf32, #tpu.memory_space<vmem>>, vector<8x64xf32>
    tpu.vector_store %arg7[%c56, %c64], %73 {strides = array<i32>} : memref<64x128xf32, #tpu.memory_space<vmem>>, vector<8x64xf32>,
    %75 = vector.extract_strided_slice %12 {offsets = [8, 0], sizes = [8, 384], strides = [1, 1]} : vector<64x384xf32> to vector<8x384xf32>
    %76 = vector.extract_strided_slice %12 {offsets = [48, 0], sizes = [8, 384], strides = [1, 1]} : vector<64x384xf32> to vector<8x384xf32>
    %77 = vector.shape_cast %34 : vector<1x384xi1> to vector<1x384xi1>
    %78 = vector.broadcast %77 : vector<1x384xi1> to vector<8x384xi1>
    %79 = arith.select %78, %75, %76 : vector<8x384xi1>, vector<8x384xf32>
    %80 = arith.truncf %70 : vector<8x128xf32> to vector<8x128xbf16>
    %cst_20 = arith.constant dense<0.000000e+00> : vector<8x384xf32>
    %81 = tpu.matmul %80, %14, %cst_20 {dimension_numbers = #tpu.dot_dimension_numbers<[1], [0], [0], [1], [0, 0, 1, 1], [], []>} : vector<8x128xbf16>, vector<128x384xbf16>, vector<8x384xf32> -> vector<8x384xf32>
    %82 = vector.broadcast %15 : vector<1x384xf32> to vector<8x384xf32>
    %83 = arith.addf %81, %82 : vector<8x384xf32>
    %84 = vector.extract_strided_slice %79 {offsets = [0, 0], sizes = [8, 128], strides = [1, 1]} : vector<8x384xf32> to vector<8x128xf32>
    %85 = vector.extract_strided_slice %83 {offsets = [0, 0], sizes = [8, 128], strides = [1, 1]} : vector<8x384xf32> to vector<8x128xf32>
    %86 = arith.addf %84, %85 : vector<8x128xf32>
    %87 = arith.negf %86 : vector<8x128xf32>
    %88 = math.exp %87 : vector<8x128xf32>
    %cst_21 = arith.constant 1.000000e+00 : f32
    %89 = vector.broadcast %cst_21 : f32 to vector<8x128xf32>
    %90 = arith.addf %89, %88 : vector<8x128xf32>
    %91 = arith.divf %89, %90 : vector<8x128xf32>
    %92 = vector.extract_strided_slice %79 {offsets = [0, 128], sizes = [8, 128], strides = [1, 1]} : vector<8x384xf32> to vector<8x128xf32>
    %93 = vector.extract_strided_slice %83 {offsets = [0, 128], sizes = [8, 128], strides = [1, 1]} : vector<8x384xf32> to vector<8x128xf32>
    %94 = arith.addf %92, %93 : vector<8x128xf32>
    %95 = arith.negf %94 : vector<8x128xf32>
    %96 = math.exp %95 : vector<8x128xf32>
    %cst_22 = arith.constant 1.000000e+00 : f32
    %97 = vector.broadcast %cst_22 : f32 to vector<8x128xf32>
    %98 = arith.addf %97, %96 : vector<8x128xf32>
    %99 = arith.divf %97, %98 : vector<8x128xf32>
    %100 = vector.extract_strided_slice %79 {offsets = [0, 256], sizes = [8, 128], strides = [1, 1]} : vector<8x384xf32> to vector<8x128xf32>
    %101 = vector.extract_strided_slice %83 {offsets = [0, 256], sizes = [8, 128], strides = [1, 1]} : vector<8x384xf32> to vector<8x128xf32>
    %102 = arith.mulf %91, %101 : vector<8x128xf32>
    %103 = arith.addf %100, %102 : vector<8x128xf32>
    %104 = math.tanh %103 : vector<8x128xf32>
    %cst_23 = arith.constant 1.000000e+00 : f32
    %105 = vector.broadcast %cst_23 : f32 to vector<8x128xf32>
    %106 = arith.subf %105, %99 : vector<8x128xf32>
    %107 = arith.mulf %106, %104 : vector<8x128xf32>
    %108 = arith.mulf %99, %70 : vector<8x128xf32>
    %109 = arith.addf %107, %108 : vector<8x128xf32>
    %110 = vector.extract_strided_slice %109 {offsets = [0, 0], sizes = [8, 64], strides = [1, 1]} : vector<8x128xf32> to vector<8x64xf32>
    %c8 = arith.constant 8 : index
    %c0_24 = arith.constant 0 : index
    %111 = vector.load %arg7[%c8, %c0_24] : memref<64x128xf32, #tpu.memory_space<vmem>>, vector<8x64xf32>
    tpu.vector_store %arg7[%c8, %c0_24], %110 {strides = array<i32>} : memref<64x128xf32, #tpu.memory_space<vmem>>, vector<8x64xf32>,
    %112 = vector.extract_strided_slice %109 {offsets = [0, 64], sizes = [8, 64], strides = [1, 1]} : vector<8x128xf32> to vector<8x64xf32>
    %c48 = arith.constant 48 : index
    %c64_25 = arith.constant 64 : index
    %113 = vector.load %arg7[%c48, %c64_25] : memref<64x128xf32, #tpu.memory_space<vmem>>, vector<8x64xf32>
    tpu.vector_store %arg7[%c48, %c64_25], %112 {strides = array<i32>} : memref<64x128xf32, #tpu.memory_space<vmem>>, vector<8x64xf32>,
    %114 = vector.extract_strided_slice %12 {offsets = [16, 0], sizes = [8, 384], strides = [1, 1]} : vector<64x384xf32> to vector<8x384xf32>
    %115 = vector.extract_strided_slice %12 {offsets = [40, 0], sizes = [8, 384], strides = [1, 1]} : vector<64x384xf32> to vector<8x384xf32>
    %116 = vector.shape_cast %34 : vector<1x384xi1> to vector<1x384xi1>
    %117 = vector.broadcast %116 : vector<1x384xi1> to vector<8x384xi1>
    %118 = arith.select %117, %114, %115 : vector<8x384xi1>, vector<8x384xf32>
    %119 = arith.truncf %109 : vector<8x128xf32> to vector<8x128xbf16>
    %cst_26 = arith.constant dense<0.000000e+00> : vector<8x384xf32>
    %120 = tpu.matmul %119, %14, %cst_26 {dimension_numbers = #tpu.dot_dimension_numbers<[1], [0], [0], [1], [0, 0, 1, 1], [], []>} : vector<8x128xbf16>, vector<128x384xbf16>, vector<8x384xf32> -> vector<8x384xf32>
    %121 = vector.broadcast %15 : vector<1x384xf32> to vector<8x384xf32>
    %122 = arith.addf %120, %121 : vector<8x384xf32>
    %123 = vector.extract_strided_slice %118 {offsets = [0, 0], sizes = [8, 128], strides = [1, 1]} : vector<8x384xf32> to vector<8x128xf32>
    %124 = vector.extract_strided_slice %122 {offsets = [0, 0], sizes = [8, 128], strides = [1, 1]} : vector<8x384xf32> to vector<8x128xf32>
    %125 = arith.addf %123, %124 : vector<8x128xf32>
    %126 = arith.negf %125 : vector<8x128xf32>
    %127 = math.exp %126 : vector<8x128xf32>
    %cst_27 = arith.constant 1.000000e+00 : f32
    %128 = vector.broadcast %cst_27 : f32 to vector<8x128xf32>
    %129 = arith.addf %128, %127 : vector<8x128xf32>
    %130 = arith.divf %128, %129 : vector<8x128xf32>
    %131 = vector.extract_strided_slice %118 {offsets = [0, 128], sizes = [8, 128], strides = [1, 1]} : vector<8x384xf32> to vector<8x128xf32>
    %132 = vector.extract_strided_slice %122 {offsets = [0, 128], sizes = [8, 128], strides = [1, 1]} : vector<8x384xf32> to vector<8x128xf32>
    %133 = arith.addf %131, %132 : vector<8x128xf32>
    %134 = arith.negf %133 : vector<8x128xf32>
    %135 = math.exp %134 : vector<8x128xf32>
    %cst_28 = arith.constant 1.000000e+00 : f32
    %136 = vector.broadcast %cst_28 : f32 to vector<8x128xf32>
    %137 = arith.addf %136, %135 : vector<8x128xf32>
    %138 = arith.divf %136, %137 : vector<8x128xf32>
    %139 = vector.extract_strided_slice %118 {offsets = [0, 256], sizes = [8, 128], strides = [1, 1]} : vector<8x384xf32> to vector<8x128xf32>
    %140 = vector.extract_strided_slice %122 {offsets = [0, 256], sizes = [8, 128], strides = [1, 1]} : vector<8x384xf32> to vector<8x128xf32>
    %141 = arith.mulf %130, %140 : vector<8x128xf32>
    %142 = arith.addf %139, %141 : vector<8x128xf32>
    %143 = math.tanh %142 : vector<8x128xf32>
    %cst_29 = arith.constant 1.000000e+00 : f32
    %144 = vector.broadcast %cst_29 : f32 to vector<8x128xf32>
    %145 = arith.subf %144, %138 : vector<8x128xf32>
    %146 = arith.mulf %145, %143 : vector<8x128xf32>
    %147 = arith.mulf %138, %109 : vector<8x128xf32>
    %148 = arith.addf %146, %147 : vector<8x128xf32>
    %149 = vector.extract_strided_slice %148 {offsets = [0, 0], sizes = [8, 64], strides = [1, 1]} : vector<8x128xf32> to vector<8x64xf32>
    %c16 = arith.constant 16 : index
    %c0_30 = arith.constant 0 : index
    %150 = vector.load %arg7[%c16, %c0_30] : memref<64x128xf32, #tpu.memory_space<vmem>>, vector<8x64xf32>
    tpu.vector_store %arg7[%c16, %c0_30], %149 {strides = array<i32>} : memref<64x128xf32, #tpu.memory_space<vmem>>, vector<8x64xf32>,
    %151 = vector.extract_strided_slice %148 {offsets = [0, 64], sizes = [8, 64], strides = [1, 1]} : vector<8x128xf32> to vector<8x64xf32>
    %c40 = arith.constant 40 : index
    %c64_31 = arith.constant 64 : index
    %152 = vector.load %arg7[%c40, %c64_31] : memref<64x128xf32, #tpu.memory_space<vmem>>, vector<8x64xf32>
    tpu.vector_store %arg7[%c40, %c64_31], %151 {strides = array<i32>} : memref<64x128xf32, #tpu.memory_space<vmem>>, vector<8x64xf32>,
    %153 = vector.extract_strided_slice %12 {offsets = [24, 0], sizes = [8, 384], strides = [1, 1]} : vector<64x384xf32> to vector<8x384xf32>
    %154 = vector.extract_strided_slice %12 {offsets = [32, 0], sizes = [8, 384], strides = [1, 1]} : vector<64x384xf32> to vector<8x384xf32>
    %155 = vector.shape_cast %34 : vector<1x384xi1> to vector<1x384xi1>
    %156 = vector.broadcast %155 : vector<1x384xi1> to vector<8x384xi1>
    %157 = arith.select %156, %153, %154 : vector<8x384xi1>, vector<8x384xf32>
    %158 = arith.truncf %148 : vector<8x128xf32> to vector<8x128xbf16>
    %cst_32 = arith.constant dense<0.000000e+00> : vector<8x384xf32>
    %159 = tpu.matmul %158, %14, %cst_32 {dimension_numbers = #tpu.dot_dimension_numbers<[1], [0], [0], [1], [0, 0, 1, 1], [], []>} : vector<8x128xbf16>, vector<128x384xbf16>, vector<8x384xf32> -> vector<8x384xf32>
    %160 = vector.broadcast %15 : vector<1x384xf32> to vector<8x384xf32>
    %161 = arith.addf %159, %160 : vector<8x384xf32>
    %162 = vector.extract_strided_slice %157 {offsets = [0, 0], sizes = [8, 128], strides = [1, 1]} : vector<8x384xf32> to vector<8x128xf32>
    %163 = vector.extract_strided_slice %161 {offsets = [0, 0], sizes = [8, 128], strides = [1, 1]} : vector<8x384xf32> to vector<8x128xf32>
    %164 = arith.addf %162, %163 : vector<8x128xf32>
    %165 = arith.negf %164 : vector<8x128xf32>
    %166 = math.exp %165 : vector<8x128xf32>
    %cst_33 = arith.constant 1.000000e+00 : f32
    %167 = vector.broadcast %cst_33 : f32 to vector<8x128xf32>
    %168 = arith.addf %167, %166 : vector<8x128xf32>
    %169 = arith.divf %167, %168 : vector<8x128xf32>
    %170 = vector.extract_strided_slice %157 {offsets = [0, 128], sizes = [8, 128], strides = [1, 1]} : vector<8x384xf32> to vector<8x128xf32>
    %171 = vector.extract_strided_slice %161 {offsets = [0, 128], sizes = [8, 128], strides = [1, 1]} : vector<8x384xf32> to vector<8x128xf32>
    %172 = arith.addf %170, %171 : vector<8x128xf32>
    %173 = arith.negf %172 : vector<8x128xf32>
    %174 = math.exp %173 : vector<8x128xf32>
    %cst_34 = arith.constant 1.000000e+00 : f32
    %175 = vector.broadcast %cst_34 : f32 to vector<8x128xf32>
    %176 = arith.addf %175, %174 : vector<8x128xf32>
    %177 = arith.divf %175, %176 : vector<8x128xf32>
    %178 = vector.extract_strided_slice %157 {offsets = [0, 256], sizes = [8, 128], strides = [1, 1]} : vector<8x384xf32> to vector<8x128xf32>
    %179 = vector.extract_strided_slice %161 {offsets = [0, 256], sizes = [8, 128], strides = [1, 1]} : vector<8x384xf32> to vector<8x128xf32>
    %180 = arith.mulf %169, %179 : vector<8x128xf32>
    %181 = arith.addf %178, %180 : vector<8x128xf32>
    %182 = math.tanh %181 : vector<8x128xf32>
    %cst_35 = arith.constant 1.000000e+00 : f32
    %183 = vector.broadcast %cst_35 : f32 to vector<8x128xf32>
    %184 = arith.subf %183, %177 : vector<8x128xf32>
    %185 = arith.mulf %184, %182 : vector<8x128xf32>
    %186 = arith.mulf %177, %148 : vector<8x128xf32>
    %187 = arith.addf %185, %186 : vector<8x128xf32>
    %188 = vector.extract_strided_slice %187 {offsets = [0, 0], sizes = [8, 64], strides = [1, 1]} : vector<8x128xf32> to vector<8x64xf32>
    %c24 = arith.constant 24 : index
    %c0_36 = arith.constant 0 : index
    %189 = vector.load %arg7[%c24, %c0_36] : memref<64x128xf32, #tpu.memory_space<vmem>>, vector<8x64xf32>
    tpu.vector_store %arg7[%c24, %c0_36], %188 {strides = array<i32>} : memref<64x128xf32, #tpu.memory_space<vmem>>, vector<8x64xf32>,
    %190 = vector.extract_strided_slice %187 {offsets = [0, 64], sizes = [8, 64], strides = [1, 1]} : vector<8x128xf32> to vector<8x64xf32>
    %c32 = arith.constant 32 : index
    %c64_37 = arith.constant 64 : index
    %191 = vector.load %arg7[%c32, %c64_37] : memref<64x128xf32, #tpu.memory_space<vmem>>, vector<8x64xf32>
    tpu.vector_store %arg7[%c32, %c64_37], %190 {strides = array<i32>} : memref<64x128xf32, #tpu.memory_space<vmem>>, vector<8x64xf32>,
    %192 = vector.extract_strided_slice %12 {offsets = [32, 0], sizes = [8, 384], strides = [1, 1]} : vector<64x384xf32> to vector<8x384xf32>
    %193 = vector.extract_strided_slice %12 {offsets = [24, 0], sizes = [8, 384], strides = [1, 1]} : vector<64x384xf32> to vector<8x384xf32>
    %194 = vector.shape_cast %34 : vector<1x384xi1> to vector<1x384xi1>
    %195 = vector.broadcast %194 : vector<1x384xi1> to vector<8x384xi1>
    %196 = arith.select %195, %192, %193 : vector<8x384xi1>, vector<8x384xf32>
    %197 = arith.truncf %187 : vector<8x128xf32> to vector<8x128xbf16>
    %cst_38 = arith.constant dense<0.000000e+00> : vector<8x384xf32>
    %198 = tpu.matmul %197, %14, %cst_38 {dimension_numbers = #tpu.dot_dimension_numbers<[1], [0], [0], [1], [0, 0, 1, 1], [], []>} : vector<8x128xbf16>, vector<128x384xbf16>, vector<8x384xf32> -> vector<8x384xf32>
    %199 = vector.broadcast %15 : vector<1x384xf32> to vector<8x384xf32>
    %200 = arith.addf %198, %199 : vector<8x384xf32>
    %201 = vector.extract_strided_slice %196 {offsets = [0, 0], sizes = [8, 128], strides = [1, 1]} : vector<8x384xf32> to vector<8x128xf32>
    %202 = vector.extract_strided_slice %200 {offsets = [0, 0], sizes = [8, 128], strides = [1, 1]} : vector<8x384xf32> to vector<8x128xf32>
    %203 = arith.addf %201, %202 : vector<8x128xf32>
    %204 = arith.negf %203 : vector<8x128xf32>
    %205 = math.exp %204 : vector<8x128xf32>
    %cst_39 = arith.constant 1.000000e+00 : f32
    %206 = vector.broadcast %cst_39 : f32 to vector<8x128xf32>
    %207 = arith.addf %206, %205 : vector<8x128xf32>
    %208 = arith.divf %206, %207 : vector<8x128xf32>
    %209 = vector.extract_strided_slice %196 {offsets = [0, 128], sizes = [8, 128], strides = [1, 1]} : vector<8x384xf32> to vector<8x128xf32>
    %210 = vector.extract_strided_slice %200 {offsets = [0, 128], sizes = [8, 128], strides = [1, 1]} : vector<8x384xf32> to vector<8x128xf32>
    %211 = arith.addf %209, %210 : vector<8x128xf32>
    %212 = arith.negf %211 : vector<8x128xf32>
    %213 = math.exp %212 : vector<8x128xf32>
    %cst_40 = arith.constant 1.000000e+00 : f32
    %214 = vector.broadcast %cst_40 : f32 to vector<8x128xf32>
    %215 = arith.addf %214, %213 : vector<8x128xf32>
    %216 = arith.divf %214, %215 : vector<8x128xf32>
    %217 = vector.extract_strided_slice %196 {offsets = [0, 256], sizes = [8, 128], strides = [1, 1]} : vector<8x384xf32> to vector<8x128xf32>
    %218 = vector.extract_strided_slice %200 {offsets = [0, 256], sizes = [8, 128], strides = [1, 1]} : vector<8x384xf32> to vector<8x128xf32>
    %219 = arith.mulf %208, %218 : vector<8x128xf32>
    %220 = arith.addf %217, %219 : vector<8x128xf32>
    %221 = math.tanh %220 : vector<8x128xf32>
    %cst_41 = arith.constant 1.000000e+00 : f32
    %222 = vector.broadcast %cst_41 : f32 to vector<8x128xf32>
    %223 = arith.subf %222, %216 : vector<8x128xf32>
    %224 = arith.mulf %223, %221 : vector<8x128xf32>
    %225 = arith.mulf %216, %187 : vector<8x128xf32>
    %226 = arith.addf %224, %225 : vector<8x128xf32>
    %227 = vector.extract_strided_slice %226 {offsets = [0, 0], sizes = [8, 64], strides = [1, 1]} : vector<8x128xf32> to vector<8x64xf32>
    %c32_42 = arith.constant 32 : index
    %c0_43 = arith.constant 0 : index
    %228 = vector.load %arg7[%c32_42, %c0_43] : memref<64x128xf32, #tpu.memory_space<vmem>>, vector<8x64xf32>
    tpu.vector_store %arg7[%c32_42, %c0_43], %227 {strides = array<i32>} : memref<64x128xf32, #tpu.memory_space<vmem>>, vector<8x64xf32>,
    %229 = vector.extract_strided_slice %226 {offsets = [0, 64], sizes = [8, 64], strides = [1, 1]} : vector<8x128xf32> to vector<8x64xf32>
    %c24_44 = arith.constant 24 : index
    %c64_45 = arith.constant 64 : index
    %230 = vector.load %arg7[%c24_44, %c64_45] : memref<64x128xf32, #tpu.memory_space<vmem>>, vector<8x64xf32>
    tpu.vector_store %arg7[%c24_44, %c64_45], %229 {strides = array<i32>} : memref<64x128xf32, #tpu.memory_space<vmem>>, vector<8x64xf32>,
    %231 = vector.extract_strided_slice %12 {offsets = [40, 0], sizes = [8, 384], strides = [1, 1]} : vector<64x384xf32> to vector<8x384xf32>
    %232 = vector.extract_strided_slice %12 {offsets = [16, 0], sizes = [8, 384], strides = [1, 1]} : vector<64x384xf32> to vector<8x384xf32>
    %233 = vector.shape_cast %34 : vector<1x384xi1> to vector<1x384xi1>
    %234 = vector.broadcast %233 : vector<1x384xi1> to vector<8x384xi1>
    %235 = arith.select %234, %231, %232 : vector<8x384xi1>, vector<8x384xf32>
    %236 = arith.truncf %226 : vector<8x128xf32> to vector<8x128xbf16>
    %cst_46 = arith.constant dense<0.000000e+00> : vector<8x384xf32>
    %237 = tpu.matmul %236, %14, %cst_46 {dimension_numbers = #tpu.dot_dimension_numbers<[1], [0], [0], [1], [0, 0, 1, 1], [], []>} : vector<8x128xbf16>, vector<128x384xbf16>, vector<8x384xf32> -> vector<8x384xf32>
    %238 = vector.broadcast %15 : vector<1x384xf32> to vector<8x384xf32>
    %239 = arith.addf %237, %238 : vector<8x384xf32>
    %240 = vector.extract_strided_slice %235 {offsets = [0, 0], sizes = [8, 128], strides = [1, 1]} : vector<8x384xf32> to vector<8x128xf32>
    %241 = vector.extract_strided_slice %239 {offsets = [0, 0], sizes = [8, 128], strides = [1, 1]} : vector<8x384xf32> to vector<8x128xf32>
    %242 = arith.addf %240, %241 : vector<8x128xf32>
    %243 = arith.negf %242 : vector<8x128xf32>
    %244 = math.exp %243 : vector<8x128xf32>
    %cst_47 = arith.constant 1.000000e+00 : f32
    %245 = vector.broadcast %cst_47 : f32 to vector<8x128xf32>
    %246 = arith.addf %245, %244 : vector<8x128xf32>
    %247 = arith.divf %245, %246 : vector<8x128xf32>
    %248 = vector.extract_strided_slice %235 {offsets = [0, 128], sizes = [8, 128], strides = [1, 1]} : vector<8x384xf32> to vector<8x128xf32>
    %249 = vector.extract_strided_slice %239 {offsets = [0, 128], sizes = [8, 128], strides = [1, 1]} : vector<8x384xf32> to vector<8x128xf32>
    %250 = arith.addf %248, %249 : vector<8x128xf32>
    %251 = arith.negf %250 : vector<8x128xf32>
    %252 = math.exp %251 : vector<8x128xf32>
    %cst_48 = arith.constant 1.000000e+00 : f32
    %253 = vector.broadcast %cst_48 : f32 to vector<8x128xf32>
    %254 = arith.addf %253, %252 : vector<8x128xf32>
    %255 = arith.divf %253, %254 : vector<8x128xf32>
    %256 = vector.extract_strided_slice %235 {offsets = [0, 256], sizes = [8, 128], strides = [1, 1]} : vector<8x384xf32> to vector<8x128xf32>
    %257 = vector.extract_strided_slice %239 {offsets = [0, 256], sizes = [8, 128], strides = [1, 1]} : vector<8x384xf32> to vector<8x128xf32>
    %258 = arith.mulf %247, %257 : vector<8x128xf32>
    %259 = arith.addf %256, %258 : vector<8x128xf32>
    %260 = math.tanh %259 : vector<8x128xf32>
    %cst_49 = arith.constant 1.000000e+00 : f32
    %261 = vector.broadcast %cst_49 : f32 to vector<8x128xf32>
    %262 = arith.subf %261, %255 : vector<8x128xf32>
    %263 = arith.mulf %262, %260 : vector<8x128xf32>
    %264 = arith.mulf %255, %226 : vector<8x128xf32>
    %265 = arith.addf %263, %264 : vector<8x128xf32>
    %266 = vector.extract_strided_slice %265 {offsets = [0, 0], sizes = [8, 64], strides = [1, 1]} : vector<8x128xf32> to vector<8x64xf32>
    %c40_50 = arith.constant 40 : index
    %c0_51 = arith.constant 0 : index
    %267 = vector.load %arg7[%c40_50, %c0_51] : memref<64x128xf32, #tpu.memory_space<vmem>>, vector<8x64xf32>
    tpu.vector_store %arg7[%c40_50, %c0_51], %266 {strides = array<i32>} : memref<64x128xf32, #tpu.memory_space<vmem>>, vector<8x64xf32>,
    %268 = vector.extract_strided_slice %265 {offsets = [0, 64], sizes = [8, 64], strides = [1, 1]} : vector<8x128xf32> to vector<8x64xf32>
    %c16_52 = arith.constant 16 : index
    %c64_53 = arith.constant 64 : index
    %269 = vector.load %arg7[%c16_52, %c64_53] : memref<64x128xf32, #tpu.memory_space<vmem>>, vector<8x64xf32>
    tpu.vector_store %arg7[%c16_52, %c64_53], %268 {strides = array<i32>} : memref<64x128xf32, #tpu.memory_space<vmem>>, vector<8x64xf32>,
    %270 = vector.extract_strided_slice %12 {offsets = [48, 0], sizes = [8, 384], strides = [1, 1]} : vector<64x384xf32> to vector<8x384xf32>
    %271 = vector.extract_strided_slice %12 {offsets = [8, 0], sizes = [8, 384], strides = [1, 1]} : vector<64x384xf32> to vector<8x384xf32>
    %272 = vector.shape_cast %34 : vector<1x384xi1> to vector<1x384xi1>
    %273 = vector.broadcast %272 : vector<1x384xi1> to vector<8x384xi1>
    %274 = arith.select %273, %270, %271 : vector<8x384xi1>, vector<8x384xf32>
    %275 = arith.truncf %265 : vector<8x128xf32> to vector<8x128xbf16>
    %cst_54 = arith.constant dense<0.000000e+00> : vector<8x384xf32>
    %276 = tpu.matmul %275, %14, %cst_54 {dimension_numbers = #tpu.dot_dimension_numbers<[1], [0], [0], [1], [0, 0, 1, 1], [], []>} : vector<8x128xbf16>, vector<128x384xbf16>, vector<8x384xf32> -> vector<8x384xf32>
    %277 = vector.broadcast %15 : vector<1x384xf32> to vector<8x384xf32>
    %278 = arith.addf %276, %277 : vector<8x384xf32>
    %279 = vector.extract_strided_slice %274 {offsets = [0, 0], sizes = [8, 128], strides = [1, 1]} : vector<8x384xf32> to vector<8x128xf32>
    %280 = vector.extract_strided_slice %278 {offsets = [0, 0], sizes = [8, 128], strides = [1, 1]} : vector<8x384xf32> to vector<8x128xf32>
    %281 = arith.addf %279, %280 : vector<8x128xf32>
    %282 = arith.negf %281 : vector<8x128xf32>
    %283 = math.exp %282 : vector<8x128xf32>
    %cst_55 = arith.constant 1.000000e+00 : f32
    %284 = vector.broadcast %cst_55 : f32 to vector<8x128xf32>
    %285 = arith.addf %284, %283 : vector<8x128xf32>
    %286 = arith.divf %284, %285 : vector<8x128xf32>
    %287 = vector.extract_strided_slice %274 {offsets = [0, 128], sizes = [8, 128], strides = [1, 1]} : vector<8x384xf32> to vector<8x128xf32>
    %288 = vector.extract_strided_slice %278 {offsets = [0, 128], sizes = [8, 128], strides = [1, 1]} : vector<8x384xf32> to vector<8x128xf32>
    %289 = arith.addf %287, %288 : vector<8x128xf32>
    %290 = arith.negf %289 : vector<8x128xf32>
    %291 = math.exp %290 : vector<8x128xf32>
    %cst_56 = arith.constant 1.000000e+00 : f32
    %292 = vector.broadcast %cst_56 : f32 to vector<8x128xf32>
    %293 = arith.addf %292, %291 : vector<8x128xf32>
    %294 = arith.divf %292, %293 : vector<8x128xf32>
    %295 = vector.extract_strided_slice %274 {offsets = [0, 256], sizes = [8, 128], strides = [1, 1]} : vector<8x384xf32> to vector<8x128xf32>
    %296 = vector.extract_strided_slice %278 {offsets = [0, 256], sizes = [8, 128], strides = [1, 1]} : vector<8x384xf32> to vector<8x128xf32>
    %297 = arith.mulf %286, %296 : vector<8x128xf32>
    %298 = arith.addf %295, %297 : vector<8x128xf32>
    %299 = math.tanh %298 : vector<8x128xf32>
    %cst_57 = arith.constant 1.000000e+00 : f32
    %300 = vector.broadcast %cst_57 : f32 to vector<8x128xf32>
    %301 = arith.subf %300, %294 : vector<8x128xf32>
    %302 = arith.mulf %301, %299 : vector<8x128xf32>
    %303 = arith.mulf %294, %265 : vector<8x128xf32>
    %304 = arith.addf %302, %303 : vector<8x128xf32>
    %305 = vector.extract_strided_slice %304 {offsets = [0, 0], sizes = [8, 64], strides = [1, 1]} : vector<8x128xf32> to vector<8x64xf32>
    %c48_58 = arith.constant 48 : index
    %c0_59 = arith.constant 0 : index
    %306 = vector.load %arg7[%c48_58, %c0_59] : memref<64x128xf32, #tpu.memory_space<vmem>>, vector<8x64xf32>
    tpu.vector_store %arg7[%c48_58, %c0_59], %305 {strides = array<i32>} : memref<64x128xf32, #tpu.memory_space<vmem>>, vector<8x64xf32>,
    %307 = vector.extract_strided_slice %304 {offsets = [0, 64], sizes = [8, 64], strides = [1, 1]} : vector<8x128xf32> to vector<8x64xf32>
    %c8_60 = arith.constant 8 : index
    %c64_61 = arith.constant 64 : index
    %308 = vector.load %arg7[%c8_60, %c64_61] : memref<64x128xf32, #tpu.memory_space<vmem>>, vector<8x64xf32>
    tpu.vector_store %arg7[%c8_60, %c64_61], %307 {strides = array<i32>} : memref<64x128xf32, #tpu.memory_space<vmem>>, vector<8x64xf32>,
    %309 = vector.extract_strided_slice %12 {offsets = [56, 0], sizes = [8, 384], strides = [1, 1]} : vector<64x384xf32> to vector<8x384xf32>
    %310 = vector.extract_strided_slice %12 {offsets = [0, 0], sizes = [8, 384], strides = [1, 1]} : vector<64x384xf32> to vector<8x384xf32>
    %311 = vector.shape_cast %34 : vector<1x384xi1> to vector<1x384xi1>
    %312 = vector.broadcast %311 : vector<1x384xi1> to vector<8x384xi1>
    %313 = arith.select %312, %309, %310 : vector<8x384xi1>, vector<8x384xf32>
    %314 = arith.truncf %304 : vector<8x128xf32> to vector<8x128xbf16>
    %cst_62 = arith.constant dense<0.000000e+00> : vector<8x384xf32>
    %315 = tpu.matmul %314, %14, %cst_62 {dimension_numbers = #tpu.dot_dimension_numbers<[1], [0], [0], [1], [0, 0, 1, 1], [], []>} : vector<8x128xbf16>, vector<128x384xbf16>, vector<8x384xf32> -> vector<8x384xf32>
    %316 = vector.broadcast %15 : vector<1x384xf32> to vector<8x384xf32>
    %317 = arith.addf %315, %316 : vector<8x384xf32>
    %318 = vector.extract_strided_slice %313 {offsets = [0, 0], sizes = [8, 128], strides = [1, 1]} : vector<8x384xf32> to vector<8x128xf32>
    %319 = vector.extract_strided_slice %317 {offsets = [0, 0], sizes = [8, 128], strides = [1, 1]} : vector<8x384xf32> to vector<8x128xf32>
    %320 = arith.addf %318, %319 : vector<8x128xf32>
    %321 = arith.negf %320 : vector<8x128xf32>
    %322 = math.exp %321 : vector<8x128xf32>
    %cst_63 = arith.constant 1.000000e+00 : f32
    %323 = vector.broadcast %cst_63 : f32 to vector<8x128xf32>
    %324 = arith.addf %323, %322 : vector<8x128xf32>
    %325 = arith.divf %323, %324 : vector<8x128xf32>
    %326 = vector.extract_strided_slice %313 {offsets = [0, 128], sizes = [8, 128], strides = [1, 1]} : vector<8x384xf32> to vector<8x128xf32>
    %327 = vector.extract_strided_slice %317 {offsets = [0, 128], sizes = [8, 128], strides = [1, 1]} : vector<8x384xf32> to vector<8x128xf32>
    %328 = arith.addf %326, %327 : vector<8x128xf32>
    %329 = arith.negf %328 : vector<8x128xf32>
    %330 = math.exp %329 : vector<8x128xf32>
    %cst_64 = arith.constant 1.000000e+00 : f32
    %331 = vector.broadcast %cst_64 : f32 to vector<8x128xf32>
    %332 = arith.addf %331, %330 : vector<8x128xf32>
    %333 = arith.divf %331, %332 : vector<8x128xf32>
    %334 = vector.extract_strided_slice %313 {offsets = [0, 256], sizes = [8, 128], strides = [1, 1]} : vector<8x384xf32> to vector<8x128xf32>
    %335 = vector.extract_strided_slice %317 {offsets = [0, 256], sizes = [8, 128], strides = [1, 1]} : vector<8x384xf32> to vector<8x128xf32>
    %336 = arith.mulf %325, %335 : vector<8x128xf32>
    %337 = arith.addf %334, %336 : vector<8x128xf32>
    %338 = math.tanh %337 : vector<8x128xf32>
    %cst_65 = arith.constant 1.000000e+00 : f32
    %339 = vector.broadcast %cst_65 : f32 to vector<8x128xf32>
    %340 = arith.subf %339, %333 : vector<8x128xf32>
    %341 = arith.mulf %340, %338 : vector<8x128xf32>
    %342 = arith.mulf %333, %304 : vector<8x128xf32>
    %343 = arith.addf %341, %342 : vector<8x128xf32>
    %344 = vector.extract_strided_slice %343 {offsets = [0, 0], sizes = [8, 64], strides = [1, 1]} : vector<8x128xf32> to vector<8x64xf32>
    %c56_66 = arith.constant 56 : index
    %c0_67 = arith.constant 0 : index
    %345 = vector.load %arg7[%c56_66, %c0_67] : memref<64x128xf32, #tpu.memory_space<vmem>>, vector<8x64xf32>
    tpu.vector_store %arg7[%c56_66, %c0_67], %344 {strides = array<i32>} : memref<64x128xf32, #tpu.memory_space<vmem>>, vector<8x64xf32>,
    %346 = vector.extract_strided_slice %343 {offsets = [0, 64], sizes = [8, 64], strides = [1, 1]} : vector<8x128xf32> to vector<8x64xf32>
    %c0_68 = arith.constant 0 : index
    %c64_69 = arith.constant 64 : index
    %347 = vector.load %arg7[%c0_68, %c64_69] : memref<64x128xf32, #tpu.memory_space<vmem>>, vector<8x64xf32>
    tpu.vector_store %arg7[%c0_68, %c64_69], %346 {strides = array<i32>} : memref<64x128xf32, #tpu.memory_space<vmem>>, vector<8x64xf32>,
    %c0_70 = arith.constant 0 : index
    %c0_71 = arith.constant 0 : index
    %348 = vector.load %arg7[%c0_70, %c0_71] : memref<64x128xf32, #tpu.memory_space<vmem>>, vector<64x128xf32>
    %349 = arith.truncf %348 : vector<64x128xf32> to vector<64x128xbf16>
    %c1 = arith.constant 1 : index
    %c0_72 = arith.constant 0 : index
    %c0_73 = arith.constant 0 : index
    %350 = vector.load %arg1[%c1, %c0_72, %c0_73] : memref<6x128x384xbf16, #tpu.memory_space<vmem>>, vector<1x128x384xbf16>
    %351 = vector.shape_cast %350 : vector<1x128x384xbf16> to vector<128x384xbf16>
    %cst_74 = arith.constant dense<0.000000e+00> : vector<64x384xf32>
    %352 = tpu.matmul %349, %351, %cst_74 {dimension_numbers = #tpu.dot_dimension_numbers<[1], [0], [0], [1], [0, 0, 1, 1], [], []>} : vector<64x128xbf16>, vector<128x384xbf16>, vector<64x384xf32> -> vector<64x384xf32>
    %353 = vector.extract_strided_slice %0 {offsets = [1, 0], sizes = [1, 384], strides = [1, 1]} : vector<6x384xf32> to vector<1x384xf32>
    %354 = vector.broadcast %353 : vector<1x384xf32> to vector<64x384xf32>
    %355 = arith.addf %352, %354 : vector<64x384xf32>
    %c4 = arith.constant 4 : index
    %c0_75 = arith.constant 0 : index
    %c0_76 = arith.constant 0 : index
    %356 = vector.load %arg1[%c4, %c0_75, %c0_76] : memref<6x128x384xbf16, #tpu.memory_space<vmem>>, vector<1x128x384xbf16>
    %357 = vector.shape_cast %356 : vector<1x128x384xbf16> to vector<128x384xbf16>
    %358 = vector.extract_strided_slice %0 {offsets = [4, 0], sizes = [1, 384], strides = [1, 1]} : vector<6x384xf32> to vector<1x384xf32>
    %359 = tpu.iota {dimensions = array<i32: 1>} : vector<1x384xi32>
    %c128_i32_77 = arith.constant 128 : i32
    %c0_i32_78 = arith.constant 0 : i32
    %360 = arith.cmpi eq, %c128_i32_77, %c0_i32_78 : i32
    %c1_i32_79 = arith.constant 1 : i32
    %361 = arith.select %360, %c1_i32_79, %c128_i32_77 : i32
    %362 = vector.broadcast %361 : i32 to vector<1x384xi32>
    %363 = arith.remsi %359, %362 : vector<1x384xi32>
    %c0_i32_80 = arith.constant 0 : i32
    %364 = vector.broadcast %c0_i32_80 : i32 to vector<1x384xi32>
    %365 = arith.cmpi ne, %363, %364 : vector<1x384xi32>
    %c0_i32_81 = arith.constant 0 : i32
    %366 = vector.broadcast %c0_i32_81 : i32 to vector<1x384xi32>
    %367 = arith.cmpi slt, %363, %366 : vector<1x384xi32>
    %c0_i32_82 = arith.constant 0 : i32
    %368 = arith.cmpi slt, %361, %c0_i32_82 : i32
    %369 = vector.broadcast %368 : i1 to vector<1x384xi1>
    %370 = vector.broadcast %369 : vector<1x384xi1> to vector<1x384xi1>
    %371 = arith.xori %367, %370 : vector<1x384xi1>
    %372 = arith.andi %371, %365 : vector<1x384xi1>
    %373 = vector.broadcast %361 : i32 to vector<1x384xi32>
    %374 = arith.addi %363, %373 : vector<1x384xi32>
    %375 = arith.select %372, %374, %363 : vector<1x384xi1>, vector<1x384xi32>
    %c64_i32_83 = arith.constant 64 : i32
    %376 = vector.broadcast %c64_i32_83 : i32 to vector<1x384xi32>
    %377 = arith.cmpi slt, %375, %376 : vector<1x384xi32>
    %cst_84 = arith.constant 0.000000e+00 : f32
    %378 = vector.broadcast %cst_84 : f32 to vector<8x128xf32>
    %379 = vector.extract_strided_slice %355 {offsets = [0, 0], sizes = [8, 384], strides = [1, 1]} : vector<64x384xf32> to vector<8x384xf32>
    %380 = vector.extract_strided_slice %355 {offsets = [56, 0], sizes = [8, 384], strides = [1, 1]} : vector<64x384xf32> to vector<8x384xf32>
    %381 = vector.shape_cast %377 : vector<1x384xi1> to vector<1x384xi1>
    %382 = vector.broadcast %381 : vector<1x384xi1> to vector<8x384xi1>
    %383 = arith.select %382, %379, %380 : vector<8x384xi1>, vector<8x384xf32>
    %384 = arith.truncf %378 : vector<8x128xf32> to vector<8x128xbf16>
    %cst_85 = arith.constant dense<0.000000e+00> : vector<8x384xf32>
    %385 = tpu.matmul %384, %357, %cst_85 {dimension_numbers = #tpu.dot_dimension_numbers<[1], [0], [0], [1], [0, 0, 1, 1], [], []>} : vector<8x128xbf16>, vector<128x384xbf16>, vector<8x384xf32> -> vector<8x384xf32>
    %386 = vector.broadcast %358 : vector<1x384xf32> to vector<8x384xf32>
    %387 = arith.addf %385, %386 : vector<8x384xf32>
    %388 = vector.extract_strided_slice %383 {offsets = [0, 0], sizes = [8, 128], strides = [1, 1]} : vector<8x384xf32> to vector<8x128xf32>
    %389 = vector.extract_strided_slice %387 {offsets = [0, 0], sizes = [8, 128], strides = [1, 1]} : vector<8x384xf32> to vector<8x128xf32>
    %390 = arith.addf %388, %389 : vector<8x128xf32>
    %391 = arith.negf %390 : vector<8x128xf32>
    %392 = math.exp %391 : vector<8x128xf32>
    %cst_86 = arith.constant 1.000000e+00 : f32
    %393 = vector.broadcast %cst_86 : f32 to vector<8x128xf32>
    %394 = arith.addf %393, %392 : vector<8x128xf32>
    %395 = arith.divf %393, %394 : vector<8x128xf32>
    %396 = vector.extract_strided_slice %383 {offsets = [0, 128], sizes = [8, 128], strides = [1, 1]} : vector<8x384xf32> to vector<8x128xf32>
    %397 = vector.extract_strided_slice %387 {offsets = [0, 128], sizes = [8, 128], strides = [1, 1]} : vector<8x384xf32> to vector<8x128xf32>
    %398 = arith.addf %396, %397 : vector<8x128xf32>
    %399 = arith.negf %398 : vector<8x128xf32>
    %400 = math.exp %399 : vector<8x128xf32>
    %cst_87 = arith.constant 1.000000e+00 : f32
    %401 = vector.broadcast %cst_87 : f32 to vector<8x128xf32>
    %402 = arith.addf %401, %400 : vector<8x128xf32>
    %403 = arith.divf %401, %402 : vector<8x128xf32>
    %404 = vector.extract_strided_slice %383 {offsets = [0, 256], sizes = [8, 128], strides = [1, 1]} : vector<8x384xf32> to vector<8x128xf32>
    %405 = vector.extract_strided_slice %387 {offsets = [0, 256], sizes = [8, 128], strides = [1, 1]} : vector<8x384xf32> to vector<8x128xf32>
    %406 = arith.mulf %395, %405 : vector<8x128xf32>
    %407 = arith.addf %404, %406 : vector<8x128xf32>
    %408 = math.tanh %407 : vector<8x128xf32>
    %cst_88 = arith.constant 1.000000e+00 : f32
    %409 = vector.broadcast %cst_88 : f32 to vector<8x128xf32>
    %410 = arith.subf %409, %403 : vector<8x128xf32>
    %411 = arith.mulf %410, %408 : vector<8x128xf32>
    %412 = arith.mulf %403, %378 : vector<8x128xf32>
    %413 = arith.addf %411, %412 : vector<8x128xf32>
    %414 = vector.extract_strided_slice %413 {offsets = [0, 0], sizes = [8, 64], strides = [1, 1]} : vector<8x128xf32> to vector<8x64xf32>
    %c0_89 = arith.constant 0 : index
    %c0_90 = arith.constant 0 : index
    %415 = vector.load %arg8[%c0_89, %c0_90] : memref<64x128xf32, #tpu.memory_space<vmem>>, vector<8x64xf32>
    tpu.vector_store %arg8[%c0_89, %c0_90], %414 {strides = array<i32>} : memref<64x128xf32, #tpu.memory_space<vmem>>, vector<8x64xf32>,
    %416 = vector.extract_strided_slice %413 {offsets = [0, 64], sizes = [8, 64], strides = [1, 1]} : vector<8x128xf32> to vector<8x64xf32>
    %c56_91 = arith.constant 56 : index
    %c64_92 = arith.constant 64 : index
    %417 = vector.load %arg8[%c56_91, %c64_92] : memref<64x128xf32, #tpu.memory_space<vmem>>, vector<8x64xf32>
    tpu.vector_store %arg8[%c56_91, %c64_92], %416 {strides = array<i32>} : memref<64x128xf32, #tpu.memory_space<vmem>>, vector<8x64xf32>,
    %418 = vector.extract_strided_slice %355 {offsets = [8, 0], sizes = [8, 384], strides = [1, 1]} : vector<64x384xf32> to vector<8x384xf32>
    %419 = vector.extract_strided_slice %355 {offsets = [48, 0], sizes = [8, 384], strides = [1, 1]} : vector<64x384xf32> to vector<8x384xf32>
    %420 = vector.shape_cast %377 : vector<1x384xi1> to vector<1x384xi1>
    %421 = vector.broadcast %420 : vector<1x384xi1> to vector<8x384xi1>
    %422 = arith.select %421, %418, %419 : vector<8x384xi1>, vector<8x384xf32>
    %423 = arith.truncf %413 : vector<8x128xf32> to vector<8x128xbf16>
    %cst_93 = arith.constant dense<0.000000e+00> : vector<8x384xf32>
    %424 = tpu.matmul %423, %357, %cst_93 {dimension_numbers = #tpu.dot_dimension_numbers<[1], [0], [0], [1], [0, 0, 1, 1], [], []>} : vector<8x128xbf16>, vector<128x384xbf16>, vector<8x384xf32> -> vector<8x384xf32>
    %425 = vector.broadcast %358 : vector<1x384xf32> to vector<8x384xf32>
    %426 = arith.addf %424, %425 : vector<8x384xf32>
    %427 = vector.extract_strided_slice %422 {offsets = [0, 0], sizes = [8, 128], strides = [1, 1]} : vector<8x384xf32> to vector<8x128xf32>
    %428 = vector.extract_strided_slice %426 {offsets = [0, 0], sizes = [8, 128], strides = [1, 1]} : vector<8x384xf32> to vector<8x128xf32>
    %429 = arith.addf %427, %428 : vector<8x128xf32>
    %430 = arith.negf %429 : vector<8x128xf32>
    %431 = math.exp %430 : vector<8x128xf32>
    %cst_94 = arith.constant 1.000000e+00 : f32
    %432 = vector.broadcast %cst_94 : f32 to vector<8x128xf32>
    %433 = arith.addf %432, %431 : vector<8x128xf32>
    %434 = arith.divf %432, %433 : vector<8x128xf32>
    %435 = vector.extract_strided_slice %422 {offsets = [0, 128], sizes = [8, 128], strides = [1, 1]} : vector<8x384xf32> to vector<8x128xf32>
    %436 = vector.extract_strided_slice %426 {offsets = [0, 128], sizes = [8, 128], strides = [1, 1]} : vector<8x384xf32> to vector<8x128xf32>
    %437 = arith.addf %435, %436 : vector<8x128xf32>
    %438 = arith.negf %437 : vector<8x128xf32>
    %439 = math.exp %438 : vector<8x128xf32>
    %cst_95 = arith.constant 1.000000e+00 : f32
    %440 = vector.broadcast %cst_95 : f32 to vector<8x128xf32>
    %441 = arith.addf %440, %439 : vector<8x128xf32>
    %442 = arith.divf %440, %441 : vector<8x128xf32>
    %443 = vector.extract_strided_slice %422 {offsets = [0, 256], sizes = [8, 128], strides = [1, 1]} : vector<8x384xf32> to vector<8x128xf32>
    %444 = vector.extract_strided_slice %426 {offsets = [0, 256], sizes = [8, 128], strides = [1, 1]} : vector<8x384xf32> to vector<8x128xf32>
    %445 = arith.mulf %434, %444 : vector<8x128xf32>
    %446 = arith.addf %443, %445 : vector<8x128xf32>
    %447 = math.tanh %446 : vector<8x128xf32>
    %cst_96 = arith.constant 1.000000e+00 : f32
    %448 = vector.broadcast %cst_96 : f32 to vector<8x128xf32>
    %449 = arith.subf %448, %442 : vector<8x128xf32>
    %450 = arith.mulf %449, %447 : vector<8x128xf32>
    %451 = arith.mulf %442, %413 : vector<8x128xf32>
    %452 = arith.addf %450, %451 : vector<8x128xf32>
    %453 = vector.extract_strided_slice %452 {offsets = [0, 0], sizes = [8, 64], strides = [1, 1]} : vector<8x128xf32> to vector<8x64xf32>
    %c8_97 = arith.constant 8 : index
    %c0_98 = arith.constant 0 : index
    %454 = vector.load %arg8[%c8_97, %c0_98] : memref<64x128xf32, #tpu.memory_space<vmem>>, vector<8x64xf32>
    tpu.vector_store %arg8[%c8_97, %c0_98], %453 {strides = array<i32>} : memref<64x128xf32, #tpu.memory_space<vmem>>, vector<8x64xf32>,
    %455 = vector.extract_strided_slice %452 {offsets = [0, 64], sizes = [8, 64], strides = [1, 1]} : vector<8x128xf32> to vector<8x64xf32>
    %c48_99 = arith.constant 48 : index
    %c64_100 = arith.constant 64 : index
    %456 = vector.load %arg8[%c48_99, %c64_100] : memref<64x128xf32, #tpu.memory_space<vmem>>, vector<8x64xf32>
    tpu.vector_store %arg8[%c48_99, %c64_100], %455 {strides = array<i32>} : memref<64x128xf32, #tpu.memory_space<vmem>>, vector<8x64xf32>,
    %457 = vector.extract_strided_slice %355 {offsets = [16, 0], sizes = [8, 384], strides = [1, 1]} : vector<64x384xf32> to vector<8x384xf32>
    %458 = vector.extract_strided_slice %355 {offsets = [40, 0], sizes = [8, 384], strides = [1, 1]} : vector<64x384xf32> to vector<8x384xf32>
    %459 = vector.shape_cast %377 : vector<1x384xi1> to vector<1x384xi1>
    %460 = vector.broadcast %459 : vector<1x384xi1> to vector<8x384xi1>
    %461 = arith.select %460, %457, %458 : vector<8x384xi1>, vector<8x384xf32>
    %462 = arith.truncf %452 : vector<8x128xf32> to vector<8x128xbf16>
    %cst_101 = arith.constant dense<0.000000e+00> : vector<8x384xf32>
    %463 = tpu.matmul %462, %357, %cst_101 {dimension_numbers = #tpu.dot_dimension_numbers<[1], [0], [0], [1], [0, 0, 1, 1], [], []>} : vector<8x128xbf16>, vector<128x384xbf16>, vector<8x384xf32> -> vector<8x384xf32>
    %464 = vector.broadcast %358 : vector<1x384xf32> to vector<8x384xf32>
    %465 = arith.addf %463, %464 : vector<8x384xf32>
    %466 = vector.extract_strided_slice %461 {offsets = [0, 0], sizes = [8, 128], strides = [1, 1]} : vector<8x384xf32> to vector<8x128xf32>
    %467 = vector.extract_strided_slice %465 {offsets = [0, 0], sizes = [8, 128], strides = [1, 1]} : vector<8x384xf32> to vector<8x128xf32>
    %468 = arith.addf %466, %467 : vector<8x128xf32>
    %469 = arith.negf %468 : vector<8x128xf32>
    %470 = math.exp %469 : vector<8x128xf32>
    %cst_102 = arith.constant 1.000000e+00 : f32
    %471 = vector.broadcast %cst_102 : f32 to vector<8x128xf32>
    %472 = arith.addf %471, %470 : vector<8x128xf32>
    %473 = arith.divf %471, %472 : vector<8x128xf32>
    %474 = vector.extract_strided_slice %461 {offsets = [0, 128], sizes = [8, 128], strides = [1, 1]} : vector<8x384xf32> to vector<8x128xf32>
    %475 = vector.extract_strided_slice %465 {offsets = [0, 128], sizes = [8, 128], strides = [1, 1]} : vector<8x384xf32> to vector<8x128xf32>
    %476 = arith.addf %474, %475 : vector<8x128xf32>
    %477 = arith.negf %476 : vector<8x128xf32>
    %478 = math.exp %477 : vector<8x128xf32>
    %cst_103 = arith.constant 1.000000e+00 : f32
    %479 = vector.broadcast %cst_103 : f32 to vector<8x128xf32>
    %480 = arith.addf %479, %478 : vector<8x128xf32>
    %481 = arith.divf %479, %480 : vector<8x128xf32>
    %482 = vector.extract_strided_slice %461 {offsets = [0, 256], sizes = [8, 128], strides = [1, 1]} : vector<8x384xf32> to vector<8x128xf32>
    %483 = vector.extract_strided_slice %465 {offsets = [0, 256], sizes = [8, 128], strides = [1, 1]} : vector<8x384xf32> to vector<8x128xf32>
    %484 = arith.mulf %473, %483 : vector<8x128xf32>
    %485 = arith.addf %482, %484 : vector<8x128xf32>
    %486 = math.tanh %485 : vector<8x128xf32>
    %cst_104 = arith.constant 1.000000e+00 : f32
    %487 = vector.broadcast %cst_104 : f32 to vector<8x128xf32>
    %488 = arith.subf %487, %481 : vector<8x128xf32>
    %489 = arith.mulf %488, %486 : vector<8x128xf32>
    %490 = arith.mulf %481, %452 : vector<8x128xf32>
    %491 = arith.addf %489, %490 : vector<8x128xf32>
    %492 = vector.extract_strided_slice %491 {offsets = [0, 0], sizes = [8, 64], strides = [1, 1]} : vector<8x128xf32> to vector<8x64xf32>
    %c16_105 = arith.constant 16 : index
    %c0_106 = arith.constant 0 : index
    %493 = vector.load %arg8[%c16_105, %c0_106] : memref<64x128xf32, #tpu.memory_space<vmem>>, vector<8x64xf32>
    tpu.vector_store %arg8[%c16_105, %c0_106], %492 {strides = array<i32>} : memref<64x128xf32, #tpu.memory_space<vmem>>, vector<8x64xf32>,
    %494 = vector.extract_strided_slice %491 {offsets = [0, 64], sizes = [8, 64], strides = [1, 1]} : vector<8x128xf32> to vector<8x64xf32>
    %c40_107 = arith.constant 40 : index
    %c64_108 = arith.constant 64 : index
    %495 = vector.load %arg8[%c40_107, %c64_108] : memref<64x128xf32, #tpu.memory_space<vmem>>, vector<8x64xf32>
    tpu.vector_store %arg8[%c40_107, %c64_108], %494 {strides = array<i32>} : memref<64x128xf32, #tpu.memory_space<vmem>>, vector<8x64xf32>,
    %496 = vector.extract_strided_slice %355 {offsets = [24, 0], sizes = [8, 384], strides = [1, 1]} : vector<64x384xf32> to vector<8x384xf32>
    %497 = vector.extract_strided_slice %355 {offsets = [32, 0], sizes = [8, 384], strides = [1, 1]} : vector<64x384xf32> to vector<8x384xf32>
    %498 = vector.shape_cast %377 : vector<1x384xi1> to vector<1x384xi1>
    %499 = vector.broadcast %498 : vector<1x384xi1> to vector<8x384xi1>
    %500 = arith.select %499, %496, %497 : vector<8x384xi1>, vector<8x384xf32>
    %501 = arith.truncf %491 : vector<8x128xf32> to vector<8x128xbf16>
    %cst_109 = arith.constant dense<0.000000e+00> : vector<8x384xf32>
    %502 = tpu.matmul %501, %357, %cst_109 {dimension_numbers = #tpu.dot_dimension_numbers<[1], [0], [0], [1], [0, 0, 1, 1], [], []>} : vector<8x128xbf16>, vector<128x384xbf16>, vector<8x384xf32> -> vector<8x384xf32>
    %503 = vector.broadcast %358 : vector<1x384xf32> to vector<8x384xf32>
    %504 = arith.addf %502, %503 : vector<8x384xf32>
    %505 = vector.extract_strided_slice %500 {offsets = [0, 0], sizes = [8, 128], strides = [1, 1]} : vector<8x384xf32> to vector<8x128xf32>
    %506 = vector.extract_strided_slice %504 {offsets = [0, 0], sizes = [8, 128], strides = [1, 1]} : vector<8x384xf32> to vector<8x128xf32>
    %507 = arith.addf %505, %506 : vector<8x128xf32>
    %508 = arith.negf %507 : vector<8x128xf32>
    %509 = math.exp %508 : vector<8x128xf32>
    %cst_110 = arith.constant 1.000000e+00 : f32
    %510 = vector.broadcast %cst_110 : f32 to vector<8x128xf32>
    %511 = arith.addf %510, %509 : vector<8x128xf32>
    %512 = arith.divf %510, %511 : vector<8x128xf32>
    %513 = vector.extract_strided_slice %500 {offsets = [0, 128], sizes = [8, 128], strides = [1, 1]} : vector<8x384xf32> to vector<8x128xf32>
    %514 = vector.extract_strided_slice %504 {offsets = [0, 128], sizes = [8, 128], strides = [1, 1]} : vector<8x384xf32> to vector<8x128xf32>
    %515 = arith.addf %513, %514 : vector<8x128xf32>
    %516 = arith.negf %515 : vector<8x128xf32>
    %517 = math.exp %516 : vector<8x128xf32>
    %cst_111 = arith.constant 1.000000e+00 : f32
    %518 = vector.broadcast %cst_111 : f32 to vector<8x128xf32>
    %519 = arith.addf %518, %517 : vector<8x128xf32>
    %520 = arith.divf %518, %519 : vector<8x128xf32>
    %521 = vector.extract_strided_slice %500 {offsets = [0, 256], sizes = [8, 128], strides = [1, 1]} : vector<8x384xf32> to vector<8x128xf32>
    %522 = vector.extract_strided_slice %504 {offsets = [0, 256], sizes = [8, 128], strides = [1, 1]} : vector<8x384xf32> to vector<8x128xf32>
    %523 = arith.mulf %512, %522 : vector<8x128xf32>
    %524 = arith.addf %521, %523 : vector<8x128xf32>
    %525 = math.tanh %524 : vector<8x128xf32>
    %cst_112 = arith.constant 1.000000e+00 : f32
    %526 = vector.broadcast %cst_112 : f32 to vector<8x128xf32>
    %527 = arith.subf %526, %520 : vector<8x128xf32>
    %528 = arith.mulf %527, %525 : vector<8x128xf32>
    %529 = arith.mulf %520, %491 : vector<8x128xf32>
    %530 = arith.addf %528, %529 : vector<8x128xf32>
    %531 = vector.extract_strided_slice %530 {offsets = [0, 0], sizes = [8, 64], strides = [1, 1]} : vector<8x128xf32> to vector<8x64xf32>
    %c24_113 = arith.constant 24 : index
    %c0_114 = arith.constant 0 : index
    %532 = vector.load %arg8[%c24_113, %c0_114] : memref<64x128xf32, #tpu.memory_space<vmem>>, vector<8x64xf32>
    tpu.vector_store %arg8[%c24_113, %c0_114], %531 {strides = array<i32>} : memref<64x128xf32, #tpu.memory_space<vmem>>, vector<8x64xf32>,
    %533 = vector.extract_strided_slice %530 {offsets = [0, 64], sizes = [8, 64], strides = [1, 1]} : vector<8x128xf32> to vector<8x64xf32>
    %c32_115 = arith.constant 32 : index
    %c64_116 = arith.constant 64 : index
    %534 = vector.load %arg8[%c32_115, %c64_116] : memref<64x128xf32, #tpu.memory_space<vmem>>, vector<8x64xf32>
    tpu.vector_store %arg8[%c32_115, %c64_116], %533 {strides = array<i32>} : memref<64x128xf32, #tpu.memory_space<vmem>>, vector<8x64xf32>,
    %535 = vector.extract_strided_slice %355 {offsets = [32, 0], sizes = [8, 384], strides = [1, 1]} : vector<64x384xf32> to vector<8x384xf32>
    %536 = vector.extract_strided_slice %355 {offsets = [24, 0], sizes = [8, 384], strides = [1, 1]} : vector<64x384xf32> to vector<8x384xf32>
    %537 = vector.shape_cast %377 : vector<1x384xi1> to vector<1x384xi1>
    %538 = vector.broadcast %537 : vector<1x384xi1> to vector<8x384xi1>
    %539 = arith.select %538, %535, %536 : vector<8x384xi1>, vector<8x384xf32>
    %540 = arith.truncf %530 : vector<8x128xf32> to vector<8x128xbf16>
    %cst_117 = arith.constant dense<0.000000e+00> : vector<8x384xf32>
    %541 = tpu.matmul %540, %357, %cst_117 {dimension_numbers = #tpu.dot_dimension_numbers<[1], [0], [0], [1], [0, 0, 1, 1], [], []>} : vector<8x128xbf16>, vector<128x384xbf16>, vector<8x384xf32> -> vector<8x384xf32>
    %542 = vector.broadcast %358 : vector<1x384xf32> to vector<8x384xf32>
    %543 = arith.addf %541, %542 : vector<8x384xf32>
    %544 = vector.extract_strided_slice %539 {offsets = [0, 0], sizes = [8, 128], strides = [1, 1]} : vector<8x384xf32> to vector<8x128xf32>
    %545 = vector.extract_strided_slice %543 {offsets = [0, 0], sizes = [8, 128], strides = [1, 1]} : vector<8x384xf32> to vector<8x128xf32>
    %546 = arith.addf %544, %545 : vector<8x128xf32>
    %547 = arith.negf %546 : vector<8x128xf32>
    %548 = math.exp %547 : vector<8x128xf32>
    %cst_118 = arith.constant 1.000000e+00 : f32
    %549 = vector.broadcast %cst_118 : f32 to vector<8x128xf32>
    %550 = arith.addf %549, %548 : vector<8x128xf32>
    %551 = arith.divf %549, %550 : vector<8x128xf32>
    %552 = vector.extract_strided_slice %539 {offsets = [0, 128], sizes = [8, 128], strides = [1, 1]} : vector<8x384xf32> to vector<8x128xf32>
    %553 = vector.extract_strided_slice %543 {offsets = [0, 128], sizes = [8, 128], strides = [1, 1]} : vector<8x384xf32> to vector<8x128xf32>
    %554 = arith.addf %552, %553 : vector<8x128xf32>
    %555 = arith.negf %554 : vector<8x128xf32>
    %556 = math.exp %555 : vector<8x128xf32>
    %cst_119 = arith.constant 1.000000e+00 : f32
    %557 = vector.broadcast %cst_119 : f32 to vector<8x128xf32>
    %558 = arith.addf %557, %556 : vector<8x128xf32>
    %559 = arith.divf %557, %558 : vector<8x128xf32>
    %560 = vector.extract_strided_slice %539 {offsets = [0, 256], sizes = [8, 128], strides = [1, 1]} : vector<8x384xf32> to vector<8x128xf32>
    %561 = vector.extract_strided_slice %543 {offsets = [0, 256], sizes = [8, 128], strides = [1, 1]} : vector<8x384xf32> to vector<8x128xf32>
    %562 = arith.mulf %551, %561 : vector<8x128xf32>
    %563 = arith.addf %560, %562 : vector<8x128xf32>
    %564 = math.tanh %563 : vector<8x128xf32>
    %cst_120 = arith.constant 1.000000e+00 : f32
    %565 = vector.broadcast %cst_120 : f32 to vector<8x128xf32>
    %566 = arith.subf %565, %559 : vector<8x128xf32>
    %567 = arith.mulf %566, %564 : vector<8x128xf32>
    %568 = arith.mulf %559, %530 : vector<8x128xf32>
    %569 = arith.addf %567, %568 : vector<8x128xf32>
    %570 = vector.extract_strided_slice %569 {offsets = [0, 0], sizes = [8, 64], strides = [1, 1]} : vector<8x128xf32> to vector<8x64xf32>
    %c32_121 = arith.constant 32 : index
    %c0_122 = arith.constant 0 : index
    %571 = vector.load %arg8[%c32_121, %c0_122] : memref<64x128xf32, #tpu.memory_space<vmem>>, vector<8x64xf32>
    tpu.vector_store %arg8[%c32_121, %c0_122], %570 {strides = array<i32>} : memref<64x128xf32, #tpu.memory_space<vmem>>, vector<8x64xf32>,
    %572 = vector.extract_strided_slice %569 {offsets = [0, 64], sizes = [8, 64], strides = [1, 1]} : vector<8x128xf32> to vector<8x64xf32>
    %c24_123 = arith.constant 24 : index
    %c64_124 = arith.constant 64 : index
    %573 = vector.load %arg8[%c24_123, %c64_124] : memref<64x128xf32, #tpu.memory_space<vmem>>, vector<8x64xf32>
    tpu.vector_store %arg8[%c24_123, %c64_124], %572 {strides = array<i32>} : memref<64x128xf32, #tpu.memory_space<vmem>>, vector<8x64xf32>,
    %574 = vector.extract_strided_slice %355 {offsets = [40, 0], sizes = [8, 384], strides = [1, 1]} : vector<64x384xf32> to vector<8x384xf32>
    %575 = vector.extract_strided_slice %355 {offsets = [16, 0], sizes = [8, 384], strides = [1, 1]} : vector<64x384xf32> to vector<8x384xf32>
    %576 = vector.shape_cast %377 : vector<1x384xi1> to vector<1x384xi1>
    %577 = vector.broadcast %576 : vector<1x384xi1> to vector<8x384xi1>
    %578 = arith.select %577, %574, %575 : vector<8x384xi1>, vector<8x384xf32>
    %579 = arith.truncf %569 : vector<8x128xf32> to vector<8x128xbf16>
    %cst_125 = arith.constant dense<0.000000e+00> : vector<8x384xf32>
    %580 = tpu.matmul %579, %357, %cst_125 {dimension_numbers = #tpu.dot_dimension_numbers<[1], [0], [0], [1], [0, 0, 1, 1], [], []>} : vector<8x128xbf16>, vector<128x384xbf16>, vector<8x384xf32> -> vector<8x384xf32>
    %581 = vector.broadcast %358 : vector<1x384xf32> to vector<8x384xf32>
    %582 = arith.addf %580, %581 : vector<8x384xf32>
    %583 = vector.extract_strided_slice %578 {offsets = [0, 0], sizes = [8, 128], strides = [1, 1]} : vector<8x384xf32> to vector<8x128xf32>
    %584 = vector.extract_strided_slice %582 {offsets = [0, 0], sizes = [8, 128], strides = [1, 1]} : vector<8x384xf32> to vector<8x128xf32>
    %585 = arith.addf %583, %584 : vector<8x128xf32>
    %586 = arith.negf %585 : vector<8x128xf32>
    %587 = math.exp %586 : vector<8x128xf32>
    %cst_126 = arith.constant 1.000000e+00 : f32
    %588 = vector.broadcast %cst_126 : f32 to vector<8x128xf32>
    %589 = arith.addf %588, %587 : vector<8x128xf32>
    %590 = arith.divf %588, %589 : vector<8x128xf32>
    %591 = vector.extract_strided_slice %578 {offsets = [0, 128], sizes = [8, 128], strides = [1, 1]} : vector<8x384xf32> to vector<8x128xf32>
    %592 = vector.extract_strided_slice %582 {offsets = [0, 128], sizes = [8, 128], strides = [1, 1]} : vector<8x384xf32> to vector<8x128xf32>
    %593 = arith.addf %591, %592 : vector<8x128xf32>
    %594 = arith.negf %593 : vector<8x128xf32>
    %595 = math.exp %594 : vector<8x128xf32>
    %cst_127 = arith.constant 1.000000e+00 : f32
    %596 = vector.broadcast %cst_127 : f32 to vector<8x128xf32>
    %597 = arith.addf %596, %595 : vector<8x128xf32>
    %598 = arith.divf %596, %597 : vector<8x128xf32>
    %599 = vector.extract_strided_slice %578 {offsets = [0, 256], sizes = [8, 128], strides = [1, 1]} : vector<8x384xf32> to vector<8x128xf32>
    %600 = vector.extract_strided_slice %582 {offsets = [0, 256], sizes = [8, 128], strides = [1, 1]} : vector<8x384xf32> to vector<8x128xf32>
    %601 = arith.mulf %590, %600 : vector<8x128xf32>
    %602 = arith.addf %599, %601 : vector<8x128xf32>
    %603 = math.tanh %602 : vector<8x128xf32>
    %cst_128 = arith.constant 1.000000e+00 : f32
    %604 = vector.broadcast %cst_128 : f32 to vector<8x128xf32>
    %605 = arith.subf %604, %598 : vector<8x128xf32>
    %606 = arith.mulf %605, %603 : vector<8x128xf32>
    %607 = arith.mulf %598, %569 : vector<8x128xf32>
    %608 = arith.addf %606, %607 : vector<8x128xf32>
    %609 = vector.extract_strided_slice %608 {offsets = [0, 0], sizes = [8, 64], strides = [1, 1]} : vector<8x128xf32> to vector<8x64xf32>
    %c40_129 = arith.constant 40 : index
    %c0_130 = arith.constant 0 : index
    %610 = vector.load %arg8[%c40_129, %c0_130] : memref<64x128xf32, #tpu.memory_space<vmem>>, vector<8x64xf32>
    tpu.vector_store %arg8[%c40_129, %c0_130], %609 {strides = array<i32>} : memref<64x128xf32, #tpu.memory_space<vmem>>, vector<8x64xf32>,
    %611 = vector.extract_strided_slice %608 {offsets = [0, 64], sizes = [8, 64], strides = [1, 1]} : vector<8x128xf32> to vector<8x64xf32>
    %c16_131 = arith.constant 16 : index
    %c64_132 = arith.constant 64 : index
    %612 = vector.load %arg8[%c16_131, %c64_132] : memref<64x128xf32, #tpu.memory_space<vmem>>, vector<8x64xf32>
    tpu.vector_store %arg8[%c16_131, %c64_132], %611 {strides = array<i32>} : memref<64x128xf32, #tpu.memory_space<vmem>>, vector<8x64xf32>,
    %613 = vector.extract_strided_slice %355 {offsets = [48, 0], sizes = [8, 384], strides = [1, 1]} : vector<64x384xf32> to vector<8x384xf32>
    %614 = vector.extract_strided_slice %355 {offsets = [8, 0], sizes = [8, 384], strides = [1, 1]} : vector<64x384xf32> to vector<8x384xf32>
    %615 = vector.shape_cast %377 : vector<1x384xi1> to vector<1x384xi1>
    %616 = vector.broadcast %615 : vector<1x384xi1> to vector<8x384xi1>
    %617 = arith.select %616, %613, %614 : vector<8x384xi1>, vector<8x384xf32>
    %618 = arith.truncf %608 : vector<8x128xf32> to vector<8x128xbf16>
    %cst_133 = arith.constant dense<0.000000e+00> : vector<8x384xf32>
    %619 = tpu.matmul %618, %357, %cst_133 {dimension_numbers = #tpu.dot_dimension_numbers<[1], [0], [0], [1], [0, 0, 1, 1], [], []>} : vector<8x128xbf16>, vector<128x384xbf16>, vector<8x384xf32> -> vector<8x384xf32>
    %620 = vector.broadcast %358 : vector<1x384xf32> to vector<8x384xf32>
    %621 = arith.addf %619, %620 : vector<8x384xf32>
    %622 = vector.extract_strided_slice %617 {offsets = [0, 0], sizes = [8, 128], strides = [1, 1]} : vector<8x384xf32> to vector<8x128xf32>
    %623 = vector.extract_strided_slice %621 {offsets = [0, 0], sizes = [8, 128], strides = [1, 1]} : vector<8x384xf32> to vector<8x128xf32>
    %624 = arith.addf %622, %623 : vector<8x128xf32>
    %625 = arith.negf %624 : vector<8x128xf32>
    %626 = math.exp %625 : vector<8x128xf32>
    %cst_134 = arith.constant 1.000000e+00 : f32
    %627 = vector.broadcast %cst_134 : f32 to vector<8x128xf32>
    %628 = arith.addf %627, %626 : vector<8x128xf32>
    %629 = arith.divf %627, %628 : vector<8x128xf32>
    %630 = vector.extract_strided_slice %617 {offsets = [0, 128], sizes = [8, 128], strides = [1, 1]} : vector<8x384xf32> to vector<8x128xf32>
    %631 = vector.extract_strided_slice %621 {offsets = [0, 128], sizes = [8, 128], strides = [1, 1]} : vector<8x384xf32> to vector<8x128xf32>
    %632 = arith.addf %630, %631 : vector<8x128xf32>
    %633 = arith.negf %632 : vector<8x128xf32>
    %634 = math.exp %633 : vector<8x128xf32>
    %cst_135 = arith.constant 1.000000e+00 : f32
    %635 = vector.broadcast %cst_135 : f32 to vector<8x128xf32>
    %636 = arith.addf %635, %634 : vector<8x128xf32>
    %637 = arith.divf %635, %636 : vector<8x128xf32>
    %638 = vector.extract_strided_slice %617 {offsets = [0, 256], sizes = [8, 128], strides = [1, 1]} : vector<8x384xf32> to vector<8x128xf32>
    %639 = vector.extract_strided_slice %621 {offsets = [0, 256], sizes = [8, 128], strides = [1, 1]} : vector<8x384xf32> to vector<8x128xf32>
    %640 = arith.mulf %629, %639 : vector<8x128xf32>
    %641 = arith.addf %638, %640 : vector<8x128xf32>
    %642 = math.tanh %641 : vector<8x128xf32>
    %cst_136 = arith.constant 1.000000e+00 : f32
    %643 = vector.broadcast %cst_136 : f32 to vector<8x128xf32>
    %644 = arith.subf %643, %637 : vector<8x128xf32>
    %645 = arith.mulf %644, %642 : vector<8x128xf32>
    %646 = arith.mulf %637, %608 : vector<8x128xf32>
    %647 = arith.addf %645, %646 : vector<8x128xf32>
    %648 = vector.extract_strided_slice %647 {offsets = [0, 0], sizes = [8, 64], strides = [1, 1]} : vector<8x128xf32> to vector<8x64xf32>
    %c48_137 = arith.constant 48 : index
    %c0_138 = arith.constant 0 : index
    %649 = vector.load %arg8[%c48_137, %c0_138] : memref<64x128xf32, #tpu.memory_space<vmem>>, vector<8x64xf32>
    tpu.vector_store %arg8[%c48_137, %c0_138], %648 {strides = array<i32>} : memref<64x128xf32, #tpu.memory_space<vmem>>, vector<8x64xf32>,
    %650 = vector.extract_strided_slice %647 {offsets = [0, 64], sizes = [8, 64], strides = [1, 1]} : vector<8x128xf32> to vector<8x64xf32>
    %c8_139 = arith.constant 8 : index
    %c64_140 = arith.constant 64 : index
    %651 = vector.load %arg8[%c8_139, %c64_140] : memref<64x128xf32, #tpu.memory_space<vmem>>, vector<8x64xf32>
    tpu.vector_store %arg8[%c8_139, %c64_140], %650 {strides = array<i32>} : memref<64x128xf32, #tpu.memory_space<vmem>>, vector<8x64xf32>,
    %652 = vector.extract_strided_slice %355 {offsets = [56, 0], sizes = [8, 384], strides = [1, 1]} : vector<64x384xf32> to vector<8x384xf32>
    %653 = vector.extract_strided_slice %355 {offsets = [0, 0], sizes = [8, 384], strides = [1, 1]} : vector<64x384xf32> to vector<8x384xf32>
    %654 = vector.shape_cast %377 : vector<1x384xi1> to vector<1x384xi1>
    %655 = vector.broadcast %654 : vector<1x384xi1> to vector<8x384xi1>
    %656 = arith.select %655, %652, %653 : vector<8x384xi1>, vector<8x384xf32>
    %657 = arith.truncf %647 : vector<8x128xf32> to vector<8x128xbf16>
    %cst_141 = arith.constant dense<0.000000e+00> : vector<8x384xf32>
    %658 = tpu.matmul %657, %357, %cst_141 {dimension_numbers = #tpu.dot_dimension_numbers<[1], [0], [0], [1], [0, 0, 1, 1], [], []>} : vector<8x128xbf16>, vector<128x384xbf16>, vector<8x384xf32> -> vector<8x384xf32>
    %659 = vector.broadcast %358 : vector<1x384xf32> to vector<8x384xf32>
    %660 = arith.addf %658, %659 : vector<8x384xf32>
    %661 = vector.extract_strided_slice %656 {offsets = [0, 0], sizes = [8, 128], strides = [1, 1]} : vector<8x384xf32> to vector<8x128xf32>
    %662 = vector.extract_strided_slice %660 {offsets = [0, 0], sizes = [8, 128], strides = [1, 1]} : vector<8x384xf32> to vector<8x128xf32>
    %663 = arith.addf %661, %662 : vector<8x128xf32>
    %664 = arith.negf %663 : vector<8x128xf32>
    %665 = math.exp %664 : vector<8x128xf32>
    %cst_142 = arith.constant 1.000000e+00 : f32
    %666 = vector.broadcast %cst_142 : f32 to vector<8x128xf32>
    %667 = arith.addf %666, %665 : vector<8x128xf32>
    %668 = arith.divf %666, %667 : vector<8x128xf32>
    %669 = vector.extract_strided_slice %656 {offsets = [0, 128], sizes = [8, 128], strides = [1, 1]} : vector<8x384xf32> to vector<8x128xf32>
    %670 = vector.extract_strided_slice %660 {offsets = [0, 128], sizes = [8, 128], strides = [1, 1]} : vector<8x384xf32> to vector<8x128xf32>
    %671 = arith.addf %669, %670 : vector<8x128xf32>
    %672 = arith.negf %671 : vector<8x128xf32>
    %673 = math.exp %672 : vector<8x128xf32>
    %cst_143 = arith.constant 1.000000e+00 : f32
    %674 = vector.broadcast %cst_143 : f32 to vector<8x128xf32>
    %675 = arith.addf %674, %673 : vector<8x128xf32>
    %676 = arith.divf %674, %675 : vector<8x128xf32>
    %677 = vector.extract_strided_slice %656 {offsets = [0, 256], sizes = [8, 128], strides = [1, 1]} : vector<8x384xf32> to vector<8x128xf32>
    %678 = vector.extract_strided_slice %660 {offsets = [0, 256], sizes = [8, 128], strides = [1, 1]} : vector<8x384xf32> to vector<8x128xf32>
    %679 = arith.mulf %668, %678 : vector<8x128xf32>
    %680 = arith.addf %677, %679 : vector<8x128xf32>
    %681 = math.tanh %680 : vector<8x128xf32>
    %cst_144 = arith.constant 1.000000e+00 : f32
    %682 = vector.broadcast %cst_144 : f32 to vector<8x128xf32>
    %683 = arith.subf %682, %676 : vector<8x128xf32>
    %684 = arith.mulf %683, %681 : vector<8x128xf32>
    %685 = arith.mulf %676, %647 : vector<8x128xf32>
    %686 = arith.addf %684, %685 : vector<8x128xf32>
    %687 = vector.extract_strided_slice %686 {offsets = [0, 0], sizes = [8, 64], strides = [1, 1]} : vector<8x128xf32> to vector<8x64xf32>
    %c56_145 = arith.constant 56 : index
    %c0_146 = arith.constant 0 : index
    %688 = vector.load %arg8[%c56_145, %c0_146] : memref<64x128xf32, #tpu.memory_space<vmem>>, vector<8x64xf32>
    tpu.vector_store %arg8[%c56_145, %c0_146], %687 {strides = array<i32>} : memref<64x128xf32, #tpu.memory_space<vmem>>, vector<8x64xf32>,
    %689 = vector.extract_strided_slice %686 {offsets = [0, 64], sizes = [8, 64], strides = [1, 1]} : vector<8x128xf32> to vector<8x64xf32>
    %c0_147 = arith.constant 0 : index
    %c64_148 = arith.constant 64 : index
    %690 = vector.load %arg8[%c0_147, %c64_148] : memref<64x128xf32, #tpu.memory_space<vmem>>, vector<8x64xf32>
    tpu.vector_store %arg8[%c0_147, %c64_148], %689 {strides = array<i32>} : memref<64x128xf32, #tpu.memory_space<vmem>>, vector<8x64xf32>,
    %c0_149 = arith.constant 0 : index
    %c0_150 = arith.constant 0 : index
    %691 = vector.load %arg8[%c0_149, %c0_150] : memref<64x128xf32, #tpu.memory_space<vmem>>, vector<64x128xf32>
    %692 = arith.truncf %691 : vector<64x128xf32> to vector<64x128xbf16>
    %c2 = arith.constant 2 : index
    %c0_151 = arith.constant 0 : index
    %c0_152 = arith.constant 0 : index
    %693 = vector.load %arg1[%c2, %c0_151, %c0_152] : memref<6x128x384xbf16, #tpu.memory_space<vmem>>, vector<1x128x384xbf16>
    %694 = vector.shape_cast %693 : vector<1x128x384xbf16> to vector<128x384xbf16>
    %cst_153 = arith.constant dense<0.000000e+00> : vector<64x384xf32>
    %695 = tpu.matmul %692, %694, %cst_153 {dimension_numbers = #tpu.dot_dimension_numbers<[1], [0], [0], [1], [0, 0, 1, 1], [], []>} : vector<64x128xbf16>, vector<128x384xbf16>, vector<64x384xf32> -> vector<64x384xf32>
    %696 = vector.extract_strided_slice %0 {offsets = [2, 0], sizes = [1, 384], strides = [1, 1]} : vector<6x384xf32> to vector<1x384xf32>
    %697 = vector.broadcast %696 : vector<1x384xf32> to vector<64x384xf32>
    %698 = arith.addf %695, %697 : vector<64x384xf32>
    %c5 = arith.constant 5 : index
    %c0_154 = arith.constant 0 : index
    %c0_155 = arith.constant 0 : index
    %699 = vector.load %arg1[%c5, %c0_154, %c0_155] : memref<6x128x384xbf16, #tpu.memory_space<vmem>>, vector<1x128x384xbf16>
    %700 = vector.shape_cast %699 : vector<1x128x384xbf16> to vector<128x384xbf16>
    %701 = vector.extract_strided_slice %0 {offsets = [5, 0], sizes = [1, 384], strides = [1, 1]} : vector<6x384xf32> to vector<1x384xf32>
    %702 = tpu.iota {dimensions = array<i32: 1>} : vector<1x384xi32>
    %c128_i32_156 = arith.constant 128 : i32
    %c0_i32_157 = arith.constant 0 : i32
    %703 = arith.cmpi eq, %c128_i32_156, %c0_i32_157 : i32
    %c1_i32_158 = arith.constant 1 : i32
    %704 = arith.select %703, %c1_i32_158, %c128_i32_156 : i32
    %705 = vector.broadcast %704 : i32 to vector<1x384xi32>
    %706 = arith.remsi %702, %705 : vector<1x384xi32>
    %c0_i32_159 = arith.constant 0 : i32
    %707 = vector.broadcast %c0_i32_159 : i32 to vector<1x384xi32>
    %708 = arith.cmpi ne, %706, %707 : vector<1x384xi32>
    %c0_i32_160 = arith.constant 0 : i32
    %709 = vector.broadcast %c0_i32_160 : i32 to vector<1x384xi32>
    %710 = arith.cmpi slt, %706, %709 : vector<1x384xi32>
    %c0_i32_161 = arith.constant 0 : i32
    %711 = arith.cmpi slt, %704, %c0_i32_161 : i32
    %712 = vector.broadcast %711 : i1 to vector<1x384xi1>
    %713 = vector.broadcast %712 : vector<1x384xi1> to vector<1x384xi1>
    %714 = arith.xori %710, %713 : vector<1x384xi1>
    %715 = arith.andi %714, %708 : vector<1x384xi1>
    %716 = vector.broadcast %704 : i32 to vector<1x384xi32>
    %717 = arith.addi %706, %716 : vector<1x384xi32>
    %718 = arith.select %715, %717, %706 : vector<1x384xi1>, vector<1x384xi32>
    %c64_i32_162 = arith.constant 64 : i32
    %719 = vector.broadcast %c64_i32_162 : i32 to vector<1x384xi32>
    %720 = arith.cmpi slt, %718, %719 : vector<1x384xi32>
    %cst_163 = arith.constant 0.000000e+00 : f32
    %721 = vector.broadcast %cst_163 : f32 to vector<8x128xf32>
    %722 = vector.extract_strided_slice %698 {offsets = [0, 0], sizes = [8, 384], strides = [1, 1]} : vector<64x384xf32> to vector<8x384xf32>
    %723 = vector.extract_strided_slice %698 {offsets = [56, 0], sizes = [8, 384], strides = [1, 1]} : vector<64x384xf32> to vector<8x384xf32>
    %724 = vector.shape_cast %720 : vector<1x384xi1> to vector<1x384xi1>
    %725 = vector.broadcast %724 : vector<1x384xi1> to vector<8x384xi1>
    %726 = arith.select %725, %722, %723 : vector<8x384xi1>, vector<8x384xf32>
    %727 = arith.truncf %721 : vector<8x128xf32> to vector<8x128xbf16>
    %cst_164 = arith.constant dense<0.000000e+00> : vector<8x384xf32>
    %728 = tpu.matmul %727, %700, %cst_164 {dimension_numbers = #tpu.dot_dimension_numbers<[1], [0], [0], [1], [0, 0, 1, 1], [], []>} : vector<8x128xbf16>, vector<128x384xbf16>, vector<8x384xf32> -> vector<8x384xf32>
    %729 = vector.broadcast %701 : vector<1x384xf32> to vector<8x384xf32>
    %730 = arith.addf %728, %729 : vector<8x384xf32>
    %731 = vector.extract_strided_slice %726 {offsets = [0, 0], sizes = [8, 128], strides = [1, 1]} : vector<8x384xf32> to vector<8x128xf32>
    %732 = vector.extract_strided_slice %730 {offsets = [0, 0], sizes = [8, 128], strides = [1, 1]} : vector<8x384xf32> to vector<8x128xf32>
    %733 = arith.addf %731, %732 : vector<8x128xf32>
    %734 = arith.negf %733 : vector<8x128xf32>
    %735 = math.exp %734 : vector<8x128xf32>
    %cst_165 = arith.constant 1.000000e+00 : f32
    %736 = vector.broadcast %cst_165 : f32 to vector<8x128xf32>
    %737 = arith.addf %736, %735 : vector<8x128xf32>
    %738 = arith.divf %736, %737 : vector<8x128xf32>
    %739 = vector.extract_strided_slice %726 {offsets = [0, 128], sizes = [8, 128], strides = [1, 1]} : vector<8x384xf32> to vector<8x128xf32>
    %740 = vector.extract_strided_slice %730 {offsets = [0, 128], sizes = [8, 128], strides = [1, 1]} : vector<8x384xf32> to vector<8x128xf32>
    %741 = arith.addf %739, %740 : vector<8x128xf32>
    %742 = arith.negf %741 : vector<8x128xf32>
    %743 = math.exp %742 : vector<8x128xf32>
    %cst_166 = arith.constant 1.000000e+00 : f32
    %744 = vector.broadcast %cst_166 : f32 to vector<8x128xf32>
    %745 = arith.addf %744, %743 : vector<8x128xf32>
    %746 = arith.divf %744, %745 : vector<8x128xf32>
    %747 = vector.extract_strided_slice %726 {offsets = [0, 256], sizes = [8, 128], strides = [1, 1]} : vector<8x384xf32> to vector<8x128xf32>
    %748 = vector.extract_strided_slice %730 {offsets = [0, 256], sizes = [8, 128], strides = [1, 1]} : vector<8x384xf32> to vector<8x128xf32>
    %749 = arith.mulf %738, %748 : vector<8x128xf32>
    %750 = arith.addf %747, %749 : vector<8x128xf32>
    %751 = math.tanh %750 : vector<8x128xf32>
    %cst_167 = arith.constant 1.000000e+00 : f32
    %752 = vector.broadcast %cst_167 : f32 to vector<8x128xf32>
    %753 = arith.subf %752, %746 : vector<8x128xf32>
    %754 = arith.mulf %753, %751 : vector<8x128xf32>
    %755 = arith.mulf %746, %721 : vector<8x128xf32>
    %756 = arith.addf %754, %755 : vector<8x128xf32>
    %757 = vector.extract_strided_slice %756 {offsets = [0, 64], sizes = [8, 64], strides = [1, 1]} : vector<8x128xf32> to vector<8x64xf32>
    %758 = vector.extract_strided_slice %698 {offsets = [8, 0], sizes = [8, 384], strides = [1, 1]} : vector<64x384xf32> to vector<8x384xf32>
    %759 = vector.extract_strided_slice %698 {offsets = [48, 0], sizes = [8, 384], strides = [1, 1]} : vector<64x384xf32> to vector<8x384xf32>
    %760 = vector.shape_cast %720 : vector<1x384xi1> to vector<1x384xi1>
    %761 = vector.broadcast %760 : vector<1x384xi1> to vector<8x384xi1>
    %762 = arith.select %761, %758, %759 : vector<8x384xi1>, vector<8x384xf32>
    %763 = arith.truncf %756 : vector<8x128xf32> to vector<8x128xbf16>
    %cst_168 = arith.constant dense<0.000000e+00> : vector<8x384xf32>
    %764 = tpu.matmul %763, %700, %cst_168 {dimension_numbers = #tpu.dot_dimension_numbers<[1], [0], [0], [1], [0, 0, 1, 1], [], []>} : vector<8x128xbf16>, vector<128x384xbf16>, vector<8x384xf32> -> vector<8x384xf32>
    %765 = vector.broadcast %701 : vector<1x384xf32> to vector<8x384xf32>
    %766 = arith.addf %764, %765 : vector<8x384xf32>
    %767 = vector.extract_strided_slice %762 {offsets = [0, 0], sizes = [8, 128], strides = [1, 1]} : vector<8x384xf32> to vector<8x128xf32>
    %768 = vector.extract_strided_slice %766 {offsets = [0, 0], sizes = [8, 128], strides = [1, 1]} : vector<8x384xf32> to vector<8x128xf32>
    %769 = arith.addf %767, %768 : vector<8x128xf32>
    %770 = arith.negf %769 : vector<8x128xf32>
    %771 = math.exp %770 : vector<8x128xf32>
    %cst_169 = arith.constant 1.000000e+00 : f32
    %772 = vector.broadcast %cst_169 : f32 to vector<8x128xf32>
    %773 = arith.addf %772, %771 : vector<8x128xf32>
    %774 = arith.divf %772, %773 : vector<8x128xf32>
    %775 = vector.extract_strided_slice %762 {offsets = [0, 128], sizes = [8, 128], strides = [1, 1]} : vector<8x384xf32> to vector<8x128xf32>
    %776 = vector.extract_strided_slice %766 {offsets = [0, 128], sizes = [8, 128], strides = [1, 1]} : vector<8x384xf32> to vector<8x128xf32>
    %777 = arith.addf %775, %776 : vector<8x128xf32>
    %778 = arith.negf %777 : vector<8x128xf32>
    %779 = math.exp %778 : vector<8x128xf32>
    %cst_170 = arith.constant 1.000000e+00 : f32
    %780 = vector.broadcast %cst_170 : f32 to vector<8x128xf32>
    %781 = arith.addf %780, %779 : vector<8x128xf32>
    %782 = arith.divf %780, %781 : vector<8x128xf32>
    %783 = vector.extract_strided_slice %762 {offsets = [0, 256], sizes = [8, 128], strides = [1, 1]} : vector<8x384xf32> to vector<8x128xf32>
    %784 = vector.extract_strided_slice %766 {offsets = [0, 256], sizes = [8, 128], strides = [1, 1]} : vector<8x384xf32> to vector<8x128xf32>
    %785 = arith.mulf %774, %784 : vector<8x128xf32>
    %786 = arith.addf %783, %785 : vector<8x128xf32>
    %787 = math.tanh %786 : vector<8x128xf32>
    %cst_171 = arith.constant 1.000000e+00 : f32
    %788 = vector.broadcast %cst_171 : f32 to vector<8x128xf32>
    %789 = arith.subf %788, %782 : vector<8x128xf32>
    %790 = arith.mulf %789, %787 : vector<8x128xf32>
    %791 = arith.mulf %782, %756 : vector<8x128xf32>
    %792 = arith.addf %790, %791 : vector<8x128xf32>
    %793 = vector.extract_strided_slice %698 {offsets = [16, 0], sizes = [8, 384], strides = [1, 1]} : vector<64x384xf32> to vector<8x384xf32>
    %794 = vector.extract_strided_slice %698 {offsets = [40, 0], sizes = [8, 384], strides = [1, 1]} : vector<64x384xf32> to vector<8x384xf32>
    %795 = vector.shape_cast %720 : vector<1x384xi1> to vector<1x384xi1>
    %796 = vector.broadcast %795 : vector<1x384xi1> to vector<8x384xi1>
    %797 = arith.select %796, %793, %794 : vector<8x384xi1>, vector<8x384xf32>
    %798 = arith.truncf %792 : vector<8x128xf32> to vector<8x128xbf16>
    %cst_172 = arith.constant dense<0.000000e+00> : vector<8x384xf32>
    %799 = tpu.matmul %798, %700, %cst_172 {dimension_numbers = #tpu.dot_dimension_numbers<[1], [0], [0], [1], [0, 0, 1, 1], [], []>} : vector<8x128xbf16>, vector<128x384xbf16>, vector<8x384xf32> -> vector<8x384xf32>
    %800 = vector.broadcast %701 : vector<1x384xf32> to vector<8x384xf32>
    %801 = arith.addf %799, %800 : vector<8x384xf32>
    %802 = vector.extract_strided_slice %797 {offsets = [0, 0], sizes = [8, 128], strides = [1, 1]} : vector<8x384xf32> to vector<8x128xf32>
    %803 = vector.extract_strided_slice %801 {offsets = [0, 0], sizes = [8, 128], strides = [1, 1]} : vector<8x384xf32> to vector<8x128xf32>
    %804 = arith.addf %802, %803 : vector<8x128xf32>
    %805 = arith.negf %804 : vector<8x128xf32>
    %806 = math.exp %805 : vector<8x128xf32>
    %cst_173 = arith.constant 1.000000e+00 : f32
    %807 = vector.broadcast %cst_173 : f32 to vector<8x128xf32>
    %808 = arith.addf %807, %806 : vector<8x128xf32>
    %809 = arith.divf %807, %808 : vector<8x128xf32>
    %810 = vector.extract_strided_slice %797 {offsets = [0, 128], sizes = [8, 128], strides = [1, 1]} : vector<8x384xf32> to vector<8x128xf32>
    %811 = vector.extract_strided_slice %801 {offsets = [0, 128], sizes = [8, 128], strides = [1, 1]} : vector<8x384xf32> to vector<8x128xf32>
    %812 = arith.addf %810, %811 : vector<8x128xf32>
    %813 = arith.negf %812 : vector<8x128xf32>
    %814 = math.exp %813 : vector<8x128xf32>
    %cst_174 = arith.constant 1.000000e+00 : f32
    %815 = vector.broadcast %cst_174 : f32 to vector<8x128xf32>
    %816 = arith.addf %815, %814 : vector<8x128xf32>
    %817 = arith.divf %815, %816 : vector<8x128xf32>
    %818 = vector.extract_strided_slice %797 {offsets = [0, 256], sizes = [8, 128], strides = [1, 1]} : vector<8x384xf32> to vector<8x128xf32>
    %819 = vector.extract_strided_slice %801 {offsets = [0, 256], sizes = [8, 128], strides = [1, 1]} : vector<8x384xf32> to vector<8x128xf32>
    %820 = arith.mulf %809, %819 : vector<8x128xf32>
    %821 = arith.addf %818, %820 : vector<8x128xf32>
    %822 = math.tanh %821 : vector<8x128xf32>
    %cst_175 = arith.constant 1.000000e+00 : f32
    %823 = vector.broadcast %cst_175 : f32 to vector<8x128xf32>
    %824 = arith.subf %823, %817 : vector<8x128xf32>
    %825 = arith.mulf %824, %822 : vector<8x128xf32>
    %826 = arith.mulf %817, %792 : vector<8x128xf32>
    %827 = arith.addf %825, %826 : vector<8x128xf32>
    %828 = vector.extract_strided_slice %698 {offsets = [24, 0], sizes = [8, 384], strides = [1, 1]} : vector<64x384xf32> to vector<8x384xf32>
    %829 = vector.extract_strided_slice %698 {offsets = [32, 0], sizes = [8, 384], strides = [1, 1]} : vector<64x384xf32> to vector<8x384xf32>
    %830 = vector.shape_cast %720 : vector<1x384xi1> to vector<1x384xi1>
    %831 = vector.broadcast %830 : vector<1x384xi1> to vector<8x384xi1>
    %832 = arith.select %831, %828, %829 : vector<8x384xi1>, vector<8x384xf32>
    %833 = arith.truncf %827 : vector<8x128xf32> to vector<8x128xbf16>
    %cst_176 = arith.constant dense<0.000000e+00> : vector<8x384xf32>
    %834 = tpu.matmul %833, %700, %cst_176 {dimension_numbers = #tpu.dot_dimension_numbers<[1], [0], [0], [1], [0, 0, 1, 1], [], []>} : vector<8x128xbf16>, vector<128x384xbf16>, vector<8x384xf32> -> vector<8x384xf32>
    %835 = vector.broadcast %701 : vector<1x384xf32> to vector<8x384xf32>
    %836 = arith.addf %834, %835 : vector<8x384xf32>
    %837 = vector.extract_strided_slice %832 {offsets = [0, 0], sizes = [8, 128], strides = [1, 1]} : vector<8x384xf32> to vector<8x128xf32>
    %838 = vector.extract_strided_slice %836 {offsets = [0, 0], sizes = [8, 128], strides = [1, 1]} : vector<8x384xf32> to vector<8x128xf32>
    %839 = arith.addf %837, %838 : vector<8x128xf32>
    %840 = arith.negf %839 : vector<8x128xf32>
    %841 = math.exp %840 : vector<8x128xf32>
    %cst_177 = arith.constant 1.000000e+00 : f32
    %842 = vector.broadcast %cst_177 : f32 to vector<8x128xf32>
    %843 = arith.addf %842, %841 : vector<8x128xf32>
    %844 = arith.divf %842, %843 : vector<8x128xf32>
    %845 = vector.extract_strided_slice %832 {offsets = [0, 128], sizes = [8, 128], strides = [1, 1]} : vector<8x384xf32> to vector<8x128xf32>
    %846 = vector.extract_strided_slice %836 {offsets = [0, 128], sizes = [8, 128], strides = [1, 1]} : vector<8x384xf32> to vector<8x128xf32>
    %847 = arith.addf %845, %846 : vector<8x128xf32>
    %848 = arith.negf %847 : vector<8x128xf32>
    %849 = math.exp %848 : vector<8x128xf32>
    %cst_178 = arith.constant 1.000000e+00 : f32
    %850 = vector.broadcast %cst_178 : f32 to vector<8x128xf32>
    %851 = arith.addf %850, %849 : vector<8x128xf32>
    %852 = arith.divf %850, %851 : vector<8x128xf32>
    %853 = vector.extract_strided_slice %832 {offsets = [0, 256], sizes = [8, 128], strides = [1, 1]} : vector<8x384xf32> to vector<8x128xf32>
    %854 = vector.extract_strided_slice %836 {offsets = [0, 256], sizes = [8, 128], strides = [1, 1]} : vector<8x384xf32> to vector<8x128xf32>
    %855 = arith.mulf %844, %854 : vector<8x128xf32>
    %856 = arith.addf %853, %855 : vector<8x128xf32>
    %857 = math.tanh %856 : vector<8x128xf32>
    %cst_179 = arith.constant 1.000000e+00 : f32
    %858 = vector.broadcast %cst_179 : f32 to vector<8x128xf32>
    %859 = arith.subf %858, %852 : vector<8x128xf32>
    %860 = arith.mulf %859, %857 : vector<8x128xf32>
    %861 = arith.mulf %852, %827 : vector<8x128xf32>
    %862 = arith.addf %860, %861 : vector<8x128xf32>
    %863 = vector.extract_strided_slice %698 {offsets = [32, 0], sizes = [8, 384], strides = [1, 1]} : vector<64x384xf32> to vector<8x384xf32>
    %864 = vector.extract_strided_slice %698 {offsets = [24, 0], sizes = [8, 384], strides = [1, 1]} : vector<64x384xf32> to vector<8x384xf32>
    %865 = vector.shape_cast %720 : vector<1x384xi1> to vector<1x384xi1>
    %866 = vector.broadcast %865 : vector<1x384xi1> to vector<8x384xi1>
    %867 = arith.select %866, %863, %864 : vector<8x384xi1>, vector<8x384xf32>
    %868 = arith.truncf %862 : vector<8x128xf32> to vector<8x128xbf16>
    %cst_180 = arith.constant dense<0.000000e+00> : vector<8x384xf32>
    %869 = tpu.matmul %868, %700, %cst_180 {dimension_numbers = #tpu.dot_dimension_numbers<[1], [0], [0], [1], [0, 0, 1, 1], [], []>} : vector<8x128xbf16>, vector<128x384xbf16>, vector<8x384xf32> -> vector<8x384xf32>
    %870 = vector.broadcast %701 : vector<1x384xf32> to vector<8x384xf32>
    %871 = arith.addf %869, %870 : vector<8x384xf32>
    %872 = vector.extract_strided_slice %867 {offsets = [0, 0], sizes = [8, 128], strides = [1, 1]} : vector<8x384xf32> to vector<8x128xf32>
    %873 = vector.extract_strided_slice %871 {offsets = [0, 0], sizes = [8, 128], strides = [1, 1]} : vector<8x384xf32> to vector<8x128xf32>
    %874 = arith.addf %872, %873 : vector<8x128xf32>
    %875 = arith.negf %874 : vector<8x128xf32>
    %876 = math.exp %875 : vector<8x128xf32>
    %cst_181 = arith.constant 1.000000e+00 : f32
    %877 = vector.broadcast %cst_181 : f32 to vector<8x128xf32>
    %878 = arith.addf %877, %876 : vector<8x128xf32>
    %879 = arith.divf %877, %878 : vector<8x128xf32>
    %880 = vector.extract_strided_slice %867 {offsets = [0, 128], sizes = [8, 128], strides = [1, 1]} : vector<8x384xf32> to vector<8x128xf32>
    %881 = vector.extract_strided_slice %871 {offsets = [0, 128], sizes = [8, 128], strides = [1, 1]} : vector<8x384xf32> to vector<8x128xf32>
    %882 = arith.addf %880, %881 : vector<8x128xf32>
    %883 = arith.negf %882 : vector<8x128xf32>
    %884 = math.exp %883 : vector<8x128xf32>
    %cst_182 = arith.constant 1.000000e+00 : f32
    %885 = vector.broadcast %cst_182 : f32 to vector<8x128xf32>
    %886 = arith.addf %885, %884 : vector<8x128xf32>
    %887 = arith.divf %885, %886 : vector<8x128xf32>
    %888 = vector.extract_strided_slice %867 {offsets = [0, 256], sizes = [8, 128], strides = [1, 1]} : vector<8x384xf32> to vector<8x128xf32>
    %889 = vector.extract_strided_slice %871 {offsets = [0, 256], sizes = [8, 128], strides = [1, 1]} : vector<8x384xf32> to vector<8x128xf32>
    %890 = arith.mulf %879, %889 : vector<8x128xf32>
    %891 = arith.addf %888, %890 : vector<8x128xf32>
    %892 = math.tanh %891 : vector<8x128xf32>
    %cst_183 = arith.constant 1.000000e+00 : f32
    %893 = vector.broadcast %cst_183 : f32 to vector<8x128xf32>
    %894 = arith.subf %893, %887 : vector<8x128xf32>
    %895 = arith.mulf %894, %892 : vector<8x128xf32>
    %896 = arith.mulf %887, %862 : vector<8x128xf32>
    %897 = arith.addf %895, %896 : vector<8x128xf32>
    %898 = vector.extract_strided_slice %698 {offsets = [40, 0], sizes = [8, 384], strides = [1, 1]} : vector<64x384xf32> to vector<8x384xf32>
    %899 = vector.extract_strided_slice %698 {offsets = [16, 0], sizes = [8, 384], strides = [1, 1]} : vector<64x384xf32> to vector<8x384xf32>
    %900 = vector.shape_cast %720 : vector<1x384xi1> to vector<1x384xi1>
    %901 = vector.broadcast %900 : vector<1x384xi1> to vector<8x384xi1>
    %902 = arith.select %901, %898, %899 : vector<8x384xi1>, vector<8x384xf32>
    %903 = arith.truncf %897 : vector<8x128xf32> to vector<8x128xbf16>
    %cst_184 = arith.constant dense<0.000000e+00> : vector<8x384xf32>
    %904 = tpu.matmul %903, %700, %cst_184 {dimension_numbers = #tpu.dot_dimension_numbers<[1], [0], [0], [1], [0, 0, 1, 1], [], []>} : vector<8x128xbf16>, vector<128x384xbf16>, vector<8x384xf32> -> vector<8x384xf32>
    %905 = vector.broadcast %701 : vector<1x384xf32> to vector<8x384xf32>
    %906 = arith.addf %904, %905 : vector<8x384xf32>
    %907 = vector.extract_strided_slice %902 {offsets = [0, 0], sizes = [8, 128], strides = [1, 1]} : vector<8x384xf32> to vector<8x128xf32>
    %908 = vector.extract_strided_slice %906 {offsets = [0, 0], sizes = [8, 128], strides = [1, 1]} : vector<8x384xf32> to vector<8x128xf32>
    %909 = arith.addf %907, %908 : vector<8x128xf32>
    %910 = arith.negf %909 : vector<8x128xf32>
    %911 = math.exp %910 : vector<8x128xf32>
    %cst_185 = arith.constant 1.000000e+00 : f32
    %912 = vector.broadcast %cst_185 : f32 to vector<8x128xf32>
    %913 = arith.addf %912, %911 : vector<8x128xf32>
    %914 = arith.divf %912, %913 : vector<8x128xf32>
    %915 = vector.extract_strided_slice %902 {offsets = [0, 128], sizes = [8, 128], strides = [1, 1]} : vector<8x384xf32> to vector<8x128xf32>
    %916 = vector.extract_strided_slice %906 {offsets = [0, 128], sizes = [8, 128], strides = [1, 1]} : vector<8x384xf32> to vector<8x128xf32>
    %917 = arith.addf %915, %916 : vector<8x128xf32>
    %918 = arith.negf %917 : vector<8x128xf32>
    %919 = math.exp %918 : vector<8x128xf32>
    %cst_186 = arith.constant 1.000000e+00 : f32
    %920 = vector.broadcast %cst_186 : f32 to vector<8x128xf32>
    %921 = arith.addf %920, %919 : vector<8x128xf32>
    %922 = arith.divf %920, %921 : vector<8x128xf32>
    %923 = vector.extract_strided_slice %902 {offsets = [0, 256], sizes = [8, 128], strides = [1, 1]} : vector<8x384xf32> to vector<8x128xf32>
    %924 = vector.extract_strided_slice %906 {offsets = [0, 256], sizes = [8, 128], strides = [1, 1]} : vector<8x384xf32> to vector<8x128xf32>
    %925 = arith.mulf %914, %924 : vector<8x128xf32>
    %926 = arith.addf %923, %925 : vector<8x128xf32>
    %927 = math.tanh %926 : vector<8x128xf32>
    %cst_187 = arith.constant 1.000000e+00 : f32
    %928 = vector.broadcast %cst_187 : f32 to vector<8x128xf32>
    %929 = arith.subf %928, %922 : vector<8x128xf32>
    %930 = arith.mulf %929, %927 : vector<8x128xf32>
    %931 = arith.mulf %922, %897 : vector<8x128xf32>
    %932 = arith.addf %930, %931 : vector<8x128xf32>
    %933 = vector.extract_strided_slice %698 {offsets = [48, 0], sizes = [8, 384], strides = [1, 1]} : vector<64x384xf32> to vector<8x384xf32>
    %934 = vector.extract_strided_slice %698 {offsets = [8, 0], sizes = [8, 384], strides = [1, 1]} : vector<64x384xf32> to vector<8x384xf32>
    %935 = vector.shape_cast %720 : vector<1x384xi1> to vector<1x384xi1>
    %936 = vector.broadcast %935 : vector<1x384xi1> to vector<8x384xi1>
    %937 = arith.select %936, %933, %934 : vector<8x384xi1>, vector<8x384xf32>
    %938 = arith.truncf %932 : vector<8x128xf32> to vector<8x128xbf16>
    %cst_188 = arith.constant dense<0.000000e+00> : vector<8x384xf32>
    %939 = tpu.matmul %938, %700, %cst_188 {dimension_numbers = #tpu.dot_dimension_numbers<[1], [0], [0], [1], [0, 0, 1, 1], [], []>} : vector<8x128xbf16>, vector<128x384xbf16>, vector<8x384xf32> -> vector<8x384xf32>
    %940 = vector.broadcast %701 : vector<1x384xf32> to vector<8x384xf32>
    %941 = arith.addf %939, %940 : vector<8x384xf32>
    %942 = vector.extract_strided_slice %937 {offsets = [0, 0], sizes = [8, 128], strides = [1, 1]} : vector<8x384xf32> to vector<8x128xf32>
    %943 = vector.extract_strided_slice %941 {offsets = [0, 0], sizes = [8, 128], strides = [1, 1]} : vector<8x384xf32> to vector<8x128xf32>
    %944 = arith.addf %942, %943 : vector<8x128xf32>
    %945 = arith.negf %944 : vector<8x128xf32>
    %946 = math.exp %945 : vector<8x128xf32>
    %cst_189 = arith.constant 1.000000e+00 : f32
    %947 = vector.broadcast %cst_189 : f32 to vector<8x128xf32>
    %948 = arith.addf %947, %946 : vector<8x128xf32>
    %949 = arith.divf %947, %948 : vector<8x128xf32>
    %950 = vector.extract_strided_slice %937 {offsets = [0, 128], sizes = [8, 128], strides = [1, 1]} : vector<8x384xf32> to vector<8x128xf32>
    %951 = vector.extract_strided_slice %941 {offsets = [0, 128], sizes = [8, 128], strides = [1, 1]} : vector<8x384xf32> to vector<8x128xf32>
    %952 = arith.addf %950, %951 : vector<8x128xf32>
    %953 = arith.negf %952 : vector<8x128xf32>
    %954 = math.exp %953 : vector<8x128xf32>
    %cst_190 = arith.constant 1.000000e+00 : f32
    %955 = vector.broadcast %cst_190 : f32 to vector<8x128xf32>
    %956 = arith.addf %955, %954 : vector<8x128xf32>
    %957 = arith.divf %955, %956 : vector<8x128xf32>
    %958 = vector.extract_strided_slice %937 {offsets = [0, 256], sizes = [8, 128], strides = [1, 1]} : vector<8x384xf32> to vector<8x128xf32>
    %959 = vector.extract_strided_slice %941 {offsets = [0, 256], sizes = [8, 128], strides = [1, 1]} : vector<8x384xf32> to vector<8x128xf32>
    %960 = arith.mulf %949, %959 : vector<8x128xf32>
    %961 = arith.addf %958, %960 : vector<8x128xf32>
    %962 = math.tanh %961 : vector<8x128xf32>
    %cst_191 = arith.constant 1.000000e+00 : f32
    %963 = vector.broadcast %cst_191 : f32 to vector<8x128xf32>
    %964 = arith.subf %963, %957 : vector<8x128xf32>
    %965 = arith.mulf %964, %962 : vector<8x128xf32>
    %966 = arith.mulf %957, %932 : vector<8x128xf32>
    %967 = arith.addf %965, %966 : vector<8x128xf32>
    %968 = vector.extract_strided_slice %698 {offsets = [56, 0], sizes = [8, 384], strides = [1, 1]} : vector<64x384xf32> to vector<8x384xf32>
    %969 = vector.extract_strided_slice %698 {offsets = [0, 0], sizes = [8, 384], strides = [1, 1]} : vector<64x384xf32> to vector<8x384xf32>
    %970 = vector.shape_cast %720 : vector<1x384xi1> to vector<1x384xi1>
    %971 = vector.broadcast %970 : vector<1x384xi1> to vector<8x384xi1>
    %972 = arith.select %971, %968, %969 : vector<8x384xi1>, vector<8x384xf32>
    %973 = arith.truncf %967 : vector<8x128xf32> to vector<8x128xbf16>
    %cst_192 = arith.constant dense<0.000000e+00> : vector<8x384xf32>
    %974 = tpu.matmul %973, %700, %cst_192 {dimension_numbers = #tpu.dot_dimension_numbers<[1], [0], [0], [1], [0, 0, 1, 1], [], []>} : vector<8x128xbf16>, vector<128x384xbf16>, vector<8x384xf32> -> vector<8x384xf32>
    %975 = vector.broadcast %701 : vector<1x384xf32> to vector<8x384xf32>
    %976 = arith.addf %974, %975 : vector<8x384xf32>
    %977 = vector.extract_strided_slice %972 {offsets = [0, 0], sizes = [8, 128], strides = [1, 1]} : vector<8x384xf32> to vector<8x128xf32>
    %978 = vector.extract_strided_slice %976 {offsets = [0, 0], sizes = [8, 128], strides = [1, 1]} : vector<8x384xf32> to vector<8x128xf32>
    %979 = arith.addf %977, %978 : vector<8x128xf32>
    %980 = arith.negf %979 : vector<8x128xf32>
    %981 = math.exp %980 : vector<8x128xf32>
    %cst_193 = arith.constant 1.000000e+00 : f32
    %982 = vector.broadcast %cst_193 : f32 to vector<8x128xf32>
    %983 = arith.addf %982, %981 : vector<8x128xf32>
    %984 = arith.divf %982, %983 : vector<8x128xf32>
    %985 = vector.extract_strided_slice %972 {offsets = [0, 128], sizes = [8, 128], strides = [1, 1]} : vector<8x384xf32> to vector<8x128xf32>
    %986 = vector.extract_strided_slice %976 {offsets = [0, 128], sizes = [8, 128], strides = [1, 1]} : vector<8x384xf32> to vector<8x128xf32>
    %987 = arith.addf %985, %986 : vector<8x128xf32>
    %988 = arith.negf %987 : vector<8x128xf32>
    %989 = math.exp %988 : vector<8x128xf32>
    %cst_194 = arith.constant 1.000000e+00 : f32
    %990 = vector.broadcast %cst_194 : f32 to vector<8x128xf32>
    %991 = arith.addf %990, %989 : vector<8x128xf32>
    %992 = arith.divf %990, %991 : vector<8x128xf32>
    %993 = vector.extract_strided_slice %972 {offsets = [0, 256], sizes = [8, 128], strides = [1, 1]} : vector<8x384xf32> to vector<8x128xf32>
    %994 = vector.extract_strided_slice %976 {offsets = [0, 256], sizes = [8, 128], strides = [1, 1]} : vector<8x384xf32> to vector<8x128xf32>
    %995 = arith.mulf %984, %994 : vector<8x128xf32>
    %996 = arith.addf %993, %995 : vector<8x128xf32>
    %997 = math.tanh %996 : vector<8x128xf32>
    %cst_195 = arith.constant 1.000000e+00 : f32
    %998 = vector.broadcast %cst_195 : f32 to vector<8x128xf32>
    %999 = arith.subf %998, %992 : vector<8x128xf32>
    %1000 = arith.mulf %999, %997 : vector<8x128xf32>
    %1001 = arith.mulf %992, %967 : vector<8x128xf32>
    %1002 = arith.addf %1000, %1001 : vector<8x128xf32>
    %1003 = vector.extract_strided_slice %1002 {offsets = [0, 0], sizes = [8, 32], strides = [1, 1]} : vector<8x128xf32> to vector<8x32xf32>
    %1004 = vector.extract_strided_slice %757 {offsets = [0, 0], sizes = [8, 32], strides = [1, 1]} : vector<8x64xf32> to vector<8x32xf32>
    %1005 = tpu.concatenate %1003, %1004 in 1 : vector<8x32xf32>, vector<8x32xf32> -> vector<8x64xf32>
    %1006 = vector.extract_strided_slice %1002 {offsets = [0, 32], sizes = [8, 32], strides = [1, 1]} : vector<8x128xf32> to vector<8x32xf32>
    %1007 = vector.extract_strided_slice %757 {offsets = [0, 32], sizes = [8, 32], strides = [1, 1]} : vector<8x64xf32> to vector<8x32xf32>
    %1008 = tpu.concatenate %1006, %1007 in 1 : vector<8x32xf32>, vector<8x32xf32> -> vector<8x64xf32>
    %c0_196 = arith.constant 0 : index
    %c0_197 = arith.constant 0 : index
    %1009 = vector.load %arg3[%c0_196, %c0_197] : memref<2x128xf32, #tpu.memory_space<vmem>>, vector<2x128xf32>
    %1010 = vector.extract_strided_slice %1009 {offsets = [0, 0], sizes = [1, 64], strides = [1, 1]} : vector<2x128xf32> to vector<1x64xf32>
    %1011 = vector.extract_strided_slice %1009 {offsets = [1, 0], sizes = [1, 64], strides = [1, 1]} : vector<2x128xf32> to vector<1x64xf32>
    %cst_198 = arith.constant dense<0.000000e+00> : vector<8xf32>
    %1012 = vector.multi_reduction <add>, %1005, %cst_198 [1] : vector<8x64xf32> to vector<8xf32>
    %1013 = vector.shape_cast %1012 : vector<8xf32> to vector<8x1xf32>
    %cst_199 = arith.constant 6.400000e+01 : f32
    %1014 = vector.broadcast %cst_199 : f32 to vector<8x1xf32>
    %1015 = arith.divf %1013, %1014 : vector<8x1xf32>
    %1016 = vector.broadcast %1015 : vector<8x1xf32> to vector<8x64xf32>
    %1017 = arith.subf %1005, %1016 : vector<8x64xf32>
    %1018 = arith.mulf %1017, %1017 : vector<8x64xf32>
    %cst_200 = arith.constant dense<0.000000e+00> : vector<8xf32>
    %1019 = vector.multi_reduction <add>, %1018, %cst_200 [1] : vector<8x64xf32> to vector<8xf32>
    %1020 = vector.shape_cast %1019 : vector<8xf32> to vector<8x1xf32>
    %cst_201 = arith.constant 6.400000e+01 : f32
    %1021 = vector.broadcast %cst_201 : f32 to vector<8x1xf32>
    %1022 = arith.divf %1020, %1021 : vector<8x1xf32>
    %1023 = vector.broadcast %1015 : vector<8x1xf32> to vector<8x64xf32>
    %1024 = arith.subf %1005, %1023 : vector<8x64xf32>
    %cst_202 = arith.constant 9.99999974E-6 : f32
    %1025 = vector.broadcast %cst_202 : f32 to vector<8x1xf32>
    %1026 = arith.addf %1022, %1025 : vector<8x1xf32>
    %1027 = math.rsqrt %1026 : vector<8x1xf32>
    %1028 = vector.broadcast %1027 : vector<8x1xf32> to vector<8x64xf32>
    %1029 = arith.mulf %1024, %1028 : vector<8x64xf32>
    %1030 = vector.broadcast %1010 : vector<1x64xf32> to vector<8x64xf32>
    %1031 = arith.mulf %1029, %1030 : vector<8x64xf32>
    %1032 = vector.broadcast %1011 : vector<1x64xf32> to vector<8x64xf32>
    %1033 = arith.addf %1031, %1032 : vector<8x64xf32>
    %1034 = vector.extract_strided_slice %1009 {offsets = [0, 64], sizes = [1, 64], strides = [1, 1]} : vector<2x128xf32> to vector<1x64xf32>
    %1035 = vector.extract_strided_slice %1009 {offsets = [1, 64], sizes = [1, 64], strides = [1, 1]} : vector<2x128xf32> to vector<1x64xf32>
    %cst_203 = arith.constant dense<0.000000e+00> : vector<8xf32>
    %1036 = vector.multi_reduction <add>, %1008, %cst_203 [1] : vector<8x64xf32> to vector<8xf32>
    %1037 = vector.shape_cast %1036 : vector<8xf32> to vector<8x1xf32>
    %cst_204 = arith.constant 6.400000e+01 : f32
    %1038 = vector.broadcast %cst_204 : f32 to vector<8x1xf32>
    %1039 = arith.divf %1037, %1038 : vector<8x1xf32>
    %1040 = vector.broadcast %1039 : vector<8x1xf32> to vector<8x64xf32>
    %1041 = arith.subf %1008, %1040 : vector<8x64xf32>
    %1042 = arith.mulf %1041, %1041 : vector<8x64xf32>
    %cst_205 = arith.constant dense<0.000000e+00> : vector<8xf32>
    %1043 = vector.multi_reduction <add>, %1042, %cst_205 [1] : vector<8x64xf32> to vector<8xf32>
    %1044 = vector.shape_cast %1043 : vector<8xf32> to vector<8x1xf32>
    %cst_206 = arith.constant 6.400000e+01 : f32
    %1045 = vector.broadcast %cst_206 : f32 to vector<8x1xf32>
    %1046 = arith.divf %1044, %1045 : vector<8x1xf32>
    %1047 = vector.broadcast %1039 : vector<8x1xf32> to vector<8x64xf32>
    %1048 = arith.subf %1008, %1047 : vector<8x64xf32>
    %cst_207 = arith.constant 9.99999974E-6 : f32
    %1049 = vector.broadcast %cst_207 : f32 to vector<8x1xf32>
    %1050 = arith.addf %1046, %1049 : vector<8x1xf32>
    %1051 = math.rsqrt %1050 : vector<8x1xf32>
    %1052 = vector.broadcast %1051 : vector<8x1xf32> to vector<8x64xf32>
    %1053 = arith.mulf %1048, %1052 : vector<8x64xf32>
    %1054 = vector.broadcast %1034 : vector<1x64xf32> to vector<8x64xf32>
    %1055 = arith.mulf %1053, %1054 : vector<8x64xf32>
    %1056 = vector.broadcast %1035 : vector<1x64xf32> to vector<8x64xf32>
    %1057 = arith.addf %1055, %1056 : vector<8x64xf32>
    %1058 = tpu.concatenate %1033, %1057 in 1 : vector<8x64xf32>, vector<8x64xf32> -> vector<8x128xf32>
    %c0_208 = arith.constant 0 : index
    %c0_209 = arith.constant 0 : index
    %1059 = vector.load %arg4[%c0_208, %c0_209] : memref<176x32xf32, #tpu.memory_space<vmem>>, vector<176x32xf32>
    %c0_210 = arith.constant 0 : index
    %c0_211 = arith.constant 0 : index
    %1060 = vector.load %arg5[%c0_210, %c0_211] : memref<3x32xf32, #tpu.memory_space<vmem>>, vector<3x32xf32>
    %1061 = vector.extract_strided_slice %1059 {offsets = [0, 0], sizes = [128, 32], strides = [1, 1]} : vector<176x32xf32> to vector<128x32xf32>
    %cst_212 = arith.constant dense<0.000000e+00> : vector<8x32xf32>
    %1062 = tpu.matmul %1058, %1061, %cst_212 {dimension_numbers = #tpu.dot_dimension_numbers<[1], [0], [0], [1], [0, 0, 1, 1], [], []>} : vector<8x128xf32>, vector<128x32xf32>, vector<8x32xf32> -> vector<8x32xf32>
    %1063 = vector.extract_strided_slice %1060 {offsets = [0, 0], sizes = [1, 32], strides = [1, 1]} : vector<3x32xf32> to vector<1x32xf32>
    %1064 = vector.broadcast %1063 : vector<1x32xf32> to vector<8x32xf32>
    %1065 = arith.addf %1062, %1064 : vector<8x32xf32>
    %cst_213 = arith.constant 0.000000e+00 : f32
    %1066 = vector.broadcast %cst_213 : f32 to vector<8x32xf32>
    %1067 = arith.maximumf %1065, %1066 : vector<8x32xf32>
    %1068 = vector.extract_strided_slice %1059 {offsets = [128, 0], sizes = [32, 16], strides = [1, 1]} : vector<176x32xf32> to vector<32x16xf32>
    %cst_214 = arith.constant dense<0.000000e+00> : vector<8x16xf32>
    %1069 = tpu.matmul %1067, %1068, %cst_214 {dimension_numbers = #tpu.dot_dimension_numbers<[1], [0], [0], [1], [0, 0, 1, 1], [], []>} : vector<8x32xf32>, vector<32x16xf32>, vector<8x16xf32> -> vector<8x16xf32>
    %1070 = vector.extract_strided_slice %1060 {offsets = [1, 0], sizes = [1, 16], strides = [1, 1]} : vector<3x32xf32> to vector<1x16xf32>
    %1071 = vector.broadcast %1070 : vector<1x16xf32> to vector<8x16xf32>
    %1072 = arith.addf %1069, %1071 : vector<8x16xf32>
    %cst_215 = arith.constant 0.000000e+00 : f32
    %1073 = vector.broadcast %cst_215 : f32 to vector<8x16xf32>
    %1074 = arith.maximumf %1072, %1073 : vector<8x16xf32>
    %1075 = vector.extract_strided_slice %1059 {offsets = [160, 0], sizes = [16, 1], strides = [1, 1]} : vector<176x32xf32> to vector<16x1xf32>
    %cst_216 = arith.constant dense<0.000000e+00> : vector<8x1xf32>
    %1076 = tpu.matmul %1074, %1075, %cst_216 {dimension_numbers = #tpu.dot_dimension_numbers<[1], [0], [0], [1], [0, 0, 1, 1], [], []>} : vector<8x16xf32>, vector<16x1xf32>, vector<8x1xf32> -> vector<8x1xf32>
    %1077 = vector.extract_strided_slice %1060 {offsets = [2, 0], sizes = [1, 1], strides = [1, 1]} : vector<3x32xf32> to vector<1x1xf32>
    %1078 = vector.broadcast %1077 : vector<1x1xf32> to vector<8x1xf32>
    %1079 = arith.addf %1076, %1078 : vector<8x1xf32>
    %1080 = arith.negf %1079 : vector<8x1xf32>
    %1081 = math.exp %1080 : vector<8x1xf32>
    %cst_217 = arith.constant 1.000000e+00 : f32
    %1082 = vector.broadcast %cst_217 : f32 to vector<8x1xf32>
    %1083 = arith.addf %1082, %1081 : vector<8x1xf32>
    %1084 = arith.divf %1082, %1083 : vector<8x1xf32>
    %c0_218 = arith.constant 0 : index
    %c0_219 = arith.constant 0 : index
    %1085 = vector.load %arg6[%c0_218, %c0_219] : memref<8x1xf32, #tpu.memory_space<vmem>>, vector<8x1xf32>
    tpu.vector_store %arg6[%c0_218, %c0_219], %1084 {strides = array<i32>} : memref<8x1xf32, #tpu.memory_space<vmem>>, vector<8x1xf32>,
    return
  }
}

</mosaic_0001>

<llo_original>
// kernel: tpu_custom_call.1
$region0: #{tpu_custom_call.1}
  #allocation0 [shape = 'u32[]', space=smem, size = 0x4, offset = 0x4, fixed_abs, tag = 'smem constant byte address 0x4 - core index']
  #allocation1 [shape = 'u32[72,128]{1,0:T(1,128)}', space=vmem, size = 0x9000, scoped, tag = 'internal scratch']
  #allocation2 [shape = 'f32[64,128]{1,0:T(8,128)}', space=vmem, size = 0x8000, scoped, tag = 'scratch operand']
  #allocation3 [shape = 'f32[64,128]{1,0:T(8,128)}', space=vmem, size = 0x8000, scoped, tag = 'scratch operand']
  %s0 = inlined_call_operand.vmem [shape: f32[64,128], index: 0, kind: input, shape index: {}]
  %s1 = inlined_call_operand.hbm [shape: bf16[6,128,384], index: 1, kind: input, shape index: {}]
  %s2 = inlined_call_operand.vmem [shape: f32[6,384], index: 2, kind: input, shape index: {}]
  %s3 = inlined_call_operand.vmem [shape: f32[2,128], index: 3, kind: input, shape index: {}]
  %s4 = inlined_call_operand.vmem [shape: f32[176,32], index: 4, kind: input, shape index: {}]
  %s5 = inlined_call_operand.vmem [shape: f32[3,32], index: 5, kind: input, shape index: {}]
  %s6 = inlined_call_operand.vmem [shape: f32[8,1], index: 6, kind: output, shape index: {}]
  %s7 = sld [smem:[#allocation0]]
  $region38: #{tpu_custom_call.1} parent=0
    _
  %s9 = ssub.s32 1, %s7
  %s10 = scalar_select 0, %s9, %s7
  $region1: #{tpu_custom_call.1} parent=0
    #allocation4 [shape = 'u8[589824]{0}', space=vmem, size = 0x90000, scoped, tag = 'input window, operand 1, single buffered']
    #allocation5 [shape = 's32[1]{0}', space=sflag, size = 0x4, scoped, tag = 'scoped memory for tpu_custom_call.1']
    %11 = vsyncpa [#allocation5], 0
    // Predicated region
    $region2: #{tpu_custom_call.1} parent=1 // pred_check
      _
    $region3: #{tpu_custom_call.1} parent=1 // pred_check_branch
      %13 = sbr.rel (0) target = $region5
    $region4: #{tpu_custom_call.1} parent=1 // pred_region
      _
    $region5: #{tpu_custom_call.1} parent=1 // pred_fallthru
      _
    // Predicated region
    $region6: #{tpu_custom_call.1} parent=1 // pred_check
      _
    $region7: #{tpu_custom_call.1} parent=1 // pred_check_branch
      %15 = sbr.rel (0) target = $region9
    $region8: #{tpu_custom_call.1} parent=1 // pred_region
      %17 = vsyncadd [#allocation5], 0
      %s18 = sshll.u32 %s1, 4
      %s19 = int_to_ptr.hbm [resolvable:$true] %s18
      %s20 = sshll.u32 [#allocation4], 4
      %s21 = int_to_ptr.vmem [resolvable:$true] %s20
      %26 = dma.hbm_to_vmem [thread:$0]  %s19, 18432, %s21, [#allocation5], 192, 192, 12
    $region9: #{tpu_custom_call.1} parent=1 // pred_fallthru
      _
    // Predicated region
    $region10: #{tpu_custom_call.1} parent=1 // pred_check
      _
    $region11: #{tpu_custom_call.1} parent=1 // pred_check_branch
      %28 = sbr.rel (0) target = $region13
    $region12: #{tpu_custom_call.1} parent=1 // pred_region
      _
    $region13: #{tpu_custom_call.1} parent=1 // pred_fallthru
      _
    // Predicated region
    $region14: #{tpu_custom_call.1} parent=1 // pred_check
      _
    $region15: #{tpu_custom_call.1} parent=1 // pred_check_branch
      %30 = sbr.rel (0) target = $region17
    $region16: #{tpu_custom_call.1} parent=1 // pred_region
      _
    $region17: #{tpu_custom_call.1} parent=1 // pred_fallthru
      _
    // Predicated region
    $region18: #{tpu_custom_call.1} parent=1 // pred_check
      _
    $region19: #{tpu_custom_call.1} parent=1 // pred_check_branch
      %32 = sbr.rel (0) target = $region21
    $region20: #{tpu_custom_call.1} parent=1 // pred_region
      _
    $region21: #{tpu_custom_call.1} parent=1 // pred_fallthru
      _
    // Predicated region
    $region22: #{tpu_custom_call.1} parent=1 // pred_check
      _
    $region23: #{tpu_custom_call.1} parent=1 // pred_check_branch
      %34 = sbr.rel (0) target = $region25
    $region24: #{tpu_custom_call.1} parent=1 // pred_region
      _
    $region25: #{tpu_custom_call.1} parent=1 // pred_fallthru
      _
    // Predicated region
    $region26: #{tpu_custom_call.1} parent=1 // pred_check
      _
    $region27: #{tpu_custom_call.1} parent=1 // pred_check_branch
      %36 = sbr.rel (0) target = $region29
    $region28: #{tpu_custom_call.1} parent=1 // pred_region
      %38 = dma.done [#allocation5], 18432
    $region29: #{tpu_custom_call.1} parent=1 // pred_fallthru
      _
    %v40 = vld [vmem:[%s2] sm:$0x3f]
    %v41 = vld [vmem:[%s2 + $0x8] sm:$0x3f]
    %v42 = vld [vmem:[%s2 + $0x10] sm:$0x3f]
    %v43 = vld [vmem:[%s0] sm:$0xff]
    %v44 = vld [vmem:[%s0 + $0x8] sm:$0xff]
    %v45 = vld [vmem:[%s0 + $0x10] sm:$0xff]
    %v46 = vld [vmem:[%s0 + $0x18] sm:$0xff]
    %v47 = vld [vmem:[%s0 + $0x20] sm:$0xff]
    %v48 = vld [vmem:[%s0 + $0x28] sm:$0xff]
    %v49 = vld [vmem:[%s0 + $0x30] sm:$0xff]
    %v50 = vld [vmem:[%s0 + $0x38] sm:$0xff]
    %vm51 = vcmp.eq.f32.partialorder %v43, -2.0
    %vm52 = vcmp.eq.f32.partialorder %v44, -2.0
    %vm53 = vcmp.eq.f32.partialorder %v45, -2.0
    %vm54 = vcmp.eq.f32.partialorder %v46, -2.0
    %vm55 = vcmp.eq.f32.partialorder %v47, -2.0
    %vm56 = vcmp.eq.f32.partialorder %v48, -2.0
    %vm57 = vcmp.eq.f32.partialorder %v49, -2.0
    %vm58 = vcmp.eq.f32.partialorder %v50, -2.0
    %v59 = vsel %vm51, 0.0, %v43
    %v60 = vsel %vm52, 0.0, %v44
    %v61 = vsel %vm53, 0.0, %v45
    %v62 = vsel %vm54, 0.0, %v46
    %v63 = vsel %vm55, 0.0, %v47
    %v64 = vsel %vm56, 0.0, %v48
    %v65 = vsel %vm57, 0.0, %v49
    %v66 = vsel %vm58, 0.0, %v50
    %v67 = vpack.c.bf16 %v60, %v59
    %v68 = vpack.c.bf16 %v62, %v61
    %v69 = vpack.c.bf16 %v64, %v63
    %v70 = vpack.c.bf16 %v66, %v65
    %v71 = vld [vmem:[#allocation4] sm:$0xff]
    %v72 = vld [vmem:[#allocation4 + $0x8] sm:$0xf]
    %v73 = vld [vmem:[#allocation4 + $0xc] sm:$0xff]
    %v74 = vld [vmem:[#allocation4 + $0x14] sm:$0xf]
    %v75 = vld [vmem:[#allocation4 + $0x18] sm:$0xff]
    %v76 = vld [vmem:[#allocation4 + $0x20] sm:$0xf]
    %v77 = vld [vmem:[#allocation4 + $0x24] sm:$0xff]
    %v78 = vld [vmem:[#allocation4 + $0x2c] sm:$0xf]
    %v79 = vld [vmem:[#allocation4 + $0x30] sm:$0xff]
    %v80 = vld [vmem:[#allocation4 + $0x38] sm:$0xf]
    %v81 = vld [vmem:[#allocation4 + $0x3c] sm:$0xff]
    %v82 = vld [vmem:[#allocation4 + $0x44] sm:$0xf]
    %v83 = vld [vmem:[#allocation4 + $0x48] sm:$0xff]
    %v84 = vld [vmem:[#allocation4 + $0x50] sm:$0xf]
    %v85 = vld [vmem:[#allocation4 + $0x54] sm:$0xff]
    %v86 = vld [vmem:[#allocation4 + $0x5c] sm:$0xf]
    %v87 = vld [vmem:[#allocation4 + $0x60] sm:$0xff]
    %v88 = vld [vmem:[#allocation4 + $0x68] sm:$0xf]
    %v89 = vld [vmem:[#allocation4 + $0x6c] sm:$0xff]
    %v90 = vld [vmem:[#allocation4 + $0x74] sm:$0xf]
    %v91 = vld [vmem:[#allocation4 + $0x78] sm:$0xff]
    %v92 = vld [vmem:[#allocation4 + $0x80] sm:$0xf]
    %v93 = vld [vmem:[#allocation4 + $0x84] sm:$0xff]
    %v94 = vld [vmem:[#allocation4 + $0x8c] sm:$0xf]
    %v95 = vld [vmem:[#allocation4 + $0x90] sm:$0xff]
    %v96 = vld [vmem:[#allocation4 + $0x98] sm:$0xf]
    %v97 = vld [vmem:[#allocation4 + $0x9c] sm:$0xff]
    %v98 = vld [vmem:[#allocation4 + $0xa4] sm:$0xf]
    %v99 = vld [vmem:[#allocation4 + $0xa8] sm:$0xff]
    %v100 = vld [vmem:[#allocation4 + $0xb0] sm:$0xf]
    %v101 = vld [vmem:[#allocation4 + $0xb4] sm:$0xff]
    %v102 = vld [vmem:[#allocation4 + $0xbc] sm:$0xf]
    %v103 = vperm.slane %v40, 0
    %v104 = vperm.slane %v41, 0
    %v105 = vperm.slane %v42, 0
    %v138 = vunpack.c.l.b16 %v71
    %v139 = vunpack.c.h.b16 %v71
    %v140 = vunpack.c.l.b16 %v72
    %v141 = vunpack.c.l.b16 %v73
    %v142 = vunpack.c.h.b16 %v73
    %v143 = vunpack.c.l.b16 %v74
    %v144 = vunpack.c.l.b16 %v75
    %v145 = vunpack.c.h.b16 %v75
    %v146 = vunpack.c.l.b16 %v76
    %v147 = vunpack.c.l.b16 %v77
    %v148 = vunpack.c.h.b16 %v77
    %v149 = vunpack.c.l.b16 %v78
    %v150 = vunpack.c.l.b16 %v79
    %v151 = vunpack.c.h.b16 %v79
    %v152 = vunpack.c.l.b16 %v80
    %v153 = vunpack.c.l.b16 %v81
    %v154 = vunpack.c.h.b16 %v81
    %v155 = vunpack.c.l.b16 %v82
    %v156 = vunpack.c.l.b16 %v83
    %v157 = vunpack.c.h.b16 %v83
    %v158 = vunpack.c.l.b16 %v84
    %v159 = vunpack.c.l.b16 %v85
    %v160 = vunpack.c.h.b16 %v85
    %v161 = vunpack.c.l.b16 %v86
    %v162 = vunpack.c.l.b16 %v87
    %v163 = vunpack.c.h.b16 %v87
    %v164 = vunpack.c.l.b16 %v88
    %v165 = vunpack.c.l.b16 %v89
    %v166 = vunpack.c.h.b16 %v89
    %v167 = vunpack.c.l.b16 %v90
    %v168 = vunpack.c.l.b16 %v91
    %v169 = vunpack.c.h.b16 %v91
    %v170 = vunpack.c.l.b16 %v92
    %v171 = vunpack.c.l.b16 %v93
    %v172 = vunpack.c.h.b16 %v93
    %v173 = vunpack.c.l.b16 %v94
    %v174 = vunpack.c.l.b16 %v95
    %v175 = vunpack.c.h.b16 %v95
    %v176 = vunpack.c.l.b16 %v96
    %v177 = vunpack.c.l.b16 %v97
    %v178 = vunpack.c.h.b16 %v97
    %v179 = vunpack.c.l.b16 %v98
    %v180 = vunpack.c.l.b16 %v99
    %v181 = vunpack.c.h.b16 %v99
    %v182 = vunpack.c.l.b16 %v100
    %v183 = vunpack.c.l.b16 %v101
    %v184 = vunpack.c.h.b16 %v101
    %v185 = vunpack.c.l.b16 %v102
    %v186 = vpack.c.b16 %v141, %v138
    %v187 = vpack.c.b16 %v142, %v139
    %v188 = vpack.c.b16 %v143, %v140
    %v189 = vpack.c.b16 %v147, %v144
    %v190 = vpack.c.b16 %v148, %v145
    %v191 = vpack.c.b16 %v149, %v146
    %v192 = vpack.c.b16 %v153, %v150
    %v193 = vpack.c.b16 %v154, %v151
    %v194 = vpack.c.b16 %v155, %v152
    %v195 = vpack.c.b16 %v159, %v156
    %v196 = vpack.c.b16 %v160, %v157
    %v197 = vpack.c.b16 %v161, %v158
    %v198 = vpack.c.b16 %v165, %v162
    %v199 = vpack.c.b16 %v166, %v163
    %v200 = vpack.c.b16 %v167, %v164
    %v201 = vpack.c.b16 %v171, %v168
    %v202 = vpack.c.b16 %v172, %v169
    %v203 = vpack.c.b16 %v173, %v170
    %v204 = vpack.c.b16 %v177, %v174
    %v205 = vpack.c.b16 %v178, %v175
    %v206 = vpack.c.b16 %v179, %v176
    %v207 = vpack.c.b16 %v183, %v180
    %v208 = vpack.c.b16 %v184, %v181
    %v209 = vpack.c.b16 %v185, %v182
    %234 = vmatpush.bf16.msra.mxu0 %v207
    %235 = vmatpush.bf16.msra.mxu0 %v204
    %236 = vmatpush.bf16.msra.mxu0 %v201
    %237 = vmatpush.bf16.msra.mxu0 %v198
    %238 = vmatpush.bf16.msra.mxu0 %v195
    %239 = vmatpush.bf16.msra.mxu0 %v192
    %240 = vmatpush.bf16.msra.mxu0 %v189
    %241 = vmatpush.bf16.msra.mxu0 %v186
    %242 = vmatmul.bf16.gmra.mxu0 %v67
    %v243 = vpop.f32.mrf.mxu0
    %v244 = vadd.f32 %v103, %v243
    %v245 = vpop.f32.mrf.mxu0
    %v246 = vadd.f32 %v103, %v245
    %247 = vmatmul.bf16.gmra.mxu0 %v68
    %v248 = vpop.f32.mrf.mxu0
    %v249 = vadd.f32 %v103, %v248
    %v250 = vpop.f32.mrf.mxu0
    %v251 = vadd.f32 %v103, %v250
    %252 = vmatmul.bf16.gmra.mxu0 %v69
    %v253 = vpop.f32.mrf.mxu0
    %v254 = vadd.f32 %v103, %v253
    %v255 = vpop.f32.mrf.mxu0
    %v256 = vadd.f32 %v103, %v255
    %257 = vmatmul.bf16.gmra.mxu0 %v70
    %v258 = vpop.f32.mrf.mxu0
    %v259 = vadd.f32 %v103, %v258
    %v260 = vpop.f32.mrf.mxu0
    %v261 = vadd.f32 %v103, %v260
    %262 = vdwg.mxu0
    %263 = vmatpush.bf16.msra.mxu0 %v208
    %264 = vmatpush.bf16.msra.mxu0 %v205
    %265 = vmatpush.bf16.msra.mxu0 %v202
    %266 = vmatpush.bf16.msra.mxu0 %v199
    %267 = vmatpush.bf16.msra.mxu0 %v196
    %268 = vmatpush.bf16.msra.mxu0 %v193
    %269 = vmatpush.bf16.msra.mxu0 %v190
    %270 = vmatpush.bf16.msra.mxu0 %v187
    %271 = vmatmul.bf16.gmra.mxu0 %v67
    %v272 = vpop.f32.mrf.mxu0
    %v273 = vadd.f32 %v104, %v272
    %v274 = vpop.f32.mrf.mxu0
    %v275 = vadd.f32 %v104, %v274
    %276 = vmatmul.bf16.gmra.mxu0 %v68
    %v277 = vpop.f32.mrf.mxu0
    %v278 = vadd.f32 %v104, %v277
    %v279 = vpop.f32.mrf.mxu0
    %v280 = vadd.f32 %v104, %v279
    %281 = vmatmul.bf16.gmra.mxu0 %v69
    %v282 = vpop.f32.mrf.mxu0
    %v283 = vadd.f32 %v104, %v282
    %v284 = vpop.f32.mrf.mxu0
    %v285 = vadd.f32 %v104, %v284
    %286 = vmatmul.bf16.gmra.mxu0 %v70
    %v287 = vpop.f32.mrf.mxu0
    %v288 = vadd.f32 %v104, %v287
    %v289 = vpop.f32.mrf.mxu0
    %v290 = vadd.f32 %v104, %v289
    %291 = vdwg.mxu0
    %292 = vmatpush.bf16.msra.mxu0 %v209
    %293 = vmatpush.bf16.msra.mxu0 %v206
    %294 = vmatpush.bf16.msra.mxu0 %v203
    %295 = vmatpush.bf16.msra.mxu0 %v200
    %296 = vmatpush.bf16.msra.mxu0 %v197
    %297 = vmatpush.bf16.msra.mxu0 %v194
    %298 = vmatpush.bf16.msra.mxu0 %v191
    %299 = vmatpush.bf16.msra.mxu0 %v188
    %300 = vmatmul.bf16.gmra.mxu0 %v67
    %v301 = vpop.f32.mrf.mxu0
    %v302 = vadd.f32 %v105, %v301
    %v303 = vpop.f32.mrf.mxu0
    %v304 = vadd.f32 %v105, %v303
    %305 = vmatmul.bf16.gmra.mxu0 %v68
    %v306 = vpop.f32.mrf.mxu0
    %v307 = vadd.f32 %v105, %v306
    %v308 = vpop.f32.mrf.mxu0
    %v309 = vadd.f32 %v105, %v308
    %310 = vmatmul.bf16.gmra.mxu0 %v69
    %v311 = vpop.f32.mrf.mxu0
    %v312 = vadd.f32 %v105, %v311
    %v313 = vpop.f32.mrf.mxu0
    %v314 = vadd.f32 %v105, %v313
    %315 = vmatmul.bf16.gmra.mxu0 %v70
    %v316 = vpop.f32.mrf.mxu0
    %v317 = vadd.f32 %v105, %v316
    %v318 = vpop.f32.mrf.mxu0
    %v319 = vadd.f32 %v105, %v318
    %320 = vdwg.mxu0
    %s321 = scalar_lea.vmem [#allocation4], 576
    %v322 = vld [vmem:[%s321] sm:$0xff]
    %v323 = vld [vmem:[%s321 + $0x8] sm:$0xf]
    %v324 = vld [vmem:[%s321 + $0xc] sm:$0xff]
    %v325 = vld [vmem:[%s321 + $0x14] sm:$0xf]
    %v326 = vld [vmem:[%s321 + $0x18] sm:$0xff]
    %v327 = vld [vmem:[%s321 + $0x20] sm:$0xf]
    %v328 = vld [vmem:[%s321 + $0x24] sm:$0xff]
    %v329 = vld [vmem:[%s321 + $0x2c] sm:$0xf]
    %v330 = vld [vmem:[%s321 + $0x30] sm:$0xff]
    %v331 = vld [vmem:[%s321 + $0x38] sm:$0xf]
    %v332 = vld [vmem:[%s321 + $0x3c] sm:$0xff]
    %v333 = vld [vmem:[%s321 + $0x44] sm:$0xf]
    %v334 = vld [vmem:[%s321 + $0x48] sm:$0xff]
    %v335 = vld [vmem:[%s321 + $0x50] sm:$0xf]
    %v336 = vld [vmem:[%s321 + $0x54] sm:$0xff]
    %v337 = vld [vmem:[%s321 + $0x5c] sm:$0xf]
    %v338 = vld [vmem:[%s321 + $0x60] sm:$0xff]
    %v339 = vld [vmem:[%s321 + $0x68] sm:$0xf]
    %v340 = vld [vmem:[%s321 + $0x6c] sm:$0xff]
    %v341 = vld [vmem:[%s321 + $0x74] sm:$0xf]
    %v342 = vld [vmem:[%s321 + $0x78] sm:$0xff]
    %v343 = vld [vmem:[%s321 + $0x80] sm:$0xf]
    %v344 = vld [vmem:[%s321 + $0x84] sm:$0xff]
    %v345 = vld [vmem:[%s321 + $0x8c] sm:$0xf]
    %v346 = vld [vmem:[%s321 + $0x90] sm:$0xff]
    %v347 = vld [vmem:[%s321 + $0x98] sm:$0xf]
    %v348 = vld [vmem:[%s321 + $0x9c] sm:$0xff]
    %v349 = vld [vmem:[%s321 + $0xa4] sm:$0xf]
    %v350 = vld [vmem:[%s321 + $0xa8] sm:$0xff]
    %v351 = vld [vmem:[%s321 + $0xb0] sm:$0xf]
    %v352 = vld [vmem:[%s321 + $0xb4] sm:$0xff]
    %v353 = vld [vmem:[%s321 + $0xbc] sm:$0xf]
    %v354 = vlaneseq
    %v355 = vand.u32 %v354, 127
    %v356 = vadd.s32 %v355, 128
    %v357 = vadd.s32 %v355, 256
    %vm358 = vcmp.lt.s32.totalorder %v355, 0
    %v359 = vsub.s32 0, %v355
    %v360 = vsel %vm358, %v359, %v355
    %v361 = vshrl.u32 %v360, 7
    %v362 = vand.u32 %v360, 127
    %v363 = vsub.s32 0, %v362
    %v364 = vsel %vm358, %v363, %v362
    %vm365 = vcmp.lt.s32.totalorder %v356, 0
    %v366 = vsub.s32 0, %v356
    %v367 = vsel %vm365, %v366, %v356
    %v368 = vshrl.u32 %v367, 7
    %v369 = vand.u32 %v367, 127
    %v370 = vsub.s32 0, %v369
    %v371 = vsel %vm365, %v370, %v369
    %vm372 = vcmp.lt.s32.totalorder %v357, 0
    %v373 = vsub.s32 0, %v357
    %v374 = vsel %vm372, %v373, %v357
    %v375 = vshrl.u32 %v374, 7
    %v376 = vand.u32 %v374, 127
    %v377 = vsub.s32 0, %v376
    %v378 = vsel %vm372, %v377, %v376
    %vm379 = vcmp.ne.s32.totalorder %v364, 0
    %vm380 = vcmp.ne.s32.totalorder %v371, 0
    %vm381 = vcmp.ne.s32.totalorder %v378, 0
    %vm382 = vcmp.lt.s32.totalorder %v364, 0
    %vm383 = vcmp.lt.s32.totalorder %v371, 0
    %vm384 = vcmp.lt.s32.totalorder %v378, 0
    %vm385 = vmand %vm382, %vm379
    %vm386 = vmand %vm383, %vm380
    %vm387 = vmand %vm384, %vm381
    %v388 = vadd.s32 %v364, 128
    %v389 = vadd.s32 %v371, 128
    %v390 = vadd.s32 %v378, 128
    %v391 = vsel %vm385, %v388, %v364
    %v392 = vsel %vm386, %v389, %v371
    %v393 = vsel %vm387, %v390, %v378
    %vm394 = vcmp.lt.s32.totalorder %v391, 64
    %vm395 = vcmp.lt.s32.totalorder %v392, 64
    %vm396 = vcmp.lt.s32.totalorder %v393, 64
    %v397 = vsel %vm394, 1, 0
    %v398 = vsel %vm395, 1, 0
    %v399 = vsel %vm396, 1, 0
    %vm400 = vcmp.eq.s32.totalorder %v397, 1
    %vm401 = vcmp.eq.s32.totalorder %v398, 1
    %vm402 = vcmp.eq.s32.totalorder %v399, 1
    %v403 = vsel %vm400, %v244, %v261
    %v404 = vsel %vm401, %v273, %v290
    %v405 = vsel %vm402, %v302, %v319
    %v406 = vperm.slane %v40, 3
    %v407 = vperm.slane %v41, 3
    %v408 = vperm.slane %v42, 3
    %v441 = vunpack.c.l.b16 %v322
    %v442 = vunpack.c.h.b16 %v322
    %v443 = vunpack.c.l.b16 %v323
    %v444 = vunpack.c.l.b16 %v324
    %v445 = vunpack.c.h.b16 %v324
    %v446 = vunpack.c.l.b16 %v325
    %v447 = vunpack.c.l.b16 %v326
    %v448 = vunpack.c.h.b16 %v326
    %v449 = vunpack.c.l.b16 %v327
    %v450 = vunpack.c.l.b16 %v328
    %v451 = vunpack.c.h.b16 %v328
    %v452 = vunpack.c.l.b16 %v329
    %v453 = vunpack.c.l.b16 %v330
    %v454 = vunpack.c.h.b16 %v330
    %v455 = vunpack.c.l.b16 %v331
    %v456 = vunpack.c.l.b16 %v332
    %v457 = vunpack.c.h.b16 %v332
    %v458 = vunpack.c.l.b16 %v333
    %v459 = vunpack.c.l.b16 %v334
    %v460 = vunpack.c.h.b16 %v334
    %v461 = vunpack.c.l.b16 %v335
    %v462 = vunpack.c.l.b16 %v336
    %v463 = vunpack.c.h.b16 %v336
    %v464 = vunpack.c.l.b16 %v337
    %v465 = vunpack.c.l.b16 %v338
    %v466 = vunpack.c.h.b16 %v338
    %v467 = vunpack.c.l.b16 %v339
    %v468 = vunpack.c.l.b16 %v340
    %v469 = vunpack.c.h.b16 %v340
    %v470 = vunpack.c.l.b16 %v341
    %v471 = vunpack.c.l.b16 %v342
    %v472 = vunpack.c.h.b16 %v342
    %v473 = vunpack.c.l.b16 %v343
    %v474 = vunpack.c.l.b16 %v344
    %v475 = vunpack.c.h.b16 %v344
    %v476 = vunpack.c.l.b16 %v345
    %v477 = vunpack.c.l.b16 %v346
    %v478 = vunpack.c.h.b16 %v346
    %v479 = vunpack.c.l.b16 %v347
    %v480 = vunpack.c.l.b16 %v348
    %v481 = vunpack.c.h.b16 %v348
    %v482 = vunpack.c.l.b16 %v349
    %v483 = vunpack.c.l.b16 %v350
    %v484 = vunpack.c.h.b16 %v350
    %v485 = vunpack.c.l.b16 %v351
    %v486 = vunpack.c.l.b16 %v352
    %v487 = vunpack.c.h.b16 %v352
    %v488 = vunpack.c.l.b16 %v353
    %v489 = vpack.c.b16 %v444, %v441
    %v490 = vpack.c.b16 %v445, %v442
    %v491 = vpack.c.b16 %v446, %v443
    %v492 = vpack.c.b16 %v450, %v447
    %v493 = vpack.c.b16 %v451, %v448
    %v494 = vpack.c.b16 %v452, %v449
    %v495 = vpack.c.b16 %v456, %v453
    %v496 = vpack.c.b16 %v457, %v454
    %v497 = vpack.c.b16 %v458, %v455
    %v498 = vpack.c.b16 %v462, %v459
    %v499 = vpack.c.b16 %v463, %v460
    %v500 = vpack.c.b16 %v464, %v461
    %v501 = vpack.c.b16 %v468, %v465
    %v502 = vpack.c.b16 %v469, %v466
    %v503 = vpack.c.b16 %v470, %v467
    %v504 = vpack.c.b16 %v474, %v471
    %v505 = vpack.c.b16 %v475, %v472
    %v506 = vpack.c.b16 %v476, %v473
    %v507 = vpack.c.b16 %v480, %v477
    %v508 = vpack.c.b16 %v481, %v478
    %v509 = vpack.c.b16 %v482, %v479
    %v510 = vpack.c.b16 %v486, %v483
    %v511 = vpack.c.b16 %v487, %v484
    %v512 = vpack.c.b16 %v488, %v485
    %537 = vmatpush.bf16.msra.mxu0 %v510
    %538 = vmatpush.bf16.msra.mxu0 %v507
    %539 = vmatpush.bf16.msra.mxu0 %v504
    %540 = vmatpush.bf16.msra.mxu0 %v501
    %541 = vmatpush.bf16.msra.mxu0 %v498
    %542 = vmatpush.bf16.msra.mxu0 %v495
    %543 = vmatpush.bf16.msra.mxu0 %v492
    %544 = vmatpush.bf16.msra.mxu0 %v489
    %545 = vmatmul.bf16.gmra.mxu0 0
    %v546 = vpop.f32.mrf.mxu0
    %v547 = vadd.f32 %v406, %v546
    %v548 = vpop.f32.mrf.mxu0
    %549 = vdwg.mxu0
    %550 = vmatpush.bf16.msra.mxu0 %v511
    %551 = vmatpush.bf16.msra.mxu0 %v508
    %552 = vmatpush.bf16.msra.mxu0 %v505
    %553 = vmatpush.bf16.msra.mxu0 %v502
    %554 = vmatpush.bf16.msra.mxu0 %v499
    %555 = vmatpush.bf16.msra.mxu0 %v496
    %556 = vmatpush.bf16.msra.mxu0 %v493
    %557 = vmatpush.bf16.msra.mxu0 %v490
    %558 = vmatmul.bf16.gmra.mxu0 0
    %v559 = vpop.f32.mrf.mxu0
    %v560 = vadd.f32 %v407, %v559
    %v561 = vpop.f32.mrf.mxu0
    %562 = vdwg.mxu0
    %563 = vmatpush.bf16.msra.mxu0 %v512
    %564 = vmatpush.bf16.msra.mxu0 %v509
    %565 = vmatpush.bf16.msra.mxu0 %v506
    %566 = vmatpush.bf16.msra.mxu0 %v503
    %567 = vmatpush.bf16.msra.mxu0 %v500
    %568 = vmatpush.bf16.msra.mxu0 %v497
    %569 = vmatpush.bf16.msra.mxu0 %v494
    %570 = vmatpush.bf16.msra.mxu0 %v491
    %571 = vmatmul.bf16.gmra.mxu0 0
    %v572 = vpop.f32.mrf.mxu0
    %v573 = vadd.f32 %v408, %v572
    %v574 = vpop.f32.mrf.mxu0
    %575 = vdwg.mxu0
    %v576 = vadd.f32 %v403, %v547
    %v577 = vxor.u32 %v576, 2147483648
    %v578 = vmul.f32 %v577, 1.442695
    %v579 = vpow.pop %v578
    %v580 = vadd.f32 %v579, 1.0
    %v581 = vrcp.pop %v580
    %v582 = vmul.f32 %v580, %v581
    %v583 = vsub.f32 1.0, %v582
    %v584 = vmul.f32 %v581, %v583
    %v585 = vadd.f32 %v581, %v584
    %vm586 = vweird.f32 %v580
    %vm587 = vweird.f32 %v581
    %vm588 = vmor %vm586, %vm587
    %v589 = vsel %vm588, %v581, %v585
    %v590 = vand.u32 2147483647, %v580
    %vm591 = vcmp.eq.f32.partialorder %v590, 8.507059e+37
    %v592 = vand.u32 %v580, 2147483648
    %v593 = vor.u32 1.1754944e-38, %v592
    %v594 = vsel %vm591, %v593, %v589
    %v595 = vmul.f32 1.0, %v594
    %v596 = vadd.f32 %v404, %v560
    %v597 = vxor.u32 %v596, 2147483648
    %v598 = vmul.f32 %v597, 1.442695
    %v599 = vpow.pop %v598
    %v600 = vadd.f32 %v599, 1.0
    %v601 = vrcp.pop %v600
    %v602 = vmul.f32 %v600, %v601
    %v603 = vsub.f32 1.0, %v602
    %v604 = vmul.f32 %v601, %v603
    %v605 = vadd.f32 %v601, %v604
    %vm606 = vweird.f32 %v600
    %vm607 = vweird.f32 %v601
    %vm608 = vmor %vm606, %vm607
    %v609 = vsel %vm608, %v601, %v605
    %v610 = vand.u32 2147483647, %v600
    %vm611 = vcmp.eq.f32.partialorder %v610, 8.507059e+37
    %v612 = vand.u32 %v600, 2147483648
    %v613 = vor.u32 1.1754944e-38, %v612
    %v614 = vsel %vm611, %v613, %v609
    %v615 = vmul.f32 1.0, %v614
    %v616 = vmul.f32 %v595, %v573
    %v617 = vadd.f32 %v405, %v616
    %v618 = vtanh.pop %v617
    %v619 = vsub.f32 1.0, %v615
    %v620 = vmul.f32 %v619, %v618
    %v621 = vmul.f32 %v615, 0.0
    %v622 = vadd.f32 %v620, %v621
    %vm623 = vcmask 523264
    %624 = vst.msk [vmem:[#allocation2] sm:$0xff] %vm623, %v622
    %vm625 = vcmask 1048064
    %626 = vst.msk [vmem:[#allocation2 + $0x38] sm:$0xff] %vm625, %v622
    %v627 = vsel %vm400, %v246, %v259
    %v628 = vsel %vm401, %v275, %v288
    %v629 = vsel %vm402, %v304, %v317
    %v630 = vpack.c.bf16 %v622, %v622
    %631 = vmatpush.bf16.msra.mxu0 %v510
    %632 = vmatpush.bf16.msra.mxu0 %v507
    %633 = vmatpush.bf16.msra.mxu0 %v504
    %634 = vmatpush.bf16.msra.mxu0 %v501
    %635 = vmatpush.bf16.msra.mxu0 %v498
    %636 = vmatpush.bf16.msra.mxu0 %v495
    %637 = vmatpush.bf16.msra.mxu0 %v492
    %638 = vmatpush.bf16.msra.mxu0 %v489
    %639 = vmatmul.bf16.gmra.mxu0 %v630
    %v640 = vpop.f32.mrf.mxu0
    %v641 = vadd.f32 %v406, %v640
    %v642 = vpop.f32.mrf.mxu0
    %643 = vdwg.mxu0
    %644 = vmatpush.bf16.msra.mxu0 %v511
    %645 = vmatpush.bf16.msra.mxu0 %v508
    %646 = vmatpush.bf16.msra.mxu0 %v505
    %647 = vmatpush.bf16.msra.mxu0 %v502
    %648 = vmatpush.bf16.msra.mxu0 %v499
    %649 = vmatpush.bf16.msra.mxu0 %v496
    %650 = vmatpush.bf16.msra.mxu0 %v493
    %651 = vmatpush.bf16.msra.mxu0 %v490
    %652 = vmatmul.bf16.gmra.mxu0 %v630
    %v653 = vpop.f32.mrf.mxu0
    %v654 = vadd.f32 %v407, %v653
    %v655 = vpop.f32.mrf.mxu0
    %656 = vdwg.mxu0
    %657 = vmatpush.bf16.msra.mxu0 %v512
    %658 = vmatpush.bf16.msra.mxu0 %v509
    %659 = vmatpush.bf16.msra.mxu0 %v506
    %660 = vmatpush.bf16.msra.mxu0 %v503
    %661 = vmatpush.bf16.msra.mxu0 %v500
    %662 = vmatpush.bf16.msra.mxu0 %v497
    %663 = vmatpush.bf16.msra.mxu0 %v494
    %664 = vmatpush.bf16.msra.mxu0 %v491
    %665 = vmatmul.bf16.gmra.mxu0 %v630
    %v666 = vpop.f32.mrf.mxu0
    %v667 = vadd.f32 %v408, %v666
    %v668 = vpop.f32.mrf.mxu0
    %669 = vdwg.mxu0
    %v670 = vadd.f32 %v627, %v641
    %v671 = vxor.u32 %v670, 2147483648
    %v672 = vmul.f32 %v671, 1.442695
    %v673 = vpow.pop %v672
    %v674 = vadd.f32 %v673, 1.0
    %v675 = vrcp.pop %v674
    %v676 = vmul.f32 %v674, %v675
    %v677 = vsub.f32 1.0, %v676
    %v678 = vmul.f32 %v675, %v677
    %v679 = vadd.f32 %v675, %v678
    %vm680 = vweird.f32 %v674
    %vm681 = vweird.f32 %v675
    %vm682 = vmor %vm680, %vm681
    %v683 = vsel %vm682, %v675, %v679
    %v684 = vand.u32 2147483647, %v674
    %vm685 = vcmp.eq.f32.partialorder %v684, 8.507059e+37
    %v686 = vand.u32 %v674, 2147483648
    %v687 = vor.u32 1.1754944e-38, %v686
    %v688 = vsel %vm685, %v687, %v683
    %v689 = vmul.f32 1.0, %v688
    %v690 = vadd.f32 %v628, %v654
    %v691 = vxor.u32 %v690, 2147483648
    %v692 = vmul.f32 %v691, 1.442695
    %v693 = vpow.pop %v692
    %v694 = vadd.f32 %v693, 1.0
    %v695 = vrcp.pop %v694
    %v696 = vmul.f32 %v694, %v695
    %v697 = vsub.f32 1.0, %v696
    %v698 = vmul.f32 %v695, %v697
    %v699 = vadd.f32 %v695, %v698
    %vm700 = vweird.f32 %v694
    %vm701 = vweird.f32 %v695
    %vm702 = vmor %vm700, %vm701
    %v703 = vsel %vm702, %v695, %v699
    %v704 = vand.u32 2147483647, %v694
    %vm705 = vcmp.eq.f32.partialorder %v704, 8.507059e+37
    %v706 = vand.u32 %v694, 2147483648
    %v707 = vor.u32 1.1754944e-38, %v706
    %v708 = vsel %vm705, %v707, %v703
    %v709 = vmul.f32 1.0, %v708
    %v710 = vmul.f32 %v689, %v667
    %v711 = vadd.f32 %v629, %v710
    %v712 = vtanh.pop %v711
    %v713 = vsub.f32 1.0, %v709
    %v714 = vmul.f32 %v713, %v712
    %v715 = vmul.f32 %v709, %v622
    %v716 = vadd.f32 %v714, %v715
    %717 = vst.msk [vmem:[#allocation2 + $0x8] sm:$0xff] %vm623, %v716
    %718 = vst.msk [vmem:[#allocation2 + $0x30] sm:$0xff] %vm625, %v716
    %v719 = vsel %vm400, %v249, %v256
    %v720 = vsel %vm401, %v278, %v285
    %v721 = vsel %vm402, %v307, %v314
    %v722 = vpack.c.bf16 %v716, %v716
    %723 = vmatpush.bf16.msra.mxu0 %v510
    %724 = vmatpush.bf16.msra.mxu0 %v507
    %725 = vmatpush.bf16.msra.mxu0 %v504
    %726 = vmatpush.bf16.msra.mxu0 %v501
    %727 = vmatpush.bf16.msra.mxu0 %v498
    %728 = vmatpush.bf16.msra.mxu0 %v495
    %729 = vmatpush.bf16.msra.mxu0 %v492
    %730 = vmatpush.bf16.msra.mxu0 %v489
    %731 = vmatmul.bf16.gmra.mxu0 %v722
    %v732 = vpop.f32.mrf.mxu0
    %v733 = vadd.f32 %v406, %v732
    %v734 = vpop.f32.mrf.mxu0
    %735 = vdwg.mxu0
    %736 = vmatpush.bf16.msra.mxu0 %v511
    %737 = vmatpush.bf16.msra.mxu0 %v508
    %738 = vmatpush.bf16.msra.mxu0 %v505
    %739 = vmatpush.bf16.msra.mxu0 %v502
    %740 = vmatpush.bf16.msra.mxu0 %v499
    %741 = vmatpush.bf16.msra.mxu0 %v496
    %742 = vmatpush.bf16.msra.mxu0 %v493
    %743 = vmatpush.bf16.msra.mxu0 %v490
    %744 = vmatmul.bf16.gmra.mxu0 %v722
    %v745 = vpop.f32.mrf.mxu0
    %v746 = vadd.f32 %v407, %v745
    %v747 = vpop.f32.mrf.mxu0
    %748 = vdwg.mxu0
    %749 = vmatpush.bf16.msra.mxu0 %v512
    %750 = vmatpush.bf16.msra.mxu0 %v509
    %751 = vmatpush.bf16.msra.mxu0 %v506
    %752 = vmatpush.bf16.msra.mxu0 %v503
    %753 = vmatpush.bf16.msra.mxu0 %v500
    %754 = vmatpush.bf16.msra.mxu0 %v497
    %755 = vmatpush.bf16.msra.mxu0 %v494
    %756 = vmatpush.bf16.msra.mxu0 %v491
    %757 = vmatmul.bf16.gmra.mxu0 %v722
    %v758 = vpop.f32.mrf.mxu0
    %v759 = vadd.f32 %v408, %v758
    %v760 = vpop.f32.mrf.mxu0
    %761 = vdwg.mxu0
    %v762 = vadd.f32 %v719, %v733
    %v763 = vxor.u32 %v762, 2147483648
    %v764 = vmul.f32 %v763, 1.442695
    %v765 = vpow.pop %v764
    %v766 = vadd.f32 %v765, 1.0
    %v767 = vrcp.pop %v766
    %v768 = vmul.f32 %v766, %v767
    %v769 = vsub.f32 1.0, %v768
    %v770 = vmul.f32 %v767, %v769
    %v771 = vadd.f32 %v767, %v770
    %vm772 = vweird.f32 %v766
    %vm773 = vweird.f32 %v767
    %vm774 = vmor %vm772, %vm773
    %v775 = vsel %vm774, %v767, %v771
    %v776 = vand.u32 2147483647, %v766
    %vm777 = vcmp.eq.f32.partialorder %v776, 8.507059e+37
    %v778 = vand.u32 %v766, 2147483648
    %v779 = vor.u32 1.1754944e-38, %v778
    %v780 = vsel %vm777, %v779, %v775
    %v781 = vmul.f32 1.0, %v780
    %v782 = vadd.f32 %v720, %v746
    %v783 = vxor.u32 %v782, 2147483648
    %v784 = vmul.f32 %v783, 1.442695
    %v785 = vpow.pop %v784
    %v786 = vadd.f32 %v785, 1.0
    %v787 = vrcp.pop %v786
    %v788 = vmul.f32 %v786, %v787
    %v789 = vsub.f32 1.0, %v788
    %v790 = vmul.f32 %v787, %v789
    %v791 = vadd.f32 %v787, %v790
    %vm792 = vweird.f32 %v786
    %vm793 = vweird.f32 %v787
    %vm794 = vmor %vm792, %vm793
    %v795 = vsel %vm794, %v787, %v791
    %v796 = vand.u32 2147483647, %v786
    %vm797 = vcmp.eq.f32.partialorder %v796, 8.507059e+37
    %v798 = vand.u32 %v786, 2147483648
    %v799 = vor.u32 1.1754944e-38, %v798
    %v800 = vsel %vm797, %v799, %v795
    %v801 = vmul.f32 1.0, %v800
    %v802 = vmul.f32 %v781, %v759
    %v803 = vadd.f32 %v721, %v802
    %v804 = vtanh.pop %v803
    %v805 = vsub.f32 1.0, %v801
    %v806 = vmul.f32 %v805, %v804
    %v807 = vmul.f32 %v801, %v716
    %v808 = vadd.f32 %v806, %v807
    %809 = vst.msk [vmem:[#allocation2 + $0x10] sm:$0xff] %vm623, %v808
    %810 = vst.msk [vmem:[#allocation2 + $0x28] sm:$0xff] %vm625, %v808
    %v811 = vsel %vm400, %v251, %v254
    %v812 = vsel %vm401, %v280, %v283
    %v813 = vsel %vm402, %v309, %v312
    %v814 = vpack.c.bf16 %v808, %v808
    %815 = vmatpush.bf16.msra.mxu0 %v510
    %816 = vmatpush.bf16.msra.mxu0 %v507
    %817 = vmatpush.bf16.msra.mxu0 %v504
    %818 = vmatpush.bf16.msra.mxu0 %v501
    %819 = vmatpush.bf16.msra.mxu0 %v498
    %820 = vmatpush.bf16.msra.mxu0 %v495
    %821 = vmatpush.bf16.msra.mxu0 %v492
    %822 = vmatpush.bf16.msra.mxu0 %v489
    %823 = vmatmul.bf16.gmra.mxu0 %v814
    %v824 = vpop.f32.mrf.mxu0
    %v825 = vadd.f32 %v406, %v824
    %v826 = vpop.f32.mrf.mxu0
    %827 = vdwg.mxu0
    %828 = vmatpush.bf16.msra.mxu0 %v511
    %829 = vmatpush.bf16.msra.mxu0 %v508
    %830 = vmatpush.bf16.msra.mxu0 %v505
    %831 = vmatpush.bf16.msra.mxu0 %v502
    %832 = vmatpush.bf16.msra.mxu0 %v499
    %833 = vmatpush.bf16.msra.mxu0 %v496
    %834 = vmatpush.bf16.msra.mxu0 %v493
    %835 = vmatpush.bf16.msra.mxu0 %v490
    %836 = vmatmul.bf16.gmra.mxu0 %v814
    %v837 = vpop.f32.mrf.mxu0
    %v838 = vadd.f32 %v407, %v837
    %v839 = vpop.f32.mrf.mxu0
    %840 = vdwg.mxu0
    %841 = vmatpush.bf16.msra.mxu0 %v512
    %842 = vmatpush.bf16.msra.mxu0 %v509
    %843 = vmatpush.bf16.msra.mxu0 %v506
    %844 = vmatpush.bf16.msra.mxu0 %v503
    %845 = vmatpush.bf16.msra.mxu0 %v500
    %846 = vmatpush.bf16.msra.mxu0 %v497
    %847 = vmatpush.bf16.msra.mxu0 %v494
    %848 = vmatpush.bf16.msra.mxu0 %v491
    %849 = vmatmul.bf16.gmra.mxu0 %v814
    %v850 = vpop.f32.mrf.mxu0
    %v851 = vadd.f32 %v408, %v850
    %v852 = vpop.f32.mrf.mxu0
    %853 = vdwg.mxu0
    %v854 = vadd.f32 %v811, %v825
    %v855 = vxor.u32 %v854, 2147483648
    %v856 = vmul.f32 %v855, 1.442695
    %v857 = vpow.pop %v856
    %v858 = vadd.f32 %v857, 1.0
    %v859 = vrcp.pop %v858
    %v860 = vmul.f32 %v858, %v859
    %v861 = vsub.f32 1.0, %v860
    %v862 = vmul.f32 %v859, %v861
    %v863 = vadd.f32 %v859, %v862
    %vm864 = vweird.f32 %v858
    %vm865 = vweird.f32 %v859
    %vm866 = vmor %vm864, %vm865
    %v867 = vsel %vm866, %v859, %v863
    %v868 = vand.u32 2147483647, %v858
    %vm869 = vcmp.eq.f32.partialorder %v868, 8.507059e+37
    %v870 = vand.u32 %v858, 2147483648
    %v871 = vor.u32 1.1754944e-38, %v870
    %v872 = vsel %vm869, %v871, %v867
    %v873 = vmul.f32 1.0, %v872
    %v874 = vadd.f32 %v812, %v838
    %v875 = vxor.u32 %v874, 2147483648
    %v876 = vmul.f32 %v875, 1.442695
    %v877 = vpow.pop %v876
    %v878 = vadd.f32 %v877, 1.0
    %v879 = vrcp.pop %v878
    %v880 = vmul.f32 %v878, %v879
    %v881 = vsub.f32 1.0, %v880
    %v882 = vmul.f32 %v879, %v881
    %v883 = vadd.f32 %v879, %v882
    %vm884 = vweird.f32 %v878
    %vm885 = vweird.f32 %v879
    %vm886 = vmor %vm884, %vm885
    %v887 = vsel %vm886, %v879, %v883
    %v888 = vand.u32 2147483647, %v878
    %vm889 = vcmp.eq.f32.partialorder %v888, 8.507059e+37
    %v890 = vand.u32 %v878, 2147483648
    %v891 = vor.u32 1.1754944e-38, %v890
    %v892 = vsel %vm889, %v891, %v887
    %v893 = vmul.f32 1.0, %v892
    %v894 = vmul.f32 %v873, %v851
    %v895 = vadd.f32 %v813, %v894
    %v896 = vtanh.pop %v895
    %v897 = vsub.f32 1.0, %v893
    %v898 = vmul.f32 %v897, %v896
    %v899 = vmul.f32 %v893, %v808
    %v900 = vadd.f32 %v898, %v899
    %901 = vst.msk [vmem:[#allocation2 + $0x18] sm:$0xff] %vm623, %v900
    %902 = vst.msk [vmem:[#allocation2 + $0x20] sm:$0xff] %vm625, %v900
    %v903 = vsel %vm400, %v254, %v251
    %v904 = vsel %vm401, %v283, %v280
    %v905 = vsel %vm402, %v312, %v309
    %v906 = vpack.c.bf16 %v900, %v900
    %907 = vmatpush.bf16.msra.mxu0 %v510
    %908 = vmatpush.bf16.msra.mxu0 %v507
    %909 = vmatpush.bf16.msra.mxu0 %v504
    %910 = vmatpush.bf16.msra.mxu0 %v501
    %911 = vmatpush.bf16.msra.mxu0 %v498
    %912 = vmatpush.bf16.msra.mxu0 %v495
    %913 = vmatpush.bf16.msra.mxu0 %v492
    %914 = vmatpush.bf16.msra.mxu0 %v489
    %915 = vmatmul.bf16.gmra.mxu0 %v906
    %v916 = vpop.f32.mrf.mxu0
    %v917 = vadd.f32 %v406, %v916
    %v918 = vpop.f32.mrf.mxu0
    %919 = vdwg.mxu0
    %920 = vmatpush.bf16.msra.mxu0 %v511
    %921 = vmatpush.bf16.msra.mxu0 %v508
    %922 = vmatpush.bf16.msra.mxu0 %v505
    %923 = vmatpush.bf16.msra.mxu0 %v502
    %924 = vmatpush.bf16.msra.mxu0 %v499
    %925 = vmatpush.bf16.msra.mxu0 %v496
    %926 = vmatpush.bf16.msra.mxu0 %v493
    %927 = vmatpush.bf16.msra.mxu0 %v490
    %928 = vmatmul.bf16.gmra.mxu0 %v906
    %v929 = vpop.f32.mrf.mxu0
    %v930 = vadd.f32 %v407, %v929
    %v931 = vpop.f32.mrf.mxu0
    %932 = vdwg.mxu0
    %933 = vmatpush.bf16.msra.mxu0 %v512
    %934 = vmatpush.bf16.msra.mxu0 %v509
    %935 = vmatpush.bf16.msra.mxu0 %v506
    %936 = vmatpush.bf16.msra.mxu0 %v503
    %937 = vmatpush.bf16.msra.mxu0 %v500
    %938 = vmatpush.bf16.msra.mxu0 %v497
    %939 = vmatpush.bf16.msra.mxu0 %v494
    %940 = vmatpush.bf16.msra.mxu0 %v491
    %941 = vmatmul.bf16.gmra.mxu0 %v906
    %v942 = vpop.f32.mrf.mxu0
    %v943 = vadd.f32 %v408, %v942
    %v944 = vpop.f32.mrf.mxu0
    %945 = vdwg.mxu0
    %v946 = vadd.f32 %v903, %v917
    %v947 = vxor.u32 %v946, 2147483648
    %v948 = vmul.f32 %v947, 1.442695
    %v949 = vpow.pop %v948
    %v950 = vadd.f32 %v949, 1.0
    %v951 = vrcp.pop %v950
    %v952 = vmul.f32 %v950, %v951
    %v953 = vsub.f32 1.0, %v952
    %v954 = vmul.f32 %v951, %v953
    %v955 = vadd.f32 %v951, %v954
    %vm956 = vweird.f32 %v950
    %vm957 = vweird.f32 %v951
    %vm958 = vmor %vm956, %vm957
    %v959 = vsel %vm958, %v951, %v955
    %v960 = vand.u32 2147483647, %v950
    %vm961 = vcmp.eq.f32.partialorder %v960, 8.507059e+37
    %v962 = vand.u32 %v950, 2147483648
    %v963 = vor.u32 1.1754944e-38, %v962
    %v964 = vsel %vm961, %v963, %v959
    %v965 = vmul.f32 1.0, %v964
    %v966 = vadd.f32 %v904, %v930
    %v967 = vxor.u32 %v966, 2147483648
    %v968 = vmul.f32 %v967, 1.442695
    %v969 = vpow.pop %v968
    %v970 = vadd.f32 %v969, 1.0
    %v971 = vrcp.pop %v970
    %v972 = vmul.f32 %v970, %v971
    %v973 = vsub.f32 1.0, %v972
    %v974 = vmul.f32 %v971, %v973
    %v975 = vadd.f32 %v971, %v974
    %vm976 = vweird.f32 %v970
    %vm977 = vweird.f32 %v971
    %vm978 = vmor %vm976, %vm977
    %v979 = vsel %vm978, %v971, %v975
    %v980 = vand.u32 2147483647, %v970
    %vm981 = vcmp.eq.f32.partialorder %v980, 8.507059e+37
    %v982 = vand.u32 %v970, 2147483648
    %v983 = vor.u32 1.1754944e-38, %v982
    %v984 = vsel %vm981, %v983, %v979
    %v985 = vmul.f32 1.0, %v984
    %v986 = vmul.f32 %v965, %v943
    %v987 = vadd.f32 %v905, %v986
    %v988 = vtanh.pop %v987
    %v989 = vsub.f32 1.0, %v985
    %v990 = vmul.f32 %v989, %v988
    %v991 = vmul.f32 %v985, %v900
    %v992 = vadd.f32 %v990, %v991
    %993 = vst.msk [vmem:[#allocation2 + $0x20] sm:$0xff] %vm623, %v992
    %994 = vst.msk [vmem:[#allocation2 + $0x18] sm:$0xff] %vm625, %v992
    %v995 = vsel %vm400, %v256, %v249
    %v996 = vsel %vm401, %v285, %v278
    %v997 = vsel %vm402, %v314, %v307
    %v998 = vpack.c.bf16 %v992, %v992
    %999 = vmatpush.bf16.msra.mxu0 %v510
    %1000 = vmatpush.bf16.msra.mxu0 %v507
    %1001 = vmatpush.bf16.msra.mxu0 %v504
    %1002 = vmatpush.bf16.msra.mxu0 %v501
    %1003 = vmatpush.bf16.msra.mxu0 %v498
    %1004 = vmatpush.bf16.msra.mxu0 %v495
    %1005 = vmatpush.bf16.msra.mxu0 %v492
    %1006 = vmatpush.bf16.msra.mxu0 %v489
    %1007 = vmatmul.bf16.gmra.mxu0 %v998
    %v1008 = vpop.f32.mrf.mxu0
    %v1009 = vadd.f32 %v406, %v1008
    %v1010 = vpop.f32.mrf.mxu0
    %1011 = vdwg.mxu0
    %1012 = vmatpush.bf16.msra.mxu0 %v511
    %1013 = vmatpush.bf16.msra.mxu0 %v508
    %1014 = vmatpush.bf16.msra.mxu0 %v505
    %1015 = vmatpush.bf16.msra.mxu0 %v502
    %1016 = vmatpush.bf16.msra.mxu0 %v499
    %1017 = vmatpush.bf16.msra.mxu0 %v496
    %1018 = vmatpush.bf16.msra.mxu0 %v493
    %1019 = vmatpush.bf16.msra.mxu0 %v490
    %1020 = vmatmul.bf16.gmra.mxu0 %v998
    %v1021 = vpop.f32.mrf.mxu0
    %v1022 = vadd.f32 %v407, %v1021
    %v1023 = vpop.f32.mrf.mxu0
    %1024 = vdwg.mxu0
    %1025 = vmatpush.bf16.msra.mxu0 %v512
    %1026 = vmatpush.bf16.msra.mxu0 %v509
    %1027 = vmatpush.bf16.msra.mxu0 %v506
    %1028 = vmatpush.bf16.msra.mxu0 %v503
    %1029 = vmatpush.bf16.msra.mxu0 %v500
    %1030 = vmatpush.bf16.msra.mxu0 %v497
    %1031 = vmatpush.bf16.msra.mxu0 %v494
    %1032 = vmatpush.bf16.msra.mxu0 %v491
    %1033 = vmatmul.bf16.gmra.mxu0 %v998
    %v1034 = vpop.f32.mrf.mxu0
    %v1035 = vadd.f32 %v408, %v1034
    %v1036 = vpop.f32.mrf.mxu0
    %1037 = vdwg.mxu0
    %v1038 = vadd.f32 %v995, %v1009
    %v1039 = vxor.u32 %v1038, 2147483648
    %v1040 = vmul.f32 %v1039, 1.442695
    %v1041 = vpow.pop %v1040
    %v1042 = vadd.f32 %v1041, 1.0
    %v1043 = vrcp.pop %v1042
    %v1044 = vmul.f32 %v1042, %v1043
    %v1045 = vsub.f32 1.0, %v1044
    %v1046 = vmul.f32 %v1043, %v1045
    %v1047 = vadd.f32 %v1043, %v1046
    %vm1048 = vweird.f32 %v1042
    %vm1049 = vweird.f32 %v1043
    %vm1050 = vmor %vm1048, %vm1049
    %v1051 = vsel %vm1050, %v1043, %v1047
    %v1052 = vand.u32 2147483647, %v1042
    %vm1053 = vcmp.eq.f32.partialorder %v1052, 8.507059e+37
    %v1054 = vand.u32 %v1042, 2147483648
    %v1055 = vor.u32 1.1754944e-38, %v1054
    %v1056 = vsel %vm1053, %v1055, %v1051
    %v1057 = vmul.f32 1.0, %v1056
    %v1058 = vadd.f32 %v996, %v1022
    %v1059 = vxor.u32 %v1058, 2147483648
    %v1060 = vmul.f32 %v1059, 1.442695
    %v1061 = vpow.pop %v1060
    %v1062 = vadd.f32 %v1061, 1.0
    %v1063 = vrcp.pop %v1062
    %v1064 = vmul.f32 %v1062, %v1063
    %v1065 = vsub.f32 1.0, %v1064
    %v1066 = vmul.f32 %v1063, %v1065
    %v1067 = vadd.f32 %v1063, %v1066
    %vm1068 = vweird.f32 %v1062
    %vm1069 = vweird.f32 %v1063
    %vm1070 = vmor %vm1068, %vm1069
    %v1071 = vsel %vm1070, %v1063, %v1067
    %v1072 = vand.u32 2147483647, %v1062
    %vm1073 = vcmp.eq.f32.partialorder %v1072, 8.507059e+37
    %v1074 = vand.u32 %v1062, 2147483648
    %v1075 = vor.u32 1.1754944e-38, %v1074
    %v1076 = vsel %vm1073, %v1075, %v1071
    %v1077 = vmul.f32 1.0, %v1076
    %v1078 = vmul.f32 %v1057, %v1035
    %v1079 = vadd.f32 %v997, %v1078
    %v1080 = vtanh.pop %v1079
    %v1081 = vsub.f32 1.0, %v1077
    %v1082 = vmul.f32 %v1081, %v1080
    %v1083 = vmul.f32 %v1077, %v992
    %v1084 = vadd.f32 %v1082, %v1083
    %1085 = vst.msk [vmem:[#allocation2 + $0x28] sm:$0xff] %vm623, %v1084
    %1086 = vst.msk [vmem:[#allocation2 + $0x10] sm:$0xff] %vm625, %v1084
    %v1087 = vsel %vm400, %v259, %v246
    %v1088 = vsel %vm401, %v288, %v275
    %v1089 = vsel %vm402, %v317, %v304
    %v1090 = vpack.c.bf16 %v1084, %v1084
    %1091 = vmatpush.bf16.msra.mxu0 %v510
    %1092 = vmatpush.bf16.msra.mxu0 %v507
    %1093 = vmatpush.bf16.msra.mxu0 %v504
    %1094 = vmatpush.bf16.msra.mxu0 %v501
    %1095 = vmatpush.bf16.msra.mxu0 %v498
    %1096 = vmatpush.bf16.msra.mxu0 %v495
    %1097 = vmatpush.bf16.msra.mxu0 %v492
    %1098 = vmatpush.bf16.msra.mxu0 %v489
    %1099 = vmatmul.bf16.gmra.mxu0 %v1090
    %v1100 = vpop.f32.mrf.mxu0
    %v1101 = vadd.f32 %v406, %v1100
    %v1102 = vpop.f32.mrf.mxu0
    %1103 = vdwg.mxu0
    %1104 = vmatpush.bf16.msra.mxu0 %v511
    %1105 = vmatpush.bf16.msra.mxu0 %v508
    %1106 = vmatpush.bf16.msra.mxu0 %v505
    %1107 = vmatpush.bf16.msra.mxu0 %v502
    %1108 = vmatpush.bf16.msra.mxu0 %v499
    %1109 = vmatpush.bf16.msra.mxu0 %v496
    %1110 = vmatpush.bf16.msra.mxu0 %v493
    %1111 = vmatpush.bf16.msra.mxu0 %v490
    %1112 = vmatmul.bf16.gmra.mxu0 %v1090
    %v1113 = vpop.f32.mrf.mxu0
    %v1114 = vadd.f32 %v407, %v1113
    %v1115 = vpop.f32.mrf.mxu0
    %1116 = vdwg.mxu0
    %1117 = vmatpush.bf16.msra.mxu0 %v512
    %1118 = vmatpush.bf16.msra.mxu0 %v509
    %1119 = vmatpush.bf16.msra.mxu0 %v506
    %1120 = vmatpush.bf16.msra.mxu0 %v503
    %1121 = vmatpush.bf16.msra.mxu0 %v500
    %1122 = vmatpush.bf16.msra.mxu0 %v497
    %1123 = vmatpush.bf16.msra.mxu0 %v494
    %1124 = vmatpush.bf16.msra.mxu0 %v491
    %1125 = vmatmul.bf16.gmra.mxu0 %v1090
    %v1126 = vpop.f32.mrf.mxu0
    %v1127 = vadd.f32 %v408, %v1126
    %v1128 = vpop.f32.mrf.mxu0
    %1129 = vdwg.mxu0
    %v1130 = vadd.f32 %v1087, %v1101
    %v1131 = vxor.u32 %v1130, 2147483648
    %v1132 = vmul.f32 %v1131, 1.442695
    %v1133 = vpow.pop %v1132
    %v1134 = vadd.f32 %v1133, 1.0
    %v1135 = vrcp.pop %v1134
    %v1136 = vmul.f32 %v1134, %v1135
    %v1137 = vsub.f32 1.0, %v1136
    %v1138 = vmul.f32 %v1135, %v1137
    %v1139 = vadd.f32 %v1135, %v1138
    %vm1140 = vweird.f32 %v1134
    %vm1141 = vweird.f32 %v1135
    %vm1142 = vmor %vm1140, %vm1141
    %v1143 = vsel %vm1142, %v1135, %v1139
    %v1144 = vand.u32 2147483647, %v1134
    %vm1145 = vcmp.eq.f32.partialorder %v1144, 8.507059e+37
    %v1146 = vand.u32 %v1134, 2147483648
    %v1147 = vor.u32 1.1754944e-38, %v1146
    %v1148 = vsel %vm1145, %v1147, %v1143
    %v1149 = vmul.f32 1.0, %v1148
    %v1150 = vadd.f32 %v1088, %v1114
    %v1151 = vxor.u32 %v1150, 2147483648
    %v1152 = vmul.f32 %v1151, 1.442695
    %v1153 = vpow.pop %v1152
    %v1154 = vadd.f32 %v1153, 1.0
    %v1155 = vrcp.pop %v1154
    %v1156 = vmul.f32 %v1154, %v1155
    %v1157 = vsub.f32 1.0, %v1156
    %v1158 = vmul.f32 %v1155, %v1157
    %v1159 = vadd.f32 %v1155, %v1158
    %vm1160 = vweird.f32 %v1154
    %vm1161 = vweird.f32 %v1155
    %vm1162 = vmor %vm1160, %vm1161
    %v1163 = vsel %vm1162, %v1155, %v1159
    %v1164 = vand.u32 2147483647, %v1154
    %vm1165 = vcmp.eq.f32.partialorder %v1164, 8.507059e+37
    %v1166 = vand.u32 %v1154, 2147483648
    %v1167 = vor.u32 1.1754944e-38, %v1166
    %v1168 = vsel %vm1165, %v1167, %v1163
    %v1169 = vmul.f32 1.0, %v1168
    %v1170 = vmul.f32 %v1149, %v1127
    %v1171 = vadd.f32 %v1089, %v1170
    %v1172 = vtanh.pop %v1171
    %v1173 = vsub.f32 1.0, %v1169
    %v1174 = vmul.f32 %v1173, %v1172
    %v1175 = vmul.f32 %v1169, %v1084
    %v1176 = vadd.f32 %v1174, %v1175
    %1177 = vst.msk [vmem:[#allocation2 + $0x30] sm:$0xff] %vm623, %v1176
    %1178 = vst.msk [vmem:[#allocation2 + $0x8] sm:$0xff] %vm625, %v1176
    %v1179 = vsel %vm400, %v261, %v244
    %v1180 = vsel %vm401, %v290, %v273
    %v1181 = vsel %vm402, %v319, %v302
    %v1182 = vpack.c.bf16 %v1176, %v1176
    %1183 = vmatpush.bf16.msra.mxu0 %v510
    %1184 = vmatpush.bf16.msra.mxu0 %v507
    %1185 = vmatpush.bf16.msra.mxu0 %v504
    %1186 = vmatpush.bf16.msra.mxu0 %v501
    %1187 = vmatpush.bf16.msra.mxu0 %v498
    %1188 = vmatpush.bf16.msra.mxu0 %v495
    %1189 = vmatpush.bf16.msra.mxu0 %v492
    %1190 = vmatpush.bf16.msra.mxu0 %v489
    %1191 = vmatmul.bf16.gmra.mxu0 %v1182
    %v1192 = vpop.f32.mrf.mxu0
    %v1193 = vadd.f32 %v406, %v1192
    %v1194 = vpop.f32.mrf.mxu0
    %1195 = vdwg.mxu0
    %1196 = vmatpush.bf16.msra.mxu0 %v511
    %1197 = vmatpush.bf16.msra.mxu0 %v508
    %1198 = vmatpush.bf16.msra.mxu0 %v505
    %1199 = vmatpush.bf16.msra.mxu0 %v502
    %1200 = vmatpush.bf16.msra.mxu0 %v499
    %1201 = vmatpush.bf16.msra.mxu0 %v496
    %1202 = vmatpush.bf16.msra.mxu0 %v493
    %1203 = vmatpush.bf16.msra.mxu0 %v490
    %1204 = vmatmul.bf16.gmra.mxu0 %v1182
    %v1205 = vpop.f32.mrf.mxu0
    %v1206 = vadd.f32 %v407, %v1205
    %v1207 = vpop.f32.mrf.mxu0
    %1208 = vdwg.mxu0
    %1209 = vmatpush.bf16.msra.mxu0 %v512
    %1210 = vmatpush.bf16.msra.mxu0 %v509
    %1211 = vmatpush.bf16.msra.mxu0 %v506
    %1212 = vmatpush.bf16.msra.mxu0 %v503
    %1213 = vmatpush.bf16.msra.mxu0 %v500
    %1214 = vmatpush.bf16.msra.mxu0 %v497
    %1215 = vmatpush.bf16.msra.mxu0 %v494
    %1216 = vmatpush.bf16.msra.mxu0 %v491
    %1217 = vmatmul.bf16.gmra.mxu0 %v1182
    %v1218 = vpop.f32.mrf.mxu0
    %v1219 = vadd.f32 %v408, %v1218
    %v1220 = vpop.f32.mrf.mxu0
    %1221 = vdwg.mxu0
    %v1222 = vadd.f32 %v1179, %v1193
    %v1223 = vxor.u32 %v1222, 2147483648
    %v1224 = vmul.f32 %v1223, 1.442695
    %v1225 = vpow.pop %v1224
    %v1226 = vadd.f32 %v1225, 1.0
    %v1227 = vrcp.pop %v1226
    %v1228 = vmul.f32 %v1226, %v1227
    %v1229 = vsub.f32 1.0, %v1228
    %v1230 = vmul.f32 %v1227, %v1229
    %v1231 = vadd.f32 %v1227, %v1230
    %vm1232 = vweird.f32 %v1226
    %vm1233 = vweird.f32 %v1227
    %vm1234 = vmor %vm1232, %vm1233
    %v1235 = vsel %vm1234, %v1227, %v1231
    %v1236 = vand.u32 2147483647, %v1226
    %vm1237 = vcmp.eq.f32.partialorder %v1236, 8.507059e+37
    %v1238 = vand.u32 %v1226, 2147483648
    %v1239 = vor.u32 1.1754944e-38, %v1238
    %v1240 = vsel %vm1237, %v1239, %v1235
    %v1241 = vmul.f32 1.0, %v1240
    %v1242 = vadd.f32 %v1180, %v1206
    %v1243 = vxor.u32 %v1242, 2147483648
    %v1244 = vmul.f32 %v1243, 1.442695
    %v1245 = vpow.pop %v1244
    %v1246 = vadd.f32 %v1245, 1.0
    %v1247 = vrcp.pop %v1246
    %v1248 = vmul.f32 %v1246, %v1247
    %v1249 = vsub.f32 1.0, %v1248
    %v1250 = vmul.f32 %v1247, %v1249
    %v1251 = vadd.f32 %v1247, %v1250
    %vm1252 = vweird.f32 %v1246
    %vm1253 = vweird.f32 %v1247
    %vm1254 = vmor %vm1252, %vm1253
    %v1255 = vsel %vm1254, %v1247, %v1251
    %v1256 = vand.u32 2147483647, %v1246
    %vm1257 = vcmp.eq.f32.partialorder %v1256, 8.507059e+37
    %v1258 = vand.u32 %v1246, 2147483648
    %v1259 = vor.u32 1.1754944e-38, %v1258
    %v1260 = vsel %vm1257, %v1259, %v1255
    %v1261 = vmul.f32 1.0, %v1260
    %v1262 = vmul.f32 %v1241, %v1219
    %v1263 = vadd.f32 %v1181, %v1262
    %v1264 = vtanh.pop %v1263
    %v1265 = vsub.f32 1.0, %v1261
    %v1266 = vmul.f32 %v1265, %v1264
    %v1267 = vmul.f32 %v1261, %v1176
    %v1268 = vadd.f32 %v1266, %v1267
    %1269 = vst.msk [vmem:[#allocation2 + $0x38] sm:$0xff] %vm623, %v1268
    %1270 = vst.msk [vmem:[#allocation2] sm:$0xff] %vm625, %v1268
    %v1271 = vld [vmem:[#allocation2] sm:$0xff]
    %v1272 = vld [vmem:[#allocation2 + $0x8] sm:$0xff]
    %v1273 = vld [vmem:[#allocation2 + $0x10] sm:$0xff]
    %v1274 = vld [vmem:[#allocation2 + $0x18] sm:$0xff]
    %v1275 = vld [vmem:[#allocation2 + $0x20] sm:$0xff]
    %v1276 = vld [vmem:[#allocation2 + $0x28] sm:$0xff]
    %v1277 = vld [vmem:[#allocation2 + $0x30] sm:$0xff]
    %v1278 = vld [vmem:[#allocation2 + $0x38] sm:$0xff]
    %v1279 = vpack.c.bf16 %v1272, %v1271
    %v1280 = vpack.c.bf16 %v1274, %v1273
    %v1281 = vpack.c.bf16 %v1276, %v1275
    %v1282 = vpack.c.bf16 %v1278, %v1277
    %s1283 = scalar_lea.vmem [#allocation4], 192
    %v1284 = vld [vmem:[%s1283] sm:$0xff]
    %v1285 = vld [vmem:[%s1283 + $0x8] sm:$0xf]
    %v1286 = vld [vmem:[%s1283 + $0xc] sm:$0xff]
    %v1287 = vld [vmem:[%s1283 + $0x14] sm:$0xf]
    %v1288 = vld [vmem:[%s1283 + $0x18] sm:$0xff]
    %v1289 = vld [vmem:[%s1283 + $0x20] sm:$0xf]
    %v1290 = vld [vmem:[%s1283 + $0x24] sm:$0xff]
    %v1291 = vld [vmem:[%s1283 + $0x2c] sm:$0xf]
    %v1292 = vld [vmem:[%s1283 + $0x30] sm:$0xff]
    %v1293 = vld [vmem:[%s1283 + $0x38] sm:$0xf]
    %v1294 = vld [vmem:[%s1283 + $0x3c] sm:$0xff]
    %v1295 = vld [vmem:[%s1283 + $0x44] sm:$0xf]
    %v1296 = vld [vmem:[%s1283 + $0x48] sm:$0xff]
    %v1297 = vld [vmem:[%s1283 + $0x50] sm:$0xf]
    %v1298 = vld [vmem:[%s1283 + $0x54] sm:$0xff]
    %v1299 = vld [vmem:[%s1283 + $0x5c] sm:$0xf]
    %v1300 = vld [vmem:[%s1283 + $0x60] sm:$0xff]
    %v1301 = vld [vmem:[%s1283 + $0x68] sm:$0xf]
    %v1302 = vld [vmem:[%s1283 + $0x6c] sm:$0xff]
    %v1303 = vld [vmem:[%s1283 + $0x74] sm:$0xf]
    %v1304 = vld [vmem:[%s1283 + $0x78] sm:$0xff]
    %v1305 = vld [vmem:[%s1283 + $0x80] sm:$0xf]
    %v1306 = vld [vmem:[%s1283 + $0x84] sm:$0xff]
    %v1307 = vld [vmem:[%s1283 + $0x8c] sm:$0xf]
    %v1308 = vld [vmem:[%s1283 + $0x90] sm:$0xff]
    %v1309 = vld [vmem:[%s1283 + $0x98] sm:$0xf]
    %v1310 = vld [vmem:[%s1283 + $0x9c] sm:$0xff]
    %v1311 = vld [vmem:[%s1283 + $0xa4] sm:$0xf]
    %v1312 = vld [vmem:[%s1283 + $0xa8] sm:$0xff]
    %v1313 = vld [vmem:[%s1283 + $0xb0] sm:$0xf]
    %v1314 = vld [vmem:[%s1283 + $0xb4] sm:$0xff]
    %v1315 = vld [vmem:[%s1283 + $0xbc] sm:$0xf]
    %v1316 = vperm.slane %v40, 1
    %v1317 = vperm.slane %v41, 1
    %v1318 = vperm.slane %v42, 1
    %v1351 = vunpack.c.l.b16 %v1284
    %v1352 = vunpack.c.h.b16 %v1284
    %v1353 = vunpack.c.l.b16 %v1285
    %v1354 = vunpack.c.l.b16 %v1286
    %v1355 = vunpack.c.h.b16 %v1286
    %v1356 = vunpack.c.l.b16 %v1287
    %v1357 = vunpack.c.l.b16 %v1288
    %v1358 = vunpack.c.h.b16 %v1288
    %v1359 = vunpack.c.l.b16 %v1289
    %v1360 = vunpack.c.l.b16 %v1290
    %v1361 = vunpack.c.h.b16 %v1290
    %v1362 = vunpack.c.l.b16 %v1291
    %v1363 = vunpack.c.l.b16 %v1292
    %v1364 = vunpack.c.h.b16 %v1292
    %v1365 = vunpack.c.l.b16 %v1293
    %v1366 = vunpack.c.l.b16 %v1294
    %v1367 = vunpack.c.h.b16 %v1294
    %v1368 = vunpack.c.l.b16 %v1295
    %v1369 = vunpack.c.l.b16 %v1296
    %v1370 = vunpack.c.h.b16 %v1296
    %v1371 = vunpack.c.l.b16 %v1297
    %v1372 = vunpack.c.l.b16 %v1298
    %v1373 = vunpack.c.h.b16 %v1298
    %v1374 = vunpack.c.l.b16 %v1299
    %v1375 = vunpack.c.l.b16 %v1300
    %v1376 = vunpack.c.h.b16 %v1300
    %v1377 = vunpack.c.l.b16 %v1301
    %v1378 = vunpack.c.l.b16 %v1302
    %v1379 = vunpack.c.h.b16 %v1302
    %v1380 = vunpack.c.l.b16 %v1303
    %v1381 = vunpack.c.l.b16 %v1304
    %v1382 = vunpack.c.h.b16 %v1304
    %v1383 = vunpack.c.l.b16 %v1305
    %v1384 = vunpack.c.l.b16 %v1306
    %v1385 = vunpack.c.h.b16 %v1306
    %v1386 = vunpack.c.l.b16 %v1307
    %v1387 = vunpack.c.l.b16 %v1308
    %v1388 = vunpack.c.h.b16 %v1308
    %v1389 = vunpack.c.l.b16 %v1309
    %v1390 = vunpack.c.l.b16 %v1310
    %v1391 = vunpack.c.h.b16 %v1310
    %v1392 = vunpack.c.l.b16 %v1311
    %v1393 = vunpack.c.l.b16 %v1312
    %v1394 = vunpack.c.h.b16 %v1312
    %v1395 = vunpack.c.l.b16 %v1313
    %v1396 = vunpack.c.l.b16 %v1314
    %v1397 = vunpack.c.h.b16 %v1314
    %v1398 = vunpack.c.l.b16 %v1315
    %v1399 = vpack.c.b16 %v1354, %v1351
    %v1400 = vpack.c.b16 %v1355, %v1352
    %v1401 = vpack.c.b16 %v1356, %v1353
    %v1402 = vpack.c.b16 %v1360, %v1357
    %v1403 = vpack.c.b16 %v1361, %v1358
    %v1404 = vpack.c.b16 %v1362, %v1359
    %v1405 = vpack.c.b16 %v1366, %v1363
    %v1406 = vpack.c.b16 %v1367, %v1364
    %v1407 = vpack.c.b16 %v1368, %v1365
    %v1408 = vpack.c.b16 %v1372, %v1369
    %v1409 = vpack.c.b16 %v1373, %v1370
    %v1410 = vpack.c.b16 %v1374, %v1371
    %v1411 = vpack.c.b16 %v1378, %v1375
    %v1412 = vpack.c.b16 %v1379, %v1376
    %v1413 = vpack.c.b16 %v1380, %v1377
    %v1414 = vpack.c.b16 %v1384, %v1381
    %v1415 = vpack.c.b16 %v1385, %v1382
    %v1416 = vpack.c.b16 %v1386, %v1383
    %v1417 = vpack.c.b16 %v1390, %v1387
    %v1418 = vpack.c.b16 %v1391, %v1388
    %v1419 = vpack.c.b16 %v1392, %v1389
    %v1420 = vpack.c.b16 %v1396, %v1393
    %v1421 = vpack.c.b16 %v1397, %v1394
    %v1422 = vpack.c.b16 %v1398, %v1395
    %1447 = vmatpush.bf16.msra.mxu0 %v1420
    %1448 = vmatpush.bf16.msra.mxu0 %v1417
    %1449 = vmatpush.bf16.msra.mxu0 %v1414
    %1450 = vmatpush.bf16.msra.mxu0 %v1411
    %1451 = vmatpush.bf16.msra.mxu0 %v1408
    %1452 = vmatpush.bf16.msra.mxu0 %v1405
    %1453 = vmatpush.bf16.msra.mxu0 %v1402
    %1454 = vmatpush.bf16.msra.mxu0 %v1399
    %1455 = vmatmul.bf16.gmra.mxu0 %v1279
    %v1456 = vpop.f32.mrf.mxu0
    %v1457 = vadd.f32 %v1316, %v1456
    %v1458 = vpop.f32.mrf.mxu0
    %v1459 = vadd.f32 %v1316, %v1458
    %1460 = vmatmul.bf16.gmra.mxu0 %v1280
    %v1461 = vpop.f32.mrf.mxu0
    %v1462 = vadd.f32 %v1316, %v1461
    %v1463 = vpop.f32.mrf.mxu0
    %v1464 = vadd.f32 %v1316, %v1463
    %1465 = vmatmul.bf16.gmra.mxu0 %v1281
    %v1466 = vpop.f32.mrf.mxu0
    %v1467 = vadd.f32 %v1316, %v1466
    %v1468 = vpop.f32.mrf.mxu0
    %v1469 = vadd.f32 %v1316, %v1468
    %1470 = vmatmul.bf16.gmra.mxu0 %v1282
    %v1471 = vpop.f32.mrf.mxu0
    %v1472 = vadd.f32 %v1316, %v1471
    %v1473 = vpop.f32.mrf.mxu0
    %v1474 = vadd.f32 %v1316, %v1473
    %1475 = vdwg.mxu0
    %1476 = vmatpush.bf16.msra.mxu0 %v1421
    %1477 = vmatpush.bf16.msra.mxu0 %v1418
    %1478 = vmatpush.bf16.msra.mxu0 %v1415
    %1479 = vmatpush.bf16.msra.mxu0 %v1412
    %1480 = vmatpush.bf16.msra.mxu0 %v1409
    %1481 = vmatpush.bf16.msra.mxu0 %v1406
    %1482 = vmatpush.bf16.msra.mxu0 %v1403
    %1483 = vmatpush.bf16.msra.mxu0 %v1400
    %1484 = vmatmul.bf16.gmra.mxu0 %v1279
    %v1485 = vpop.f32.mrf.mxu0
    %v1486 = vadd.f32 %v1317, %v1485
    %v1487 = vpop.f32.mrf.mxu0
    %v1488 = vadd.f32 %v1317, %v1487
    %1489 = vmatmul.bf16.gmra.mxu0 %v1280
    %v1490 = vpop.f32.mrf.mxu0
    %v1491 = vadd.f32 %v1317, %v1490
    %v1492 = vpop.f32.mrf.mxu0
    %v1493 = vadd.f32 %v1317, %v1492
    %1494 = vmatmul.bf16.gmra.mxu0 %v1281
    %v1495 = vpop.f32.mrf.mxu0
    %v1496 = vadd.f32 %v1317, %v1495
    %v1497 = vpop.f32.mrf.mxu0
    %v1498 = vadd.f32 %v1317, %v1497
    %1499 = vmatmul.bf16.gmra.mxu0 %v1282
    %v1500 = vpop.f32.mrf.mxu0
    %v1501 = vadd.f32 %v1317, %v1500
    %v1502 = vpop.f32.mrf.mxu0
    %v1503 = vadd.f32 %v1317, %v1502
    %1504 = vdwg.mxu0
    %1505 = vmatpush.bf16.msra.mxu0 %v1422
    %1506 = vmatpush.bf16.msra.mxu0 %v1419
    %1507 = vmatpush.bf16.msra.mxu0 %v1416
    %1508 = vmatpush.bf16.msra.mxu0 %v1413
    %1509 = vmatpush.bf16.msra.mxu0 %v1410
    %1510 = vmatpush.bf16.msra.mxu0 %v1407
    %1511 = vmatpush.bf16.msra.mxu0 %v1404
    %1512 = vmatpush.bf16.msra.mxu0 %v1401
    %1513 = vmatmul.bf16.gmra.mxu0 %v1279
    %v1514 = vpop.f32.mrf.mxu0
    %v1515 = vadd.f32 %v1318, %v1514
    %v1516 = vpop.f32.mrf.mxu0
    %v1517 = vadd.f32 %v1318, %v1516
    %1518 = vmatmul.bf16.gmra.mxu0 %v1280
    %v1519 = vpop.f32.mrf.mxu0
    %v1520 = vadd.f32 %v1318, %v1519
    %v1521 = vpop.f32.mrf.mxu0
    %v1522 = vadd.f32 %v1318, %v1521
    %1523 = vmatmul.bf16.gmra.mxu0 %v1281
    %v1524 = vpop.f32.mrf.mxu0
    %v1525 = vadd.f32 %v1318, %v1524
    %v1526 = vpop.f32.mrf.mxu0
    %v1527 = vadd.f32 %v1318, %v1526
    %1528 = vmatmul.bf16.gmra.mxu0 %v1282
    %v1529 = vpop.f32.mrf.mxu0
    %v1530 = vadd.f32 %v1318, %v1529
    %v1531 = vpop.f32.mrf.mxu0
    %v1532 = vadd.f32 %v1318, %v1531
    %1533 = vdwg.mxu0
    %s1534 = scalar_lea.vmem [#allocation4], 768
    %v1535 = vld [vmem:[%s1534] sm:$0xff]
    %v1536 = vld [vmem:[%s1534 + $0x8] sm:$0xf]
    %v1537 = vld [vmem:[%s1534 + $0xc] sm:$0xff]
    %v1538 = vld [vmem:[%s1534 + $0x14] sm:$0xf]
    %v1539 = vld [vmem:[%s1534 + $0x18] sm:$0xff]
    %v1540 = vld [vmem:[%s1534 + $0x20] sm:$0xf]
    %v1541 = vld [vmem:[%s1534 + $0x24] sm:$0xff]
    %v1542 = vld [vmem:[%s1534 + $0x2c] sm:$0xf]
    %v1543 = vld [vmem:[%s1534 + $0x30] sm:$0xff]
    %v1544 = vld [vmem:[%s1534 + $0x38] sm:$0xf]
    %v1545 = vld [vmem:[%s1534 + $0x3c] sm:$0xff]
    %v1546 = vld [vmem:[%s1534 + $0x44] sm:$0xf]
    %v1547 = vld [vmem:[%s1534 + $0x48] sm:$0xff]
    %v1548 = vld [vmem:[%s1534 + $0x50] sm:$0xf]
    %v1549 = vld [vmem:[%s1534 + $0x54] sm:$0xff]
    %v1550 = vld [vmem:[%s1534 + $0x5c] sm:$0xf]
    %v1551 = vld [vmem:[%s1534 + $0x60] sm:$0xff]
    %v1552 = vld [vmem:[%s1534 + $0x68] sm:$0xf]
    %v1553 = vld [vmem:[%s1534 + $0x6c] sm:$0xff]
    %v1554 = vld [vmem:[%s1534 + $0x74] sm:$0xf]
    %v1555 = vld [vmem:[%s1534 + $0x78] sm:$0xff]
    %v1556 = vld [vmem:[%s1534 + $0x80] sm:$0xf]
    %v1557 = vld [vmem:[%s1534 + $0x84] sm:$0xff]
    %v1558 = vld [vmem:[%s1534 + $0x8c] sm:$0xf]
    %v1559 = vld [vmem:[%s1534 + $0x90] sm:$0xff]
    %v1560 = vld [vmem:[%s1534 + $0x98] sm:$0xf]
    %v1561 = vld [vmem:[%s1534 + $0x9c] sm:$0xff]
    %v1562 = vld [vmem:[%s1534 + $0xa4] sm:$0xf]
    %v1563 = vld [vmem:[%s1534 + $0xa8] sm:$0xff]
    %v1564 = vld [vmem:[%s1534 + $0xb0] sm:$0xf]
    %v1565 = vld [vmem:[%s1534 + $0xb4] sm:$0xff]
    %v1566 = vld [vmem:[%s1534 + $0xbc] sm:$0xf]
    %v1567 = vsel %vm400, %v1457, %v1474
    %v1568 = vsel %vm401, %v1486, %v1503
    %v1569 = vsel %vm402, %v1515, %v1532
    %v1570 = vperm.slane %v40, 4
    %v1571 = vperm.slane %v41, 4
    %v1572 = vperm.slane %v42, 4
    %v1605 = vunpack.c.l.b16 %v1535
    %v1606 = vunpack.c.h.b16 %v1535
    %v1607 = vunpack.c.l.b16 %v1536
    %v1608 = vunpack.c.l.b16 %v1537
    %v1609 = vunpack.c.h.b16 %v1537
    %v1610 = vunpack.c.l.b16 %v1538
    %v1611 = vunpack.c.l.b16 %v1539
    %v1612 = vunpack.c.h.b16 %v1539
    %v1613 = vunpack.c.l.b16 %v1540
    %v1614 = vunpack.c.l.b16 %v1541
    %v1615 = vunpack.c.h.b16 %v1541
    %v1616 = vunpack.c.l.b16 %v1542
    %v1617 = vunpack.c.l.b16 %v1543
    %v1618 = vunpack.c.h.b16 %v1543
    %v1619 = vunpack.c.l.b16 %v1544
    %v1620 = vunpack.c.l.b16 %v1545
    %v1621 = vunpack.c.h.b16 %v1545
    %v1622 = vunpack.c.l.b16 %v1546
    %v1623 = vunpack.c.l.b16 %v1547
    %v1624 = vunpack.c.h.b16 %v1547
    %v1625 = vunpack.c.l.b16 %v1548
    %v1626 = vunpack.c.l.b16 %v1549
    %v1627 = vunpack.c.h.b16 %v1549
    %v1628 = vunpack.c.l.b16 %v1550
    %v1629 = vunpack.c.l.b16 %v1551
    %v1630 = vunpack.c.h.b16 %v1551
    %v1631 = vunpack.c.l.b16 %v1552
    %v1632 = vunpack.c.l.b16 %v1553
    %v1633 = vunpack.c.h.b16 %v1553
    %v1634 = vunpack.c.l.b16 %v1554
    %v1635 = vunpack.c.l.b16 %v1555
    %v1636 = vunpack.c.h.b16 %v1555
    %v1637 = vunpack.c.l.b16 %v1556
    %v1638 = vunpack.c.l.b16 %v1557
    %v1639 = vunpack.c.h.b16 %v1557
    %v1640 = vunpack.c.l.b16 %v1558
    %v1641 = vunpack.c.l.b16 %v1559
    %v1642 = vunpack.c.h.b16 %v1559
    %v1643 = vunpack.c.l.b16 %v1560
    %v1644 = vunpack.c.l.b16 %v1561
    %v1645 = vunpack.c.h.b16 %v1561
    %v1646 = vunpack.c.l.b16 %v1562
    %v1647 = vunpack.c.l.b16 %v1563
    %v1648 = vunpack.c.h.b16 %v1563
    %v1649 = vunpack.c.l.b16 %v1564
    %v1650 = vunpack.c.l.b16 %v1565
    %v1651 = vunpack.c.h.b16 %v1565
    %v1652 = vunpack.c.l.b16 %v1566
    %v1653 = vpack.c.b16 %v1608, %v1605
    %v1654 = vpack.c.b16 %v1609, %v1606
    %v1655 = vpack.c.b16 %v1610, %v1607
    %v1656 = vpack.c.b16 %v1614, %v1611
    %v1657 = vpack.c.b16 %v1615, %v1612
    %v1658 = vpack.c.b16 %v1616, %v1613
    %v1659 = vpack.c.b16 %v1620, %v1617
    %v1660 = vpack.c.b16 %v1621, %v1618
    %v1661 = vpack.c.b16 %v1622, %v1619
    %v1662 = vpack.c.b16 %v1626, %v1623
    %v1663 = vpack.c.b16 %v1627, %v1624
    %v1664 = vpack.c.b16 %v1628, %v1625
    %v1665 = vpack.c.b16 %v1632, %v1629
    %v1666 = vpack.c.b16 %v1633, %v1630
    %v1667 = vpack.c.b16 %v1634, %v1631
    %v1668 = vpack.c.b16 %v1638, %v1635
    %v1669 = vpack.c.b16 %v1639, %v1636
    %v1670 = vpack.c.b16 %v1640, %v1637
    %v1671 = vpack.c.b16 %v1644, %v1641
    %v1672 = vpack.c.b16 %v1645, %v1642
    %v1673 = vpack.c.b16 %v1646, %v1643
    %v1674 = vpack.c.b16 %v1650, %v1647
    %v1675 = vpack.c.b16 %v1651, %v1648
    %v1676 = vpack.c.b16 %v1652, %v1649
    %1701 = vmatpush.bf16.msra.mxu0 %v1674
    %1702 = vmatpush.bf16.msra.mxu0 %v1671
    %1703 = vmatpush.bf16.msra.mxu0 %v1668
    %1704 = vmatpush.bf16.msra.mxu0 %v1665
    %1705 = vmatpush.bf16.msra.mxu0 %v1662
    %1706 = vmatpush.bf16.msra.mxu0 %v1659
    %1707 = vmatpush.bf16.msra.mxu0 %v1656
    %1708 = vmatpush.bf16.msra.mxu0 %v1653
    %1709 = vmatmul.bf16.gmra.mxu0 0
    %v1710 = vpop.f32.mrf.mxu0
    %v1711 = vadd.f32 %v1570, %v1710
    %v1712 = vpop.f32.mrf.mxu0
    %1713 = vdwg.mxu0
    %1714 = vmatpush.bf16.msra.mxu0 %v1675
    %1715 = vmatpush.bf16.msra.mxu0 %v1672
    %1716 = vmatpush.bf16.msra.mxu0 %v1669
    %1717 = vmatpush.bf16.msra.mxu0 %v1666
    %1718 = vmatpush.bf16.msra.mxu0 %v1663
    %1719 = vmatpush.bf16.msra.mxu0 %v1660
    %1720 = vmatpush.bf16.msra.mxu0 %v1657
    %1721 = vmatpush.bf16.msra.mxu0 %v1654
    %1722 = vmatmul.bf16.gmra.mxu0 0
    %v1723 = vpop.f32.mrf.mxu0
    %v1724 = vadd.f32 %v1571, %v1723
    %v1725 = vpop.f32.mrf.mxu0
    %1726 = vdwg.mxu0
    %1727 = vmatpush.bf16.msra.mxu0 %v1676
    %1728 = vmatpush.bf16.msra.mxu0 %v1673
    %1729 = vmatpush.bf16.msra.mxu0 %v1670
    %1730 = vmatpush.bf16.msra.mxu0 %v1667
    %1731 = vmatpush.bf16.msra.mxu0 %v1664
    %1732 = vmatpush.bf16.msra.mxu0 %v1661
    %1733 = vmatpush.bf16.msra.mxu0 %v1658
    %1734 = vmatpush.bf16.msra.mxu0 %v1655
    %1735 = vmatmul.bf16.gmra.mxu0 0
    %v1736 = vpop.f32.mrf.mxu0
    %v1737 = vadd.f32 %v1572, %v1736
    %v1738 = vpop.f32.mrf.mxu0
    %1739 = vdwg.mxu0
    %v1740 = vadd.f32 %v1567, %v1711
    %v1741 = vxor.u32 %v1740, 2147483648
    %v1742 = vmul.f32 %v1741, 1.442695
    %v1743 = vpow.pop %v1742
    %v1744 = vadd.f32 %v1743, 1.0
    %v1745 = vrcp.pop %v1744
    %v1746 = vmul.f32 %v1744, %v1745
    %v1747 = vsub.f32 1.0, %v1746
    %v1748 = vmul.f32 %v1745, %v1747
    %v1749 = vadd.f32 %v1745, %v1748
    %vm1750 = vweird.f32 %v1744
    %vm1751 = vweird.f32 %v1745
    %vm1752 = vmor %vm1750, %vm1751
    %v1753 = vsel %vm1752, %v1745, %v1749
    %v1754 = vand.u32 2147483647, %v1744
    %vm1755 = vcmp.eq.f32.partialorder %v1754, 8.507059e+37
    %v1756 = vand.u32 %v1744, 2147483648
    %v1757 = vor.u32 1.1754944e-38, %v1756
    %v1758 = vsel %vm1755, %v1757, %v1753
    %v1759 = vmul.f32 1.0, %v1758
    %v1760 = vadd.f32 %v1568, %v1724
    %v1761 = vxor.u32 %v1760, 2147483648
    %v1762 = vmul.f32 %v1761, 1.442695
    %v1763 = vpow.pop %v1762
    %v1764 = vadd.f32 %v1763, 1.0
    %v1765 = vrcp.pop %v1764
    %v1766 = vmul.f32 %v1764, %v1765
    %v1767 = vsub.f32 1.0, %v1766
    %v1768 = vmul.f32 %v1765, %v1767
    %v1769 = vadd.f32 %v1765, %v1768
    %vm1770 = vweird.f32 %v1764
    %vm1771 = vweird.f32 %v1765
    %vm1772 = vmor %vm1770, %vm1771
    %v1773 = vsel %vm1772, %v1765, %v1769
    %v1774 = vand.u32 2147483647, %v1764
    %vm1775 = vcmp.eq.f32.partialorder %v1774, 8.507059e+37
    %v1776 = vand.u32 %v1764, 2147483648
    %v1777 = vor.u32 1.1754944e-38, %v1776
    %v1778 = vsel %vm1775, %v1777, %v1773
    %v1779 = vmul.f32 1.0, %v1778
    %v1780 = vmul.f32 %v1759, %v1737
    %v1781 = vadd.f32 %v1569, %v1780
    %v1782 = vtanh.pop %v1781
    %v1783 = vsub.f32 1.0, %v1779
    %v1784 = vmul.f32 %v1783, %v1782
    %v1785 = vmul.f32 %v1779, 0.0
    %v1786 = vadd.f32 %v1784, %v1785
    %1787 = vst.msk [vmem:[#allocation3] sm:$0xff] %vm623, %v1786
    %1788 = vst.msk [vmem:[#allocation3 + $0x38] sm:$0xff] %vm625, %v1786
    %v1789 = vsel %vm400, %v1459, %v1472
    %v1790 = vsel %vm401, %v1488, %v1501
    %v1791 = vsel %vm402, %v1517, %v1530
    %v1792 = vpack.c.bf16 %v1786, %v1786
    %1793 = vmatpush.bf16.msra.mxu0 %v1674
    %1794 = vmatpush.bf16.msra.mxu0 %v1671
    %1795 = vmatpush.bf16.msra.mxu0 %v1668
    %1796 = vmatpush.bf16.msra.mxu0 %v1665
    %1797 = vmatpush.bf16.msra.mxu0 %v1662
    %1798 = vmatpush.bf16.msra.mxu0 %v1659
    %1799 = vmatpush.bf16.msra.mxu0 %v1656
    %1800 = vmatpush.bf16.msra.mxu0 %v1653
    %1801 = vmatmul.bf16.gmra.mxu0 %v1792
    %v1802 = vpop.f32.mrf.mxu0
    %v1803 = vadd.f32 %v1570, %v1802
    %v1804 = vpop.f32.mrf.mxu0
    %1805 = vdwg.mxu0
    %1806 = vmatpush.bf16.msra.mxu0 %v1675
    %1807 = vmatpush.bf16.msra.mxu0 %v1672
    %1808 = vmatpush.bf16.msra.mxu0 %v1669
    %1809 = vmatpush.bf16.msra.mxu0 %v1666
    %1810 = vmatpush.bf16.msra.mxu0 %v1663
    %1811 = vmatpush.bf16.msra.mxu0 %v1660
    %1812 = vmatpush.bf16.msra.mxu0 %v1657
    %1813 = vmatpush.bf16.msra.mxu0 %v1654
    %1814 = vmatmul.bf16.gmra.mxu0 %v1792
    %v1815 = vpop.f32.mrf.mxu0
    %v1816 = vadd.f32 %v1571, %v1815
    %v1817 = vpop.f32.mrf.mxu0
    %1818 = vdwg.mxu0
    %1819 = vmatpush.bf16.msra.mxu0 %v1676
    %1820 = vmatpush.bf16.msra.mxu0 %v1673
    %1821 = vmatpush.bf16.msra.mxu0 %v1670
    %1822 = vmatpush.bf16.msra.mxu0 %v1667
    %1823 = vmatpush.bf16.msra.mxu0 %v1664
    %1824 = vmatpush.bf16.msra.mxu0 %v1661
    %1825 = vmatpush.bf16.msra.mxu0 %v1658
    %1826 = vmatpush.bf16.msra.mxu0 %v1655
    %1827 = vmatmul.bf16.gmra.mxu0 %v1792
    %v1828 = vpop.f32.mrf.mxu0
    %v1829 = vadd.f32 %v1572, %v1828
    %v1830 = vpop.f32.mrf.mxu0
    %1831 = vdwg.mxu0
    %v1832 = vadd.f32 %v1789, %v1803
    %v1833 = vxor.u32 %v1832, 2147483648
    %v1834 = vmul.f32 %v1833, 1.442695
    %v1835 = vpow.pop %v1834
    %v1836 = vadd.f32 %v1835, 1.0
    %v1837 = vrcp.pop %v1836
    %v1838 = vmul.f32 %v1836, %v1837
    %v1839 = vsub.f32 1.0, %v1838
    %v1840 = vmul.f32 %v1837, %v1839
    %v1841 = vadd.f32 %v1837, %v1840
    %vm1842 = vweird.f32 %v1836
    %vm1843 = vweird.f32 %v1837
    %vm1844 = vmor %vm1842, %vm1843
    %v1845 = vsel %vm1844, %v1837, %v1841
    %v1846 = vand.u32 2147483647, %v1836
    %vm1847 = vcmp.eq.f32.partialorder %v1846, 8.507059e+37
    %v1848 = vand.u32 %v1836, 2147483648
    %v1849 = vor.u32 1.1754944e-38, %v1848
    %v1850 = vsel %vm1847, %v1849, %v1845
    %v1851 = vmul.f32 1.0, %v1850
    %v1852 = vadd.f32 %v1790, %v1816
    %v1853 = vxor.u32 %v1852, 2147483648
    %v1854 = vmul.f32 %v1853, 1.442695
    %v1855 = vpow.pop %v1854
    %v1856 = vadd.f32 %v1855, 1.0
    %v1857 = vrcp.pop %v1856
    %v1858 = vmul.f32 %v1856, %v1857
    %v1859 = vsub.f32 1.0, %v1858
    %v1860 = vmul.f32 %v1857, %v1859
    %v1861 = vadd.f32 %v1857, %v1860
    %vm1862 = vweird.f32 %v1856
    %vm1863 = vweird.f32 %v1857
    %vm1864 = vmor %vm1862, %vm1863
    %v1865 = vsel %vm1864, %v1857, %v1861
    %v1866 = vand.u32 2147483647, %v1856
    %vm1867 = vcmp.eq.f32.partialorder %v1866, 8.507059e+37
    %v1868 = vand.u32 %v1856, 2147483648
    %v1869 = vor.u32 1.1754944e-38, %v1868
    %v1870 = vsel %vm1867, %v1869, %v1865
    %v1871 = vmul.f32 1.0, %v1870
    %v1872 = vmul.f32 %v1851, %v1829
    %v1873 = vadd.f32 %v1791, %v1872
    %v1874 = vtanh.pop %v1873
    %v1875 = vsub.f32 1.0, %v1871
    %v1876 = vmul.f32 %v1875, %v1874
    %v1877 = vmul.f32 %v1871, %v1786
    %v1878 = vadd.f32 %v1876, %v1877
    %1879 = vst.msk [vmem:[#allocation3 + $0x8] sm:$0xff] %vm623, %v1878
    %1880 = vst.msk [vmem:[#allocation3 + $0x30] sm:$0xff] %vm625, %v1878
    %v1881 = vsel %vm400, %v1462, %v1469
    %v1882 = vsel %vm401, %v1491, %v1498
    %v1883 = vsel %vm402, %v1520, %v1527
    %v1884 = vpack.c.bf16 %v1878, %v1878
    %1885 = vmatpush.bf16.msra.mxu0 %v1674
    %1886 = vmatpush.bf16.msra.mxu0 %v1671
    %1887 = vmatpush.bf16.msra.mxu0 %v1668
    %1888 = vmatpush.bf16.msra.mxu0 %v1665
    %1889 = vmatpush.bf16.msra.mxu0 %v1662
    %1890 = vmatpush.bf16.msra.mxu0 %v1659
    %1891 = vmatpush.bf16.msra.mxu0 %v1656
    %1892 = vmatpush.bf16.msra.mxu0 %v1653
    %1893 = vmatmul.bf16.gmra.mxu0 %v1884
    %v1894 = vpop.f32.mrf.mxu0
    %v1895 = vadd.f32 %v1570, %v1894
    %v1896 = vpop.f32.mrf.mxu0
    %1897 = vdwg.mxu0
    %1898 = vmatpush.bf16.msra.mxu0 %v1675
    %1899 = vmatpush.bf16.msra.mxu0 %v1672
    %1900 = vmatpush.bf16.msra.mxu0 %v1669
    %1901 = vmatpush.bf16.msra.mxu0 %v1666
    %1902 = vmatpush.bf16.msra.mxu0 %v1663
    %1903 = vmatpush.bf16.msra.mxu0 %v1660
    %1904 = vmatpush.bf16.msra.mxu0 %v1657
    %1905 = vmatpush.bf16.msra.mxu0 %v1654
    %1906 = vmatmul.bf16.gmra.mxu0 %v1884
    %v1907 = vpop.f32.mrf.mxu0
    %v1908 = vadd.f32 %v1571, %v1907
    %v1909 = vpop.f32.mrf.mxu0
    %1910 = vdwg.mxu0
    %1911 = vmatpush.bf16.msra.mxu0 %v1676
    %1912 = vmatpush.bf16.msra.mxu0 %v1673
    %1913 = vmatpush.bf16.msra.mxu0 %v1670
    %1914 = vmatpush.bf16.msra.mxu0 %v1667
    %1915 = vmatpush.bf16.msra.mxu0 %v1664
    %1916 = vmatpush.bf16.msra.mxu0 %v1661
    %1917 = vmatpush.bf16.msra.mxu0 %v1658
    %1918 = vmatpush.bf16.msra.mxu0 %v1655
    %1919 = vmatmul.bf16.gmra.mxu0 %v1884
    %v1920 = vpop.f32.mrf.mxu0
    %v1921 = vadd.f32 %v1572, %v1920
    %v1922 = vpop.f32.mrf.mxu0
    %1923 = vdwg.mxu0
    %v1924 = vadd.f32 %v1881, %v1895
    %v1925 = vxor.u32 %v1924, 2147483648
    %v1926 = vmul.f32 %v1925, 1.442695
    %v1927 = vpow.pop %v1926
    %v1928 = vadd.f32 %v1927, 1.0
    %v1929 = vrcp.pop %v1928
    %v1930 = vmul.f32 %v1928, %v1929
    %v1931 = vsub.f32 1.0, %v1930
    %v1932 = vmul.f32 %v1929, %v1931
    %v1933 = vadd.f32 %v1929, %v1932
    %vm1934 = vweird.f32 %v1928
    %vm1935 = vweird.f32 %v1929
    %vm1936 = vmor %vm1934, %vm1935
    %v1937 = vsel %vm1936, %v1929, %v1933
    %v1938 = vand.u32 2147483647, %v1928
    %vm1939 = vcmp.eq.f32.partialorder %v1938, 8.507059e+37
    %v1940 = vand.u32 %v1928, 2147483648
    %v1941 = vor.u32 1.1754944e-38, %v1940
    %v1942 = vsel %vm1939, %v1941, %v1937
    %v1943 = vmul.f32 1.0, %v1942
    %v1944 = vadd.f32 %v1882, %v1908
    %v1945 = vxor.u32 %v1944, 2147483648
    %v1946 = vmul.f32 %v1945, 1.442695
    %v1947 = vpow.pop %v1946
    %v1948 = vadd.f32 %v1947, 1.0
    %v1949 = vrcp.pop %v1948
    %v1950 = vmul.f32 %v1948, %v1949
    %v1951 = vsub.f32 1.0, %v1950
    %v1952 = vmul.f32 %v1949, %v1951
    %v1953 = vadd.f32 %v1949, %v1952
    %vm1954 = vweird.f32 %v1948
    %vm1955 = vweird.f32 %v1949
    %vm1956 = vmor %vm1954, %vm1955
    %v1957 = vsel %vm1956, %v1949, %v1953
    %v1958 = vand.u32 2147483647, %v1948
    %vm1959 = vcmp.eq.f32.partialorder %v1958, 8.507059e+37
    %v1960 = vand.u32 %v1948, 2147483648
    %v1961 = vor.u32 1.1754944e-38, %v1960
    %v1962 = vsel %vm1959, %v1961, %v1957
    %v1963 = vmul.f32 1.0, %v1962
    %v1964 = vmul.f32 %v1943, %v1921
    %v1965 = vadd.f32 %v1883, %v1964
    %v1966 = vtanh.pop %v1965
    %v1967 = vsub.f32 1.0, %v1963
    %v1968 = vmul.f32 %v1967, %v1966
    %v1969 = vmul.f32 %v1963, %v1878
    %v1970 = vadd.f32 %v1968, %v1969
    %1971 = vst.msk [vmem:[#allocation3 + $0x10] sm:$0xff] %vm623, %v1970
    %1972 = vst.msk [vmem:[#allocation3 + $0x28] sm:$0xff] %vm625, %v1970
    %v1973 = vsel %vm400, %v1464, %v1467
    %v1974 = vsel %vm401, %v1493, %v1496
    %v1975 = vsel %vm402, %v1522, %v1525
    %v1976 = vpack.c.bf16 %v1970, %v1970
    %1977 = vmatpush.bf16.msra.mxu0 %v1674
    %1978 = vmatpush.bf16.msra.mxu0 %v1671
    %1979 = vmatpush.bf16.msra.mxu0 %v1668
    %1980 = vmatpush.bf16.msra.mxu0 %v1665
    %1981 = vmatpush.bf16.msra.mxu0 %v1662
    %1982 = vmatpush.bf16.msra.mxu0 %v1659
    %1983 = vmatpush.bf16.msra.mxu0 %v1656
    %1984 = vmatpush.bf16.msra.mxu0 %v1653
    %1985 = vmatmul.bf16.gmra.mxu0 %v1976
    %v1986 = vpop.f32.mrf.mxu0
    %v1987 = vadd.f32 %v1570, %v1986
    %v1988 = vpop.f32.mrf.mxu0
    %1989 = vdwg.mxu0
    %1990 = vmatpush.bf16.msra.mxu0 %v1675
    %1991 = vmatpush.bf16.msra.mxu0 %v1672
    %1992 = vmatpush.bf16.msra.mxu0 %v1669
    %1993 = vmatpush.bf16.msra.mxu0 %v1666
    %1994 = vmatpush.bf16.msra.mxu0 %v1663
    %1995 = vmatpush.bf16.msra.mxu0 %v1660
    %1996 = vmatpush.bf16.msra.mxu0 %v1657
    %1997 = vmatpush.bf16.msra.mxu0 %v1654
    %1998 = vmatmul.bf16.gmra.mxu0 %v1976
    %v1999 = vpop.f32.mrf.mxu0
    %v2000 = vadd.f32 %v1571, %v1999
    %v2001 = vpop.f32.mrf.mxu0
    %2002 = vdwg.mxu0
    %2003 = vmatpush.bf16.msra.mxu0 %v1676
    %2004 = vmatpush.bf16.msra.mxu0 %v1673
    %2005 = vmatpush.bf16.msra.mxu0 %v1670
    %2006 = vmatpush.bf16.msra.mxu0 %v1667
    %2007 = vmatpush.bf16.msra.mxu0 %v1664
    %2008 = vmatpush.bf16.msra.mxu0 %v1661
    %2009 = vmatpush.bf16.msra.mxu0 %v1658
    %2010 = vmatpush.bf16.msra.mxu0 %v1655
    %2011 = vmatmul.bf16.gmra.mxu0 %v1976
    %v2012 = vpop.f32.mrf.mxu0
    %v2013 = vadd.f32 %v1572, %v2012
    %v2014 = vpop.f32.mrf.mxu0
    %2015 = vdwg.mxu0
    %v2016 = vadd.f32 %v1973, %v1987
    %v2017 = vxor.u32 %v2016, 2147483648
    %v2018 = vmul.f32 %v2017, 1.442695
    %v2019 = vpow.pop %v2018
    %v2020 = vadd.f32 %v2019, 1.0
    %v2021 = vrcp.pop %v2020
    %v2022 = vmul.f32 %v2020, %v2021
    %v2023 = vsub.f32 1.0, %v2022
    %v2024 = vmul.f32 %v2021, %v2023
    %v2025 = vadd.f32 %v2021, %v2024
    %vm2026 = vweird.f32 %v2020
    %vm2027 = vweird.f32 %v2021
    %vm2028 = vmor %vm2026, %vm2027
    %v2029 = vsel %vm2028, %v2021, %v2025
    %v2030 = vand.u32 2147483647, %v2020
    %vm2031 = vcmp.eq.f32.partialorder %v2030, 8.507059e+37
    %v2032 = vand.u32 %v2020, 2147483648
    %v2033 = vor.u32 1.1754944e-38, %v2032
    %v2034 = vsel %vm2031, %v2033, %v2029
    %v2035 = vmul.f32 1.0, %v2034
    %v2036 = vadd.f32 %v1974, %v2000
    %v2037 = vxor.u32 %v2036, 2147483648
    %v2038 = vmul.f32 %v2037, 1.442695
    %v2039 = vpow.pop %v2038
    %v2040 = vadd.f32 %v2039, 1.0
    %v2041 = vrcp.pop %v2040
    %v2042 = vmul.f32 %v2040, %v2041
    %v2043 = vsub.f32 1.0, %v2042
    %v2044 = vmul.f32 %v2041, %v2043
    %v2045 = vadd.f32 %v2041, %v2044
    %vm2046 = vweird.f32 %v2040
    %vm2047 = vweird.f32 %v2041
    %vm2048 = vmor %vm2046, %vm2047
    %v2049 = vsel %vm2048, %v2041, %v2045
    %v2050 = vand.u32 2147483647, %v2040
    %vm2051 = vcmp.eq.f32.partialorder %v2050, 8.507059e+37
    %v2052 = vand.u32 %v2040, 2147483648
    %v2053 = vor.u32 1.1754944e-38, %v2052
    %v2054 = vsel %vm2051, %v2053, %v2049
    %v2055 = vmul.f32 1.0, %v2054
    %v2056 = vmul.f32 %v2035, %v2013
    %v2057 = vadd.f32 %v1975, %v2056
    %v2058 = vtanh.pop %v2057
    %v2059 = vsub.f32 1.0, %v2055
    %v2060 = vmul.f32 %v2059, %v2058
    %v2061 = vmul.f32 %v2055, %v1970
    %v2062 = vadd.f32 %v2060, %v2061
    %2063 = vst.msk [vmem:[#allocation3 + $0x18] sm:$0xff] %vm623, %v2062
    %2064 = vst.msk [vmem:[#allocation3 + $0x20] sm:$0xff] %vm625, %v2062
    %v2065 = vsel %vm400, %v1467, %v1464
    %v2066 = vsel %vm401, %v1496, %v1493
    %v2067 = vsel %vm402, %v1525, %v1522
    %v2068 = vpack.c.bf16 %v2062, %v2062
    %2069 = vmatpush.bf16.msra.mxu0 %v1674
    %2070 = vmatpush.bf16.msra.mxu0 %v1671
    %2071 = vmatpush.bf16.msra.mxu0 %v1668
    %2072 = vmatpush.bf16.msra.mxu0 %v1665
    %2073 = vmatpush.bf16.msra.mxu0 %v1662
    %2074 = vmatpush.bf16.msra.mxu0 %v1659
    %2075 = vmatpush.bf16.msra.mxu0 %v1656
    %2076 = vmatpush.bf16.msra.mxu0 %v1653
    %2077 = vmatmul.bf16.gmra.mxu0 %v2068
    %v2078 = vpop.f32.mrf.mxu0
    %v2079 = vadd.f32 %v1570, %v2078
    %v2080 = vpop.f32.mrf.mxu0
    %2081 = vdwg.mxu0
    %2082 = vmatpush.bf16.msra.mxu0 %v1675
    %2083 = vmatpush.bf16.msra.mxu0 %v1672
    %2084 = vmatpush.bf16.msra.mxu0 %v1669
    %2085 = vmatpush.bf16.msra.mxu0 %v1666
    %2086 = vmatpush.bf16.msra.mxu0 %v1663
    %2087 = vmatpush.bf16.msra.mxu0 %v1660
    %2088 = vmatpush.bf16.msra.mxu0 %v1657
    %2089 = vmatpush.bf16.msra.mxu0 %v1654
    %2090 = vmatmul.bf16.gmra.mxu0 %v2068
    %v2091 = vpop.f32.mrf.mxu0
    %v2092 = vadd.f32 %v1571, %v2091
    %v2093 = vpop.f32.mrf.mxu0
    %2094 = vdwg.mxu0
    %2095 = vmatpush.bf16.msra.mxu0 %v1676
    %2096 = vmatpush.bf16.msra.mxu0 %v1673
    %2097 = vmatpush.bf16.msra.mxu0 %v1670
    %2098 = vmatpush.bf16.msra.mxu0 %v1667
    %2099 = vmatpush.bf16.msra.mxu0 %v1664
    %2100 = vmatpush.bf16.msra.mxu0 %v1661
    %2101 = vmatpush.bf16.msra.mxu0 %v1658
    %2102 = vmatpush.bf16.msra.mxu0 %v1655
    %2103 = vmatmul.bf16.gmra.mxu0 %v2068
    %v2104 = vpop.f32.mrf.mxu0
    %v2105 = vadd.f32 %v1572, %v2104
    %v2106 = vpop.f32.mrf.mxu0
    %2107 = vdwg.mxu0
    %v2108 = vadd.f32 %v2065, %v2079
    %v2109 = vxor.u32 %v2108, 2147483648
    %v2110 = vmul.f32 %v2109, 1.442695
    %v2111 = vpow.pop %v2110
    %v2112 = vadd.f32 %v2111, 1.0
    %v2113 = vrcp.pop %v2112
    %v2114 = vmul.f32 %v2112, %v2113
    %v2115 = vsub.f32 1.0, %v2114
    %v2116 = vmul.f32 %v2113, %v2115
    %v2117 = vadd.f32 %v2113, %v2116
    %vm2118 = vweird.f32 %v2112
    %vm2119 = vweird.f32 %v2113
    %vm2120 = vmor %vm2118, %vm2119
    %v2121 = vsel %vm2120, %v2113, %v2117
    %v2122 = vand.u32 2147483647, %v2112
    %vm2123 = vcmp.eq.f32.partialorder %v2122, 8.507059e+37
    %v2124 = vand.u32 %v2112, 2147483648
    %v2125 = vor.u32 1.1754944e-38, %v2124
    %v2126 = vsel %vm2123, %v2125, %v2121
    %v2127 = vmul.f32 1.0, %v2126
    %v2128 = vadd.f32 %v2066, %v2092
    %v2129 = vxor.u32 %v2128, 2147483648
    %v2130 = vmul.f32 %v2129, 1.442695
    %v2131 = vpow.pop %v2130
    %v2132 = vadd.f32 %v2131, 1.0
    %v2133 = vrcp.pop %v2132
    %v2134 = vmul.f32 %v2132, %v2133
    %v2135 = vsub.f32 1.0, %v2134
    %v2136 = vmul.f32 %v2133, %v2135
    %v2137 = vadd.f32 %v2133, %v2136
    %vm2138 = vweird.f32 %v2132
    %vm2139 = vweird.f32 %v2133
    %vm2140 = vmor %vm2138, %vm2139
    %v2141 = vsel %vm2140, %v2133, %v2137
    %v2142 = vand.u32 2147483647, %v2132
    %vm2143 = vcmp.eq.f32.partialorder %v2142, 8.507059e+37
    %v2144 = vand.u32 %v2132, 2147483648
    %v2145 = vor.u32 1.1754944e-38, %v2144
    %v2146 = vsel %vm2143, %v2145, %v2141
    %v2147 = vmul.f32 1.0, %v2146
    %v2148 = vmul.f32 %v2127, %v2105
    %v2149 = vadd.f32 %v2067, %v2148
    %v2150 = vtanh.pop %v2149
    %v2151 = vsub.f32 1.0, %v2147
    %v2152 = vmul.f32 %v2151, %v2150
    %v2153 = vmul.f32 %v2147, %v2062
    %v2154 = vadd.f32 %v2152, %v2153
    %2155 = vst.msk [vmem:[#allocation3 + $0x20] sm:$0xff] %vm623, %v2154
    %2156 = vst.msk [vmem:[#allocation3 + $0x18] sm:$0xff] %vm625, %v2154
    %v2157 = vsel %vm400, %v1469, %v1462
    %v2158 = vsel %vm401, %v1498, %v1491
    %v2159 = vsel %vm402, %v1527, %v1520
    %v2160 = vpack.c.bf16 %v2154, %v2154
    %2161 = vmatpush.bf16.msra.mxu0 %v1674
    %2162 = vmatpush.bf16.msra.mxu0 %v1671
    %2163 = vmatpush.bf16.msra.mxu0 %v1668
    %2164 = vmatpush.bf16.msra.mxu0 %v1665
    %2165 = vmatpush.bf16.msra.mxu0 %v1662
    %2166 = vmatpush.bf16.msra.mxu0 %v1659
    %2167 = vmatpush.bf16.msra.mxu0 %v1656
    %2168 = vmatpush.bf16.msra.mxu0 %v1653
    %2169 = vmatmul.bf16.gmra.mxu0 %v2160
    %v2170 = vpop.f32.mrf.mxu0
    %v2171 = vadd.f32 %v1570, %v2170
    %v2172 = vpop.f32.mrf.mxu0
    %2173 = vdwg.mxu0
    %2174 = vmatpush.bf16.msra.mxu0 %v1675
    %2175 = vmatpush.bf16.msra.mxu0 %v1672
    %2176 = vmatpush.bf16.msra.mxu0 %v1669
    %2177 = vmatpush.bf16.msra.mxu0 %v1666
    %2178 = vmatpush.bf16.msra.mxu0 %v1663
    %2179 = vmatpush.bf16.msra.mxu0 %v1660
    %2180 = vmatpush.bf16.msra.mxu0 %v1657
    %2181 = vmatpush.bf16.msra.mxu0 %v1654
    %2182 = vmatmul.bf16.gmra.mxu0 %v2160
    %v2183 = vpop.f32.mrf.mxu0
    %v2184 = vadd.f32 %v1571, %v2183
    %v2185 = vpop.f32.mrf.mxu0
    %2186 = vdwg.mxu0
    %2187 = vmatpush.bf16.msra.mxu0 %v1676
    %2188 = vmatpush.bf16.msra.mxu0 %v1673
    %2189 = vmatpush.bf16.msra.mxu0 %v1670
    %2190 = vmatpush.bf16.msra.mxu0 %v1667
    %2191 = vmatpush.bf16.msra.mxu0 %v1664
    %2192 = vmatpush.bf16.msra.mxu0 %v1661
    %2193 = vmatpush.bf16.msra.mxu0 %v1658
    %2194 = vmatpush.bf16.msra.mxu0 %v1655
    %2195 = vmatmul.bf16.gmra.mxu0 %v2160
    %v2196 = vpop.f32.mrf.mxu0
    %v2197 = vadd.f32 %v1572, %v2196
    %v2198 = vpop.f32.mrf.mxu0
    %2199 = vdwg.mxu0
    %v2200 = vadd.f32 %v2157, %v2171
    %v2201 = vxor.u32 %v2200, 2147483648
    %v2202 = vmul.f32 %v2201, 1.442695
    %v2203 = vpow.pop %v2202
    %v2204 = vadd.f32 %v2203, 1.0
    %v2205 = vrcp.pop %v2204
    %v2206 = vmul.f32 %v2204, %v2205
    %v2207 = vsub.f32 1.0, %v2206
    %v2208 = vmul.f32 %v2205, %v2207
    %v2209 = vadd.f32 %v2205, %v2208
    %vm2210 = vweird.f32 %v2204
    %vm2211 = vweird.f32 %v2205
    %vm2212 = vmor %vm2210, %vm2211
    %v2213 = vsel %vm2212, %v2205, %v2209
    %v2214 = vand.u32 2147483647, %v2204
    %vm2215 = vcmp.eq.f32.partialorder %v2214, 8.507059e+37
    %v2216 = vand.u32 %v2204, 2147483648
    %v2217 = vor.u32 1.1754944e-38, %v2216
    %v2218 = vsel %vm2215, %v2217, %v2213
    %v2219 = vmul.f32 1.0, %v2218
    %v2220 = vadd.f32 %v2158, %v2184
    %v2221 = vxor.u32 %v2220, 2147483648
    %v2222 = vmul.f32 %v2221, 1.442695
    %v2223 = vpow.pop %v2222
    %v2224 = vadd.f32 %v2223, 1.0
    %v2225 = vrcp.pop %v2224
    %v2226 = vmul.f32 %v2224, %v2225
    %v2227 = vsub.f32 1.0, %v2226
    %v2228 = vmul.f32 %v2225, %v2227
    %v2229 = vadd.f32 %v2225, %v2228
    %vm2230 = vweird.f32 %v2224
    %vm2231 = vweird.f32 %v2225
    %vm2232 = vmor %vm2230, %vm2231
    %v2233 = vsel %vm2232, %v2225, %v2229
    %v2234 = vand.u32 2147483647, %v2224
    %vm2235 = vcmp.eq.f32.partialorder %v2234, 8.507059e+37
    %v2236 = vand.u32 %v2224, 2147483648
    %v2237 = vor.u32 1.1754944e-38, %v2236
    %v2238 = vsel %vm2235, %v2237, %v2233
    %v2239 = vmul.f32 1.0, %v2238
    %v2240 = vmul.f32 %v2219, %v2197
    %v2241 = vadd.f32 %v2159, %v2240
    %v2242 = vtanh.pop %v2241
    %v2243 = vsub.f32 1.0, %v2239
    %v2244 = vmul.f32 %v2243, %v2242
    %v2245 = vmul.f32 %v2239, %v2154
    %v2246 = vadd.f32 %v2244, %v2245
    %2247 = vst.msk [vmem:[#allocation3 + $0x28] sm:$0xff] %vm623, %v2246
    %2248 = vst.msk [vmem:[#allocation3 + $0x10] sm:$0xff] %vm625, %v2246
    %v2249 = vsel %vm400, %v1472, %v1459
    %v2250 = vsel %vm401, %v1501, %v1488
    %v2251 = vsel %vm402, %v1530, %v1517
    %v2252 = vpack.c.bf16 %v2246, %v2246
    %2253 = vmatpush.bf16.msra.mxu0 %v1674
    %2254 = vmatpush.bf16.msra.mxu0 %v1671
    %2255 = vmatpush.bf16.msra.mxu0 %v1668
    %2256 = vmatpush.bf16.msra.mxu0 %v1665
    %2257 = vmatpush.bf16.msra.mxu0 %v1662
    %2258 = vmatpush.bf16.msra.mxu0 %v1659
    %2259 = vmatpush.bf16.msra.mxu0 %v1656
    %2260 = vmatpush.bf16.msra.mxu0 %v1653
    %2261 = vmatmul.bf16.gmra.mxu0 %v2252
    %v2262 = vpop.f32.mrf.mxu0
    %v2263 = vadd.f32 %v1570, %v2262
    %v2264 = vpop.f32.mrf.mxu0
    %2265 = vdwg.mxu0
    %2266 = vmatpush.bf16.msra.mxu0 %v1675
    %2267 = vmatpush.bf16.msra.mxu0 %v1672
    %2268 = vmatpush.bf16.msra.mxu0 %v1669
    %2269 = vmatpush.bf16.msra.mxu0 %v1666
    %2270 = vmatpush.bf16.msra.mxu0 %v1663
    %2271 = vmatpush.bf16.msra.mxu0 %v1660
    %2272 = vmatpush.bf16.msra.mxu0 %v1657
    %2273 = vmatpush.bf16.msra.mxu0 %v1654
    %2274 = vmatmul.bf16.gmra.mxu0 %v2252
    %v2275 = vpop.f32.mrf.mxu0
    %v2276 = vadd.f32 %v1571, %v2275
    %v2277 = vpop.f32.mrf.mxu0
    %2278 = vdwg.mxu0
    %2279 = vmatpush.bf16.msra.mxu0 %v1676
    %2280 = vmatpush.bf16.msra.mxu0 %v1673
    %2281 = vmatpush.bf16.msra.mxu0 %v1670
    %2282 = vmatpush.bf16.msra.mxu0 %v1667
    %2283 = vmatpush.bf16.msra.mxu0 %v1664
    %2284 = vmatpush.bf16.msra.mxu0 %v1661
    %2285 = vmatpush.bf16.msra.mxu0 %v1658
    %2286 = vmatpush.bf16.msra.mxu0 %v1655
    %2287 = vmatmul.bf16.gmra.mxu0 %v2252
    %v2288 = vpop.f32.mrf.mxu0
    %v2289 = vadd.f32 %v1572, %v2288
    %v2290 = vpop.f32.mrf.mxu0
    %2291 = vdwg.mxu0
    %v2292 = vadd.f32 %v2249, %v2263
    %v2293 = vxor.u32 %v2292, 2147483648
    %v2294 = vmul.f32 %v2293, 1.442695
    %v2295 = vpow.pop %v2294
    %v2296 = vadd.f32 %v2295, 1.0
    %v2297 = vrcp.pop %v2296
    %v2298 = vmul.f32 %v2296, %v2297
    %v2299 = vsub.f32 1.0, %v2298
    %v2300 = vmul.f32 %v2297, %v2299
    %v2301 = vadd.f32 %v2297, %v2300
    %vm2302 = vweird.f32 %v2296
    %vm2303 = vweird.f32 %v2297
    %vm2304 = vmor %vm2302, %vm2303
    %v2305 = vsel %vm2304, %v2297, %v2301
    %v2306 = vand.u32 2147483647, %v2296
    %vm2307 = vcmp.eq.f32.partialorder %v2306, 8.507059e+37
    %v2308 = vand.u32 %v2296, 2147483648
    %v2309 = vor.u32 1.1754944e-38, %v2308
    %v2310 = vsel %vm2307, %v2309, %v2305
    %v2311 = vmul.f32 1.0, %v2310
    %v2312 = vadd.f32 %v2250, %v2276
    %v2313 = vxor.u32 %v2312, 2147483648
    %v2314 = vmul.f32 %v2313, 1.442695
    %v2315 = vpow.pop %v2314
    %v2316 = vadd.f32 %v2315, 1.0
    %v2317 = vrcp.pop %v2316
    %v2318 = vmul.f32 %v2316, %v2317
    %v2319 = vsub.f32 1.0, %v2318
    %v2320 = vmul.f32 %v2317, %v2319
    %v2321 = vadd.f32 %v2317, %v2320
    %vm2322 = vweird.f32 %v2316
    %vm2323 = vweird.f32 %v2317
    %vm2324 = vmor %vm2322, %vm2323
    %v2325 = vsel %vm2324, %v2317, %v2321
    %v2326 = vand.u32 2147483647, %v2316
    %vm2327 = vcmp.eq.f32.partialorder %v2326, 8.507059e+37
    %v2328 = vand.u32 %v2316, 2147483648
    %v2329 = vor.u32 1.1754944e-38, %v2328
    %v2330 = vsel %vm2327, %v2329, %v2325
    %v2331 = vmul.f32 1.0, %v2330
    %v2332 = vmul.f32 %v2311, %v2289
    %v2333 = vadd.f32 %v2251, %v2332
    %v2334 = vtanh.pop %v2333
    %v2335 = vsub.f32 1.0, %v2331
    %v2336 = vmul.f32 %v2335, %v2334
    %v2337 = vmul.f32 %v2331, %v2246
    %v2338 = vadd.f32 %v2336, %v2337
    %2339 = vst.msk [vmem:[#allocation3 + $0x30] sm:$0xff] %vm623, %v2338
    %2340 = vst.msk [vmem:[#allocation3 + $0x8] sm:$0xff] %vm625, %v2338
    %v2341 = vsel %vm400, %v1474, %v1457
    %v2342 = vsel %vm401, %v1503, %v1486
    %v2343 = vsel %vm402, %v1532, %v1515
    %v2344 = vpack.c.bf16 %v2338, %v2338
    %2345 = vmatpush.bf16.msra.mxu0 %v1674
    %2346 = vmatpush.bf16.msra.mxu0 %v1671
    %2347 = vmatpush.bf16.msra.mxu0 %v1668
    %2348 = vmatpush.bf16.msra.mxu0 %v1665
    %2349 = vmatpush.bf16.msra.mxu0 %v1662
    %2350 = vmatpush.bf16.msra.mxu0 %v1659
    %2351 = vmatpush.bf16.msra.mxu0 %v1656
    %2352 = vmatpush.bf16.msra.mxu0 %v1653
    %2353 = vmatmul.bf16.gmra.mxu0 %v2344
    %v2354 = vpop.f32.mrf.mxu0
    %v2355 = vadd.f32 %v1570, %v2354
    %v2356 = vpop.f32.mrf.mxu0
    %2357 = vdwg.mxu0
    %2358 = vmatpush.bf16.msra.mxu0 %v1675
    %2359 = vmatpush.bf16.msra.mxu0 %v1672
    %2360 = vmatpush.bf16.msra.mxu0 %v1669
    %2361 = vmatpush.bf16.msra.mxu0 %v1666
    %2362 = vmatpush.bf16.msra.mxu0 %v1663
    %2363 = vmatpush.bf16.msra.mxu0 %v1660
    %2364 = vmatpush.bf16.msra.mxu0 %v1657
    %2365 = vmatpush.bf16.msra.mxu0 %v1654
    %2366 = vmatmul.bf16.gmra.mxu0 %v2344
    %v2367 = vpop.f32.mrf.mxu0
    %v2368 = vadd.f32 %v1571, %v2367
    %v2369 = vpop.f32.mrf.mxu0
    %2370 = vdwg.mxu0
    %2371 = vmatpush.bf16.msra.mxu0 %v1676
    %2372 = vmatpush.bf16.msra.mxu0 %v1673
    %2373 = vmatpush.bf16.msra.mxu0 %v1670
    %2374 = vmatpush.bf16.msra.mxu0 %v1667
    %2375 = vmatpush.bf16.msra.mxu0 %v1664
    %2376 = vmatpush.bf16.msra.mxu0 %v1661
    %2377 = vmatpush.bf16.msra.mxu0 %v1658
    %2378 = vmatpush.bf16.msra.mxu0 %v1655
    %2379 = vmatmul.bf16.gmra.mxu0 %v2344
    %v2380 = vpop.f32.mrf.mxu0
    %v2381 = vadd.f32 %v1572, %v2380
    %v2382 = vpop.f32.mrf.mxu0
    %2383 = vdwg.mxu0
    %v2384 = vadd.f32 %v2341, %v2355
    %v2385 = vxor.u32 %v2384, 2147483648
    %v2386 = vmul.f32 %v2385, 1.442695
    %v2387 = vpow.pop %v2386
    %v2388 = vadd.f32 %v2387, 1.0
    %v2389 = vrcp.pop %v2388
    %v2390 = vmul.f32 %v2388, %v2389
    %v2391 = vsub.f32 1.0, %v2390
    %v2392 = vmul.f32 %v2389, %v2391
    %v2393 = vadd.f32 %v2389, %v2392
    %vm2394 = vweird.f32 %v2388
    %vm2395 = vweird.f32 %v2389
    %vm2396 = vmor %vm2394, %vm2395
    %v2397 = vsel %vm2396, %v2389, %v2393
    %v2398 = vand.u32 2147483647, %v2388
    %vm2399 = vcmp.eq.f32.partialorder %v2398, 8.507059e+37
    %v2400 = vand.u32 %v2388, 2147483648
    %v2401 = vor.u32 1.1754944e-38, %v2400
    %v2402 = vsel %vm2399, %v2401, %v2397
    %v2403 = vmul.f32 1.0, %v2402
    %v2404 = vadd.f32 %v2342, %v2368
    %v2405 = vxor.u32 %v2404, 2147483648
    %v2406 = vmul.f32 %v2405, 1.442695
    %v2407 = vpow.pop %v2406
    %v2408 = vadd.f32 %v2407, 1.0
    %v2409 = vrcp.pop %v2408
    %v2410 = vmul.f32 %v2408, %v2409
    %v2411 = vsub.f32 1.0, %v2410
    %v2412 = vmul.f32 %v2409, %v2411
    %v2413 = vadd.f32 %v2409, %v2412
    %vm2414 = vweird.f32 %v2408
    %vm2415 = vweird.f32 %v2409
    %vm2416 = vmor %vm2414, %vm2415
    %v2417 = vsel %vm2416, %v2409, %v2413
    %v2418 = vand.u32 2147483647, %v2408
    %vm2419 = vcmp.eq.f32.partialorder %v2418, 8.507059e+37
    %v2420 = vand.u32 %v2408, 2147483648
    %v2421 = vor.u32 1.1754944e-38, %v2420
    %v2422 = vsel %vm2419, %v2421, %v2417
    %v2423 = vmul.f32 1.0, %v2422
    %v2424 = vmul.f32 %v2403, %v2381
    %v2425 = vadd.f32 %v2343, %v2424
    %v2426 = vtanh.pop %v2425
    %v2427 = vsub.f32 1.0, %v2423
    %v2428 = vmul.f32 %v2427, %v2426
    %v2429 = vmul.f32 %v2423, %v2338
    %v2430 = vadd.f32 %v2428, %v2429
    %2431 = vst.msk [vmem:[#allocation3 + $0x38] sm:$0xff] %vm623, %v2430
    %2432 = vst.msk [vmem:[#allocation3] sm:$0xff] %vm625, %v2430
    %v2433 = vld [vmem:[#allocation3] sm:$0xff]
    %v2434 = vld [vmem:[#allocation3 + $0x8] sm:$0xff]
    %v2435 = vld [vmem:[#allocation3 + $0x10] sm:$0xff]
    %v2436 = vld [vmem:[#allocation3 + $0x18] sm:$0xff]
    %v2437 = vld [vmem:[#allocation3 + $0x20] sm:$0xff]
    %v2438 = vld [vmem:[#allocation3 + $0x28] sm:$0xff]
    %v2439 = vld [vmem:[#allocation3 + $0x30] sm:$0xff]
    %v2440 = vld [vmem:[#allocation3 + $0x38] sm:$0xff]
    %v2441 = vpack.c.bf16 %v2434, %v2433
    %v2442 = vpack.c.bf16 %v2436, %v2435
    %v2443 = vpack.c.bf16 %v2438, %v2437
    %v2444 = vpack.c.bf16 %v2440, %v2439
    %s2445 = scalar_lea.vmem [#allocation4], 384
    %v2446 = vld [vmem:[%s2445] sm:$0xff]
    %v2447 = vld [vmem:[%s2445 + $0x8] sm:$0xf]
    %v2448 = vld [vmem:[%s2445 + $0xc] sm:$0xff]
    %v2449 = vld [vmem:[%s2445 + $0x14] sm:$0xf]
    %v2450 = vld [vmem:[%s2445 + $0x18] sm:$0xff]
    %v2451 = vld [vmem:[%s2445 + $0x20] sm:$0xf]
    %v2452 = vld [vmem:[%s2445 + $0x24] sm:$0xff]
    %v2453 = vld [vmem:[%s2445 + $0x2c] sm:$0xf]
    %v2454 = vld [vmem:[%s2445 + $0x30] sm:$0xff]
    %v2455 = vld [vmem:[%s2445 + $0x38] sm:$0xf]
    %v2456 = vld [vmem:[%s2445 + $0x3c] sm:$0xff]
    %v2457 = vld [vmem:[%s2445 + $0x44] sm:$0xf]
    %v2458 = vld [vmem:[%s2445 + $0x48] sm:$0xff]
    %v2459 = vld [vmem:[%s2445 + $0x50] sm:$0xf]
    %v2460 = vld [vmem:[%s2445 + $0x54] sm:$0xff]
    %v2461 = vld [vmem:[%s2445 + $0x5c] sm:$0xf]
    %v2462 = vld [vmem:[%s2445 + $0x60] sm:$0xff]
    %v2463 = vld [vmem:[%s2445 + $0x68] sm:$0xf]
    %v2464 = vld [vmem:[%s2445 + $0x6c] sm:$0xff]
    %v2465 = vld [vmem:[%s2445 + $0x74] sm:$0xf]
    %v2466 = vld [vmem:[%s2445 + $0x78] sm:$0xff]
    %v2467 = vld [vmem:[%s2445 + $0x80] sm:$0xf]
    %v2468 = vld [vmem:[%s2445 + $0x84] sm:$0xff]
    %v2469 = vld [vmem:[%s2445 + $0x8c] sm:$0xf]
    %v2470 = vld [vmem:[%s2445 + $0x90] sm:$0xff]
    %v2471 = vld [vmem:[%s2445 + $0x98] sm:$0xf]
    %v2472 = vld [vmem:[%s2445 + $0x9c] sm:$0xff]
    %v2473 = vld [vmem:[%s2445 + $0xa4] sm:$0xf]
    %v2474 = vld [vmem:[%s2445 + $0xa8] sm:$0xff]
    %v2475 = vld [vmem:[%s2445 + $0xb0] sm:$0xf]
    %v2476 = vld [vmem:[%s2445 + $0xb4] sm:$0xff]
    %v2477 = vld [vmem:[%s2445 + $0xbc] sm:$0xf]
    %v2478 = vperm.slane %v40, 2
    %v2479 = vperm.slane %v41, 2
    %v2480 = vperm.slane %v42, 2
    %v2513 = vunpack.c.l.b16 %v2446
    %v2514 = vunpack.c.h.b16 %v2446
    %v2515 = vunpack.c.l.b16 %v2447
    %v2516 = vunpack.c.l.b16 %v2448
    %v2517 = vunpack.c.h.b16 %v2448
    %v2518 = vunpack.c.l.b16 %v2449
    %v2519 = vunpack.c.l.b16 %v2450
    %v2520 = vunpack.c.h.b16 %v2450
    %v2521 = vunpack.c.l.b16 %v2451
    %v2522 = vunpack.c.l.b16 %v2452
    %v2523 = vunpack.c.h.b16 %v2452
    %v2524 = vunpack.c.l.b16 %v2453
    %v2525 = vunpack.c.l.b16 %v2454
    %v2526 = vunpack.c.h.b16 %v2454
    %v2527 = vunpack.c.l.b16 %v2455
    %v2528 = vunpack.c.l.b16 %v2456
    %v2529 = vunpack.c.h.b16 %v2456
    %v2530 = vunpack.c.l.b16 %v2457
    %v2531 = vunpack.c.l.b16 %v2458
    %v2532 = vunpack.c.h.b16 %v2458
    %v2533 = vunpack.c.l.b16 %v2459
    %v2534 = vunpack.c.l.b16 %v2460
    %v2535 = vunpack.c.h.b16 %v2460
    %v2536 = vunpack.c.l.b16 %v2461
    %v2537 = vunpack.c.l.b16 %v2462
    %v2538 = vunpack.c.h.b16 %v2462
    %v2539 = vunpack.c.l.b16 %v2463
    %v2540 = vunpack.c.l.b16 %v2464
    %v2541 = vunpack.c.h.b16 %v2464
    %v2542 = vunpack.c.l.b16 %v2465
    %v2543 = vunpack.c.l.b16 %v2466
    %v2544 = vunpack.c.h.b16 %v2466
    %v2545 = vunpack.c.l.b16 %v2467
    %v2546 = vunpack.c.l.b16 %v2468
    %v2547 = vunpack.c.h.b16 %v2468
    %v2548 = vunpack.c.l.b16 %v2469
    %v2549 = vunpack.c.l.b16 %v2470
    %v2550 = vunpack.c.h.b16 %v2470
    %v2551 = vunpack.c.l.b16 %v2471
    %v2552 = vunpack.c.l.b16 %v2472
    %v2553 = vunpack.c.h.b16 %v2472
    %v2554 = vunpack.c.l.b16 %v2473
    %v2555 = vunpack.c.l.b16 %v2474
    %v2556 = vunpack.c.h.b16 %v2474
    %v2557 = vunpack.c.l.b16 %v2475
    %v2558 = vunpack.c.l.b16 %v2476
    %v2559 = vunpack.c.h.b16 %v2476
    %v2560 = vunpack.c.l.b16 %v2477
    %v2561 = vpack.c.b16 %v2516, %v2513
    %v2562 = vpack.c.b16 %v2517, %v2514
    %v2563 = vpack.c.b16 %v2518, %v2515
    %v2564 = vpack.c.b16 %v2522, %v2519
    %v2565 = vpack.c.b16 %v2523, %v2520
    %v2566 = vpack.c.b16 %v2524, %v2521
    %v2567 = vpack.c.b16 %v2528, %v2525
    %v2568 = vpack.c.b16 %v2529, %v2526
    %v2569 = vpack.c.b16 %v2530, %v2527
    %v2570 = vpack.c.b16 %v2534, %v2531
    %v2571 = vpack.c.b16 %v2535, %v2532
    %v2572 = vpack.c.b16 %v2536, %v2533
    %v2573 = vpack.c.b16 %v2540, %v2537
    %v2574 = vpack.c.b16 %v2541, %v2538
    %v2575 = vpack.c.b16 %v2542, %v2539
    %v2576 = vpack.c.b16 %v2546, %v2543
    %v2577 = vpack.c.b16 %v2547, %v2544
    %v2578 = vpack.c.b16 %v2548, %v2545
    %v2579 = vpack.c.b16 %v2552, %v2549
    %v2580 = vpack.c.b16 %v2553, %v2550
    %v2581 = vpack.c.b16 %v2554, %v2551
    %v2582 = vpack.c.b16 %v2558, %v2555
    %v2583 = vpack.c.b16 %v2559, %v2556
    %v2584 = vpack.c.b16 %v2560, %v2557
    %2609 = vmatpush.bf16.msra.mxu0 %v2582
    %2610 = vmatpush.bf16.msra.mxu0 %v2579
    %2611 = vmatpush.bf16.msra.mxu0 %v2576
    %2612 = vmatpush.bf16.msra.mxu0 %v2573
    %2613 = vmatpush.bf16.msra.mxu0 %v2570
    %2614 = vmatpush.bf16.msra.mxu0 %v2567
    %2615 = vmatpush.bf16.msra.mxu0 %v2564
    %2616 = vmatpush.bf16.msra.mxu0 %v2561
    %2617 = vmatmul.bf16.gmra.mxu0 %v2441
    %v2618 = vpop.f32.mrf.mxu0
    %v2619 = vadd.f32 %v2478, %v2618
    %v2620 = vpop.f32.mrf.mxu0
    %v2621 = vadd.f32 %v2478, %v2620
    %2622 = vmatmul.bf16.gmra.mxu0 %v2442
    %v2623 = vpop.f32.mrf.mxu0
    %v2624 = vadd.f32 %v2478, %v2623
    %v2625 = vpop.f32.mrf.mxu0
    %v2626 = vadd.f32 %v2478, %v2625
    %2627 = vmatmul.bf16.gmra.mxu0 %v2443
    %v2628 = vpop.f32.mrf.mxu0
    %v2629 = vadd.f32 %v2478, %v2628
    %v2630 = vpop.f32.mrf.mxu0
    %v2631 = vadd.f32 %v2478, %v2630
    %2632 = vmatmul.bf16.gmra.mxu0 %v2444
    %v2633 = vpop.f32.mrf.mxu0
    %v2634 = vadd.f32 %v2478, %v2633
    %v2635 = vpop.f32.mrf.mxu0
    %v2636 = vadd.f32 %v2478, %v2635
    %2637 = vdwg.mxu0
    %2638 = vmatpush.bf16.msra.mxu0 %v2583
    %2639 = vmatpush.bf16.msra.mxu0 %v2580
    %2640 = vmatpush.bf16.msra.mxu0 %v2577
    %2641 = vmatpush.bf16.msra.mxu0 %v2574
    %2642 = vmatpush.bf16.msra.mxu0 %v2571
    %2643 = vmatpush.bf16.msra.mxu0 %v2568
    %2644 = vmatpush.bf16.msra.mxu0 %v2565
    %2645 = vmatpush.bf16.msra.mxu0 %v2562
    %2646 = vmatmul.bf16.gmra.mxu0 %v2441
    %v2647 = vpop.f32.mrf.mxu0
    %v2648 = vadd.f32 %v2479, %v2647
    %v2649 = vpop.f32.mrf.mxu0
    %v2650 = vadd.f32 %v2479, %v2649
    %2651 = vmatmul.bf16.gmra.mxu0 %v2442
    %v2652 = vpop.f32.mrf.mxu0
    %v2653 = vadd.f32 %v2479, %v2652
    %v2654 = vpop.f32.mrf.mxu0
    %v2655 = vadd.f32 %v2479, %v2654
    %2656 = vmatmul.bf16.gmra.mxu0 %v2443
    %v2657 = vpop.f32.mrf.mxu0
    %v2658 = vadd.f32 %v2479, %v2657
    %v2659 = vpop.f32.mrf.mxu0
    %v2660 = vadd.f32 %v2479, %v2659
    %2661 = vmatmul.bf16.gmra.mxu0 %v2444
    %v2662 = vpop.f32.mrf.mxu0
    %v2663 = vadd.f32 %v2479, %v2662
    %v2664 = vpop.f32.mrf.mxu0
    %v2665 = vadd.f32 %v2479, %v2664
    %2666 = vdwg.mxu0
    %2667 = vmatpush.bf16.msra.mxu0 %v2584
    %2668 = vmatpush.bf16.msra.mxu0 %v2581
    %2669 = vmatpush.bf16.msra.mxu0 %v2578
    %2670 = vmatpush.bf16.msra.mxu0 %v2575
    %2671 = vmatpush.bf16.msra.mxu0 %v2572
    %2672 = vmatpush.bf16.msra.mxu0 %v2569
    %2673 = vmatpush.bf16.msra.mxu0 %v2566
    %2674 = vmatpush.bf16.msra.mxu0 %v2563
    %2675 = vmatmul.bf16.gmra.mxu0 %v2441
    %v2676 = vpop.f32.mrf.mxu0
    %v2677 = vadd.f32 %v2480, %v2676
    %v2678 = vpop.f32.mrf.mxu0
    %v2679 = vadd.f32 %v2480, %v2678
    %2680 = vmatmul.bf16.gmra.mxu0 %v2442
    %v2681 = vpop.f32.mrf.mxu0
    %v2682 = vadd.f32 %v2480, %v2681
    %v2683 = vpop.f32.mrf.mxu0
    %v2684 = vadd.f32 %v2480, %v2683
    %2685 = vmatmul.bf16.gmra.mxu0 %v2443
    %v2686 = vpop.f32.mrf.mxu0
    %v2687 = vadd.f32 %v2480, %v2686
    %v2688 = vpop.f32.mrf.mxu0
    %v2689 = vadd.f32 %v2480, %v2688
    %2690 = vmatmul.bf16.gmra.mxu0 %v2444
    %v2691 = vpop.f32.mrf.mxu0
    %v2692 = vadd.f32 %v2480, %v2691
    %v2693 = vpop.f32.mrf.mxu0
    %v2694 = vadd.f32 %v2480, %v2693
    %2695 = vdwg.mxu0
    %s2696 = scalar_lea.vmem [#allocation4], 960
    %v2697 = vld [vmem:[%s2696] sm:$0xff]
    %v2698 = vld [vmem:[%s2696 + $0x8] sm:$0xf]
    %v2699 = vld [vmem:[%s2696 + $0xc] sm:$0xff]
    %v2700 = vld [vmem:[%s2696 + $0x14] sm:$0xf]
    %v2701 = vld [vmem:[%s2696 + $0x18] sm:$0xff]
    %v2702 = vld [vmem:[%s2696 + $0x20] sm:$0xf]
    %v2703 = vld [vmem:[%s2696 + $0x24] sm:$0xff]
    %v2704 = vld [vmem:[%s2696 + $0x2c] sm:$0xf]
    %v2705 = vld [vmem:[%s2696 + $0x30] sm:$0xff]
    %v2706 = vld [vmem:[%s2696 + $0x38] sm:$0xf]
    %v2707 = vld [vmem:[%s2696 + $0x3c] sm:$0xff]
    %v2708 = vld [vmem:[%s2696 + $0x44] sm:$0xf]
    %v2709 = vld [vmem:[%s2696 + $0x48] sm:$0xff]
    %v2710 = vld [vmem:[%s2696 + $0x50] sm:$0xf]
    %v2711 = vld [vmem:[%s2696 + $0x54] sm:$0xff]
    %v2712 = vld [vmem:[%s2696 + $0x5c] sm:$0xf]
    %v2713 = vld [vmem:[%s2696 + $0x60] sm:$0xff]
    %v2714 = vld [vmem:[%s2696 + $0x68] sm:$0xf]
    %v2715 = vld [vmem:[%s2696 + $0x6c] sm:$0xff]
    %v2716 = vld [vmem:[%s2696 + $0x74] sm:$0xf]
    %v2717 = vld [vmem:[%s2696 + $0x78] sm:$0xff]
    %v2718 = vld [vmem:[%s2696 + $0x80] sm:$0xf]
    %v2719 = vld [vmem:[%s2696 + $0x84] sm:$0xff]
    %v2720 = vld [vmem:[%s2696 + $0x8c] sm:$0xf]
    %v2721 = vld [vmem:[%s2696 + $0x90] sm:$0xff]
    %v2722 = vld [vmem:[%s2696 + $0x98] sm:$0xf]
    %v2723 = vld [vmem:[%s2696 + $0x9c] sm:$0xff]
    %v2724 = vld [vmem:[%s2696 + $0xa4] sm:$0xf]
    %v2725 = vld [vmem:[%s2696 + $0xa8] sm:$0xff]
    %v2726 = vld [vmem:[%s2696 + $0xb0] sm:$0xf]
    %v2727 = vld [vmem:[%s2696 + $0xb4] sm:$0xff]
    %v2728 = vld [vmem:[%s2696 + $0xbc] sm:$0xf]
    %v2729 = vsel %vm400, %v2619, %v2636
    %v2730 = vsel %vm401, %v2648, %v2665
    %v2731 = vsel %vm402, %v2677, %v2694
    %v2732 = vperm.slane %v40, 5
    %v2733 = vperm.slane %v41, 5
    %v2734 = vperm.slane %v42, 5
    %v2767 = vunpack.c.l.b16 %v2697
    %v2768 = vunpack.c.h.b16 %v2697
    %v2769 = vunpack.c.l.b16 %v2698
    %v2770 = vunpack.c.l.b16 %v2699
    %v2771 = vunpack.c.h.b16 %v2699
    %v2772 = vunpack.c.l.b16 %v2700
    %v2773 = vunpack.c.l.b16 %v2701
    %v2774 = vunpack.c.h.b16 %v2701
    %v2775 = vunpack.c.l.b16 %v2702
    %v2776 = vunpack.c.l.b16 %v2703
    %v2777 = vunpack.c.h.b16 %v2703
    %v2778 = vunpack.c.l.b16 %v2704
    %v2779 = vunpack.c.l.b16 %v2705
    %v2780 = vunpack.c.h.b16 %v2705
    %v2781 = vunpack.c.l.b16 %v2706
    %v2782 = vunpack.c.l.b16 %v2707
    %v2783 = vunpack.c.h.b16 %v2707
    %v2784 = vunpack.c.l.b16 %v2708
    %v2785 = vunpack.c.l.b16 %v2709
    %v2786 = vunpack.c.h.b16 %v2709
    %v2787 = vunpack.c.l.b16 %v2710
    %v2788 = vunpack.c.l.b16 %v2711
    %v2789 = vunpack.c.h.b16 %v2711
    %v2790 = vunpack.c.l.b16 %v2712
    %v2791 = vunpack.c.l.b16 %v2713
    %v2792 = vunpack.c.h.b16 %v2713
    %v2793 = vunpack.c.l.b16 %v2714
    %v2794 = vunpack.c.l.b16 %v2715
    %v2795 = vunpack.c.h.b16 %v2715
    %v2796 = vunpack.c.l.b16 %v2716
    %v2797 = vunpack.c.l.b16 %v2717
    %v2798 = vunpack.c.h.b16 %v2717
    %v2799 = vunpack.c.l.b16 %v2718
    %v2800 = vunpack.c.l.b16 %v2719
    %v2801 = vunpack.c.h.b16 %v2719
    %v2802 = vunpack.c.l.b16 %v2720
    %v2803 = vunpack.c.l.b16 %v2721
    %v2804 = vunpack.c.h.b16 %v2721
    %v2805 = vunpack.c.l.b16 %v2722
    %v2806 = vunpack.c.l.b16 %v2723
    %v2807 = vunpack.c.h.b16 %v2723
    %v2808 = vunpack.c.l.b16 %v2724
    %v2809 = vunpack.c.l.b16 %v2725
    %v2810 = vunpack.c.h.b16 %v2725
    %v2811 = vunpack.c.l.b16 %v2726
    %v2812 = vunpack.c.l.b16 %v2727
    %v2813 = vunpack.c.h.b16 %v2727
    %v2814 = vunpack.c.l.b16 %v2728
    %v2815 = vpack.c.b16 %v2770, %v2767
    %v2816 = vpack.c.b16 %v2771, %v2768
    %v2817 = vpack.c.b16 %v2772, %v2769
    %v2818 = vpack.c.b16 %v2776, %v2773
    %v2819 = vpack.c.b16 %v2777, %v2774
    %v2820 = vpack.c.b16 %v2778, %v2775
    %v2821 = vpack.c.b16 %v2782, %v2779
    %v2822 = vpack.c.b16 %v2783, %v2780
    %v2823 = vpack.c.b16 %v2784, %v2781
    %v2824 = vpack.c.b16 %v2788, %v2785
    %v2825 = vpack.c.b16 %v2789, %v2786
    %v2826 = vpack.c.b16 %v2790, %v2787
    %v2827 = vpack.c.b16 %v2794, %v2791
    %v2828 = vpack.c.b16 %v2795, %v2792
    %v2829 = vpack.c.b16 %v2796, %v2793
    %v2830 = vpack.c.b16 %v2800, %v2797
    %v2831 = vpack.c.b16 %v2801, %v2798
    %v2832 = vpack.c.b16 %v2802, %v2799
    %v2833 = vpack.c.b16 %v2806, %v2803
    %v2834 = vpack.c.b16 %v2807, %v2804
    %v2835 = vpack.c.b16 %v2808, %v2805
    %v2836 = vpack.c.b16 %v2812, %v2809
    %v2837 = vpack.c.b16 %v2813, %v2810
    %v2838 = vpack.c.b16 %v2814, %v2811
    %2863 = vmatpush.bf16.msra.mxu0 %v2836
    %2864 = vmatpush.bf16.msra.mxu0 %v2833
    %2865 = vmatpush.bf16.msra.mxu0 %v2830
    %2866 = vmatpush.bf16.msra.mxu0 %v2827
    %2867 = vmatpush.bf16.msra.mxu0 %v2824
    %2868 = vmatpush.bf16.msra.mxu0 %v2821
    %2869 = vmatpush.bf16.msra.mxu0 %v2818
    %2870 = vmatpush.bf16.msra.mxu0 %v2815
    %2871 = vmatmul.bf16.gmra.mxu0 0
    %v2872 = vpop.f32.mrf.mxu0
    %v2873 = vadd.f32 %v2732, %v2872
    %v2874 = vpop.f32.mrf.mxu0
    %2875 = vdwg.mxu0
    %2876 = vmatpush.bf16.msra.mxu0 %v2837
    %2877 = vmatpush.bf16.msra.mxu0 %v2834
    %2878 = vmatpush.bf16.msra.mxu0 %v2831
    %2879 = vmatpush.bf16.msra.mxu0 %v2828
    %2880 = vmatpush.bf16.msra.mxu0 %v2825
    %2881 = vmatpush.bf16.msra.mxu0 %v2822
    %2882 = vmatpush.bf16.msra.mxu0 %v2819
    %2883 = vmatpush.bf16.msra.mxu0 %v2816
    %2884 = vmatmul.bf16.gmra.mxu0 0
    %v2885 = vpop.f32.mrf.mxu0
    %v2886 = vadd.f32 %v2733, %v2885
    %v2887 = vpop.f32.mrf.mxu0
    %2888 = vdwg.mxu0
    %2889 = vmatpush.bf16.msra.mxu0 %v2838
    %2890 = vmatpush.bf16.msra.mxu0 %v2835
    %2891 = vmatpush.bf16.msra.mxu0 %v2832
    %2892 = vmatpush.bf16.msra.mxu0 %v2829
    %2893 = vmatpush.bf16.msra.mxu0 %v2826
    %2894 = vmatpush.bf16.msra.mxu0 %v2823
    %2895 = vmatpush.bf16.msra.mxu0 %v2820
    %2896 = vmatpush.bf16.msra.mxu0 %v2817
    %2897 = vmatmul.bf16.gmra.mxu0 0
    %v2898 = vpop.f32.mrf.mxu0
    %v2899 = vadd.f32 %v2734, %v2898
    %v2900 = vpop.f32.mrf.mxu0
    %2901 = vdwg.mxu0
    %v2902 = vadd.f32 %v2729, %v2873
    %v2903 = vxor.u32 %v2902, 2147483648
    %v2904 = vmul.f32 %v2903, 1.442695
    %v2905 = vpow.pop %v2904
    %v2906 = vadd.f32 %v2905, 1.0
    %v2907 = vrcp.pop %v2906
    %v2908 = vmul.f32 %v2906, %v2907
    %v2909 = vsub.f32 1.0, %v2908
    %v2910 = vmul.f32 %v2907, %v2909
    %v2911 = vadd.f32 %v2907, %v2910
    %vm2912 = vweird.f32 %v2906
    %vm2913 = vweird.f32 %v2907
    %vm2914 = vmor %vm2912, %vm2913
    %v2915 = vsel %vm2914, %v2907, %v2911
    %v2916 = vand.u32 2147483647, %v2906
    %vm2917 = vcmp.eq.f32.partialorder %v2916, 8.507059e+37
    %v2918 = vand.u32 %v2906, 2147483648
    %v2919 = vor.u32 1.1754944e-38, %v2918
    %v2920 = vsel %vm2917, %v2919, %v2915
    %v2921 = vmul.f32 1.0, %v2920
    %v2922 = vadd.f32 %v2730, %v2886
    %v2923 = vxor.u32 %v2922, 2147483648
    %v2924 = vmul.f32 %v2923, 1.442695
    %v2925 = vpow.pop %v2924
    %v2926 = vadd.f32 %v2925, 1.0
    %v2927 = vrcp.pop %v2926
    %v2928 = vmul.f32 %v2926, %v2927
    %v2929 = vsub.f32 1.0, %v2928
    %v2930 = vmul.f32 %v2927, %v2929
    %v2931 = vadd.f32 %v2927, %v2930
    %vm2932 = vweird.f32 %v2926
    %vm2933 = vweird.f32 %v2927
    %vm2934 = vmor %vm2932, %vm2933
    %v2935 = vsel %vm2934, %v2927, %v2931
    %v2936 = vand.u32 2147483647, %v2926
    %vm2937 = vcmp.eq.f32.partialorder %v2936, 8.507059e+37
    %v2938 = vand.u32 %v2926, 2147483648
    %v2939 = vor.u32 1.1754944e-38, %v2938
    %v2940 = vsel %vm2937, %v2939, %v2935
    %v2941 = vmul.f32 1.0, %v2940
    %v2942 = vmul.f32 %v2921, %v2899
    %v2943 = vadd.f32 %v2731, %v2942
    %v2944 = vtanh.pop %v2943
    %v2945 = vsub.f32 1.0, %v2941
    %v2946 = vmul.f32 %v2945, %v2944
    %v2947 = vmul.f32 %v2941, 0.0
    %v2948 = vadd.f32 %v2946, %v2947
    %v2949 = vsel %vm400, %v2621, %v2634
    %v2950 = vsel %vm401, %v2650, %v2663
    %v2951 = vsel %vm402, %v2679, %v2692
    %v2952 = vpack.c.bf16 %v2948, %v2948
    %2953 = vmatpush.bf16.msra.mxu0 %v2836
    %2954 = vmatpush.bf16.msra.mxu0 %v2833
    %2955 = vmatpush.bf16.msra.mxu0 %v2830
    %2956 = vmatpush.bf16.msra.mxu0 %v2827
    %2957 = vmatpush.bf16.msra.mxu0 %v2824
    %2958 = vmatpush.bf16.msra.mxu0 %v2821
    %2959 = vmatpush.bf16.msra.mxu0 %v2818
    %2960 = vmatpush.bf16.msra.mxu0 %v2815
    %2961 = vmatmul.bf16.gmra.mxu0 %v2952
    %v2962 = vpop.f32.mrf.mxu0
    %v2963 = vadd.f32 %v2732, %v2962
    %v2964 = vpop.f32.mrf.mxu0
    %2965 = vdwg.mxu0
    %2966 = vmatpush.bf16.msra.mxu0 %v2837
    %2967 = vmatpush.bf16.msra.mxu0 %v2834
    %2968 = vmatpush.bf16.msra.mxu0 %v2831
    %2969 = vmatpush.bf16.msra.mxu0 %v2828
    %2970 = vmatpush.bf16.msra.mxu0 %v2825
    %2971 = vmatpush.bf16.msra.mxu0 %v2822
    %2972 = vmatpush.bf16.msra.mxu0 %v2819
    %2973 = vmatpush.bf16.msra.mxu0 %v2816
    %2974 = vmatmul.bf16.gmra.mxu0 %v2952
    %v2975 = vpop.f32.mrf.mxu0
    %v2976 = vadd.f32 %v2733, %v2975
    %v2977 = vpop.f32.mrf.mxu0
    %2978 = vdwg.mxu0
    %2979 = vmatpush.bf16.msra.mxu0 %v2838
    %2980 = vmatpush.bf16.msra.mxu0 %v2835
    %2981 = vmatpush.bf16.msra.mxu0 %v2832
    %2982 = vmatpush.bf16.msra.mxu0 %v2829
    %2983 = vmatpush.bf16.msra.mxu0 %v2826
    %2984 = vmatpush.bf16.msra.mxu0 %v2823
    %2985 = vmatpush.bf16.msra.mxu0 %v2820
    %2986 = vmatpush.bf16.msra.mxu0 %v2817
    %2987 = vmatmul.bf16.gmra.mxu0 %v2952
    %v2988 = vpop.f32.mrf.mxu0
    %v2989 = vadd.f32 %v2734, %v2988
    %v2990 = vpop.f32.mrf.mxu0
    %2991 = vdwg.mxu0
    %v2992 = vadd.f32 %v2949, %v2963
    %v2993 = vxor.u32 %v2992, 2147483648
    %v2994 = vmul.f32 %v2993, 1.442695
    %v2995 = vpow.pop %v2994
    %v2996 = vadd.f32 %v2995, 1.0
    %v2997 = vrcp.pop %v2996
    %v2998 = vmul.f32 %v2996, %v2997
    %v2999 = vsub.f32 1.0, %v2998
    %v3000 = vmul.f32 %v2997, %v2999
    %v3001 = vadd.f32 %v2997, %v3000
    %vm3002 = vweird.f32 %v2996
    %vm3003 = vweird.f32 %v2997
    %vm3004 = vmor %vm3002, %vm3003
    %v3005 = vsel %vm3004, %v2997, %v3001
    %v3006 = vand.u32 2147483647, %v2996
    %vm3007 = vcmp.eq.f32.partialorder %v3006, 8.507059e+37
    %v3008 = vand.u32 %v2996, 2147483648
    %v3009 = vor.u32 1.1754944e-38, %v3008
    %v3010 = vsel %vm3007, %v3009, %v3005
    %v3011 = vmul.f32 1.0, %v3010
    %v3012 = vadd.f32 %v2950, %v2976
    %v3013 = vxor.u32 %v3012, 2147483648
    %v3014 = vmul.f32 %v3013, 1.442695
    %v3015 = vpow.pop %v3014
    %v3016 = vadd.f32 %v3015, 1.0
    %v3017 = vrcp.pop %v3016
    %v3018 = vmul.f32 %v3016, %v3017
    %v3019 = vsub.f32 1.0, %v3018
    %v3020 = vmul.f32 %v3017, %v3019
    %v3021 = vadd.f32 %v3017, %v3020
    %vm3022 = vweird.f32 %v3016
    %vm3023 = vweird.f32 %v3017
    %vm3024 = vmor %vm3022, %vm3023
    %v3025 = vsel %vm3024, %v3017, %v3021
    %v3026 = vand.u32 2147483647, %v3016
    %vm3027 = vcmp.eq.f32.partialorder %v3026, 8.507059e+37
    %v3028 = vand.u32 %v3016, 2147483648
    %v3029 = vor.u32 1.1754944e-38, %v3028
    %v3030 = vsel %vm3027, %v3029, %v3025
    %v3031 = vmul.f32 1.0, %v3030
    %v3032 = vmul.f32 %v3011, %v2989
    %v3033 = vadd.f32 %v2951, %v3032
    %v3034 = vtanh.pop %v3033
    %v3035 = vsub.f32 1.0, %v3031
    %v3036 = vmul.f32 %v3035, %v3034
    %v3037 = vmul.f32 %v3031, %v2948
    %v3038 = vadd.f32 %v3036, %v3037
    %v3039 = vsel %vm400, %v2624, %v2631
    %v3040 = vsel %vm401, %v2653, %v2660
    %v3041 = vsel %vm402, %v2682, %v2689
    %v3042 = vpack.c.bf16 %v3038, %v3038
    %3043 = vmatpush.bf16.msra.mxu0 %v2836
    %3044 = vmatpush.bf16.msra.mxu0 %v2833
    %3045 = vmatpush.bf16.msra.mxu0 %v2830
    %3046 = vmatpush.bf16.msra.mxu0 %v2827
    %3047 = vmatpush.bf16.msra.mxu0 %v2824
    %3048 = vmatpush.bf16.msra.mxu0 %v2821
    %3049 = vmatpush.bf16.msra.mxu0 %v2818
    %3050 = vmatpush.bf16.msra.mxu0 %v2815
    %3051 = vmatmul.bf16.gmra.mxu0 %v3042
    %v3052 = vpop.f32.mrf.mxu0
    %v3053 = vadd.f32 %v2732, %v3052
    %v3054 = vpop.f32.mrf.mxu0
    %3055 = vdwg.mxu0
    %3056 = vmatpush.bf16.msra.mxu0 %v2837
    %3057 = vmatpush.bf16.msra.mxu0 %v2834
    %3058 = vmatpush.bf16.msra.mxu0 %v2831
    %3059 = vmatpush.bf16.msra.mxu0 %v2828
    %3060 = vmatpush.bf16.msra.mxu0 %v2825
    %3061 = vmatpush.bf16.msra.mxu0 %v2822
    %3062 = vmatpush.bf16.msra.mxu0 %v2819
    %3063 = vmatpush.bf16.msra.mxu0 %v2816
    %3064 = vmatmul.bf16.gmra.mxu0 %v3042
    %v3065 = vpop.f32.mrf.mxu0
    %v3066 = vadd.f32 %v2733, %v3065
    %v3067 = vpop.f32.mrf.mxu0
    %3068 = vdwg.mxu0
    %3069 = vmatpush.bf16.msra.mxu0 %v2838
    %3070 = vmatpush.bf16.msra.mxu0 %v2835
    %3071 = vmatpush.bf16.msra.mxu0 %v2832
    %3072 = vmatpush.bf16.msra.mxu0 %v2829
    %3073 = vmatpush.bf16.msra.mxu0 %v2826
    %3074 = vmatpush.bf16.msra.mxu0 %v2823
    %3075 = vmatpush.bf16.msra.mxu0 %v2820
    %3076 = vmatpush.bf16.msra.mxu0 %v2817
    %3077 = vmatmul.bf16.gmra.mxu0 %v3042
    %v3078 = vpop.f32.mrf.mxu0
    %v3079 = vadd.f32 %v2734, %v3078
    %v3080 = vpop.f32.mrf.mxu0
    %3081 = vdwg.mxu0
    %v3082 = vadd.f32 %v3039, %v3053
    %v3083 = vxor.u32 %v3082, 2147483648
    %v3084 = vmul.f32 %v3083, 1.442695
    %v3085 = vpow.pop %v3084
    %v3086 = vadd.f32 %v3085, 1.0
    %v3087 = vrcp.pop %v3086
    %v3088 = vmul.f32 %v3086, %v3087
    %v3089 = vsub.f32 1.0, %v3088
    %v3090 = vmul.f32 %v3087, %v3089
    %v3091 = vadd.f32 %v3087, %v3090
    %vm3092 = vweird.f32 %v3086
    %vm3093 = vweird.f32 %v3087
    %vm3094 = vmor %vm3092, %vm3093
    %v3095 = vsel %vm3094, %v3087, %v3091
    %v3096 = vand.u32 2147483647, %v3086
    %vm3097 = vcmp.eq.f32.partialorder %v3096, 8.507059e+37
    %v3098 = vand.u32 %v3086, 2147483648
    %v3099 = vor.u32 1.1754944e-38, %v3098
    %v3100 = vsel %vm3097, %v3099, %v3095
    %v3101 = vmul.f32 1.0, %v3100
    %v3102 = vadd.f32 %v3040, %v3066
    %v3103 = vxor.u32 %v3102, 2147483648
    %v3104 = vmul.f32 %v3103, 1.442695
    %v3105 = vpow.pop %v3104
    %v3106 = vadd.f32 %v3105, 1.0
    %v3107 = vrcp.pop %v3106
    %v3108 = vmul.f32 %v3106, %v3107
    %v3109 = vsub.f32 1.0, %v3108
    %v3110 = vmul.f32 %v3107, %v3109
    %v3111 = vadd.f32 %v3107, %v3110
    %vm3112 = vweird.f32 %v3106
    %vm3113 = vweird.f32 %v3107
    %vm3114 = vmor %vm3112, %vm3113
    %v3115 = vsel %vm3114, %v3107, %v3111
    %v3116 = vand.u32 2147483647, %v3106
    %vm3117 = vcmp.eq.f32.partialorder %v3116, 8.507059e+37
    %v3118 = vand.u32 %v3106, 2147483648
    %v3119 = vor.u32 1.1754944e-38, %v3118
    %v3120 = vsel %vm3117, %v3119, %v3115
    %v3121 = vmul.f32 1.0, %v3120
    %v3122 = vmul.f32 %v3101, %v3079
    %v3123 = vadd.f32 %v3041, %v3122
    %v3124 = vtanh.pop %v3123
    %v3125 = vsub.f32 1.0, %v3121
    %v3126 = vmul.f32 %v3125, %v3124
    %v3127 = vmul.f32 %v3121, %v3038
    %v3128 = vadd.f32 %v3126, %v3127
    %v3129 = vsel %vm400, %v2626, %v2629
    %v3130 = vsel %vm401, %v2655, %v2658
    %v3131 = vsel %vm402, %v2684, %v2687
    %v3132 = vpack.c.bf16 %v3128, %v3128
    %3133 = vmatpush.bf16.msra.mxu0 %v2836
    %3134 = vmatpush.bf16.msra.mxu0 %v2833
    %3135 = vmatpush.bf16.msra.mxu0 %v2830
    %3136 = vmatpush.bf16.msra.mxu0 %v2827
    %3137 = vmatpush.bf16.msra.mxu0 %v2824
    %3138 = vmatpush.bf16.msra.mxu0 %v2821
    %3139 = vmatpush.bf16.msra.mxu0 %v2818
    %3140 = vmatpush.bf16.msra.mxu0 %v2815
    %3141 = vmatmul.bf16.gmra.mxu0 %v3132
    %v3142 = vpop.f32.mrf.mxu0
    %v3143 = vadd.f32 %v2732, %v3142
    %v3144 = vpop.f32.mrf.mxu0
    %3145 = vdwg.mxu0
    %3146 = vmatpush.bf16.msra.mxu0 %v2837
    %3147 = vmatpush.bf16.msra.mxu0 %v2834
    %3148 = vmatpush.bf16.msra.mxu0 %v2831
    %3149 = vmatpush.bf16.msra.mxu0 %v2828
    %3150 = vmatpush.bf16.msra.mxu0 %v2825
    %3151 = vmatpush.bf16.msra.mxu0 %v2822
    %3152 = vmatpush.bf16.msra.mxu0 %v2819
    %3153 = vmatpush.bf16.msra.mxu0 %v2816
    %3154 = vmatmul.bf16.gmra.mxu0 %v3132
    %v3155 = vpop.f32.mrf.mxu0
    %v3156 = vadd.f32 %v2733, %v3155
    %v3157 = vpop.f32.mrf.mxu0
    %3158 = vdwg.mxu0
    %3159 = vmatpush.bf16.msra.mxu0 %v2838
    %3160 = vmatpush.bf16.msra.mxu0 %v2835
    %3161 = vmatpush.bf16.msra.mxu0 %v2832
    %3162 = vmatpush.bf16.msra.mxu0 %v2829
    %3163 = vmatpush.bf16.msra.mxu0 %v2826
    %3164 = vmatpush.bf16.msra.mxu0 %v2823
    %3165 = vmatpush.bf16.msra.mxu0 %v2820
    %3166 = vmatpush.bf16.msra.mxu0 %v2817
    %3167 = vmatmul.bf16.gmra.mxu0 %v3132
    %v3168 = vpop.f32.mrf.mxu0
    %v3169 = vadd.f32 %v2734, %v3168
    %v3170 = vpop.f32.mrf.mxu0
    %3171 = vdwg.mxu0
    %v3172 = vadd.f32 %v3129, %v3143
    %v3173 = vxor.u32 %v3172, 2147483648
    %v3174 = vmul.f32 %v3173, 1.442695
    %v3175 = vpow.pop %v3174
    %v3176 = vadd.f32 %v3175, 1.0
    %v3177 = vrcp.pop %v3176
    %v3178 = vmul.f32 %v3176, %v3177
    %v3179 = vsub.f32 1.0, %v3178
    %v3180 = vmul.f32 %v3177, %v3179
    %v3181 = vadd.f32 %v3177, %v3180
    %vm3182 = vweird.f32 %v3176
    %vm3183 = vweird.f32 %v3177
    %vm3184 = vmor %vm3182, %vm3183
    %v3185 = vsel %vm3184, %v3177, %v3181
    %v3186 = vand.u32 2147483647, %v3176
    %vm3187 = vcmp.eq.f32.partialorder %v3186, 8.507059e+37
    %v3188 = vand.u32 %v3176, 2147483648
    %v3189 = vor.u32 1.1754944e-38, %v3188
    %v3190 = vsel %vm3187, %v3189, %v3185
    %v3191 = vmul.f32 1.0, %v3190
    %v3192 = vadd.f32 %v3130, %v3156
    %v3193 = vxor.u32 %v3192, 2147483648
    %v3194 = vmul.f32 %v3193, 1.442695
    %v3195 = vpow.pop %v3194
    %v3196 = vadd.f32 %v3195, 1.0
    %v3197 = vrcp.pop %v3196
    %v3198 = vmul.f32 %v3196, %v3197
    %v3199 = vsub.f32 1.0, %v3198
    %v3200 = vmul.f32 %v3197, %v3199
    %v3201 = vadd.f32 %v3197, %v3200
    %vm3202 = vweird.f32 %v3196
    %vm3203 = vweird.f32 %v3197
    %vm3204 = vmor %vm3202, %vm3203
    %v3205 = vsel %vm3204, %v3197, %v3201
    %v3206 = vand.u32 2147483647, %v3196
    %vm3207 = vcmp.eq.f32.partialorder %v3206, 8.507059e+37
    %v3208 = vand.u32 %v3196, 2147483648
    %v3209 = vor.u32 1.1754944e-38, %v3208
    %v3210 = vsel %vm3207, %v3209, %v3205
    %v3211 = vmul.f32 1.0, %v3210
    %v3212 = vmul.f32 %v3191, %v3169
    %v3213 = vadd.f32 %v3131, %v3212
    %v3214 = vtanh.pop %v3213
    %v3215 = vsub.f32 1.0, %v3211
    %v3216 = vmul.f32 %v3215, %v3214
    %v3217 = vmul.f32 %v3211, %v3128
    %v3218 = vadd.f32 %v3216, %v3217
    %v3219 = vsel %vm400, %v2629, %v2626
    %v3220 = vsel %vm401, %v2658, %v2655
    %v3221 = vsel %vm402, %v2687, %v2684
    %v3222 = vpack.c.bf16 %v3218, %v3218
    %3223 = vmatpush.bf16.msra.mxu0 %v2836
    %3224 = vmatpush.bf16.msra.mxu0 %v2833
    %3225 = vmatpush.bf16.msra.mxu0 %v2830
    %3226 = vmatpush.bf16.msra.mxu0 %v2827
    %3227 = vmatpush.bf16.msra.mxu0 %v2824
    %3228 = vmatpush.bf16.msra.mxu0 %v2821
    %3229 = vmatpush.bf16.msra.mxu0 %v2818
    %3230 = vmatpush.bf16.msra.mxu0 %v2815
    %3231 = vmatmul.bf16.gmra.mxu0 %v3222
    %v3232 = vpop.f32.mrf.mxu0
    %v3233 = vadd.f32 %v2732, %v3232
    %v3234 = vpop.f32.mrf.mxu0
    %3235 = vdwg.mxu0
    %3236 = vmatpush.bf16.msra.mxu0 %v2837
    %3237 = vmatpush.bf16.msra.mxu0 %v2834
    %3238 = vmatpush.bf16.msra.mxu0 %v2831
    %3239 = vmatpush.bf16.msra.mxu0 %v2828
    %3240 = vmatpush.bf16.msra.mxu0 %v2825
    %3241 = vmatpush.bf16.msra.mxu0 %v2822
    %3242 = vmatpush.bf16.msra.mxu0 %v2819
    %3243 = vmatpush.bf16.msra.mxu0 %v2816
    %3244 = vmatmul.bf16.gmra.mxu0 %v3222
    %v3245 = vpop.f32.mrf.mxu0
    %v3246 = vadd.f32 %v2733, %v3245
    %v3247 = vpop.f32.mrf.mxu0
    %3248 = vdwg.mxu0
    %3249 = vmatpush.bf16.msra.mxu0 %v2838
    %3250 = vmatpush.bf16.msra.mxu0 %v2835
    %3251 = vmatpush.bf16.msra.mxu0 %v2832
    %3252 = vmatpush.bf16.msra.mxu0 %v2829
    %3253 = vmatpush.bf16.msra.mxu0 %v2826
    %3254 = vmatpush.bf16.msra.mxu0 %v2823
    %3255 = vmatpush.bf16.msra.mxu0 %v2820
    %3256 = vmatpush.bf16.msra.mxu0 %v2817
    %3257 = vmatmul.bf16.gmra.mxu0 %v3222
    %v3258 = vpop.f32.mrf.mxu0
    %v3259 = vadd.f32 %v2734, %v3258
    %v3260 = vpop.f32.mrf.mxu0
    %3261 = vdwg.mxu0
    %v3262 = vadd.f32 %v3219, %v3233
    %v3263 = vxor.u32 %v3262, 2147483648
    %v3264 = vmul.f32 %v3263, 1.442695
    %v3265 = vpow.pop %v3264
    %v3266 = vadd.f32 %v3265, 1.0
    %v3267 = vrcp.pop %v3266
    %v3268 = vmul.f32 %v3266, %v3267
    %v3269 = vsub.f32 1.0, %v3268
    %v3270 = vmul.f32 %v3267, %v3269
    %v3271 = vadd.f32 %v3267, %v3270
    %vm3272 = vweird.f32 %v3266
    %vm3273 = vweird.f32 %v3267
    %vm3274 = vmor %vm3272, %vm3273
    %v3275 = vsel %vm3274, %v3267, %v3271
    %v3276 = vand.u32 2147483647, %v3266
    %vm3277 = vcmp.eq.f32.partialorder %v3276, 8.507059e+37
    %v3278 = vand.u32 %v3266, 2147483648
    %v3279 = vor.u32 1.1754944e-38, %v3278
    %v3280 = vsel %vm3277, %v3279, %v3275
    %v3281 = vmul.f32 1.0, %v3280
    %v3282 = vadd.f32 %v3220, %v3246
    %v3283 = vxor.u32 %v3282, 2147483648
    %v3284 = vmul.f32 %v3283, 1.442695
    %v3285 = vpow.pop %v3284
    %v3286 = vadd.f32 %v3285, 1.0
    %v3287 = vrcp.pop %v3286
    %v3288 = vmul.f32 %v3286, %v3287
    %v3289 = vsub.f32 1.0, %v3288
    %v3290 = vmul.f32 %v3287, %v3289
    %v3291 = vadd.f32 %v3287, %v3290
    %vm3292 = vweird.f32 %v3286
    %vm3293 = vweird.f32 %v3287
    %vm3294 = vmor %vm3292, %vm3293
    %v3295 = vsel %vm3294, %v3287, %v3291
    %v3296 = vand.u32 2147483647, %v3286
    %vm3297 = vcmp.eq.f32.partialorder %v3296, 8.507059e+37
    %v3298 = vand.u32 %v3286, 2147483648
    %v3299 = vor.u32 1.1754944e-38, %v3298
    %v3300 = vsel %vm3297, %v3299, %v3295
    %v3301 = vmul.f32 1.0, %v3300
    %v3302 = vmul.f32 %v3281, %v3259
    %v3303 = vadd.f32 %v3221, %v3302
    %v3304 = vtanh.pop %v3303
    %v3305 = vsub.f32 1.0, %v3301
    %v3306 = vmul.f32 %v3305, %v3304
    %v3307 = vmul.f32 %v3301, %v3218
    %v3308 = vadd.f32 %v3306, %v3307
    %v3309 = vsel %vm400, %v2631, %v2624
    %v3310 = vsel %vm401, %v2660, %v2653
    %v3311 = vsel %vm402, %v2689, %v2682
    %v3312 = vpack.c.bf16 %v3308, %v3308
    %3313 = vmatpush.bf16.msra.mxu0 %v2836
    %3314 = vmatpush.bf16.msra.mxu0 %v2833
    %3315 = vmatpush.bf16.msra.mxu0 %v2830
    %3316 = vmatpush.bf16.msra.mxu0 %v2827
    %3317 = vmatpush.bf16.msra.mxu0 %v2824
    %3318 = vmatpush.bf16.msra.mxu0 %v2821
    %3319 = vmatpush.bf16.msra.mxu0 %v2818
    %3320 = vmatpush.bf16.msra.mxu0 %v2815
    %3321 = vmatmul.bf16.gmra.mxu0 %v3312
    %v3322 = vpop.f32.mrf.mxu0
    %v3323 = vadd.f32 %v2732, %v3322
    %v3324 = vpop.f32.mrf.mxu0
    %3325 = vdwg.mxu0
    %3326 = vmatpush.bf16.msra.mxu0 %v2837
    %3327 = vmatpush.bf16.msra.mxu0 %v2834
    %3328 = vmatpush.bf16.msra.mxu0 %v2831
    %3329 = vmatpush.bf16.msra.mxu0 %v2828
    %3330 = vmatpush.bf16.msra.mxu0 %v2825
    %3331 = vmatpush.bf16.msra.mxu0 %v2822
    %3332 = vmatpush.bf16.msra.mxu0 %v2819
    %3333 = vmatpush.bf16.msra.mxu0 %v2816
    %3334 = vmatmul.bf16.gmra.mxu0 %v3312
    %v3335 = vpop.f32.mrf.mxu0
    %v3336 = vadd.f32 %v2733, %v3335
    %v3337 = vpop.f32.mrf.mxu0
    %3338 = vdwg.mxu0
    %3339 = vmatpush.bf16.msra.mxu0 %v2838
    %3340 = vmatpush.bf16.msra.mxu0 %v2835
    %3341 = vmatpush.bf16.msra.mxu0 %v2832
    %3342 = vmatpush.bf16.msra.mxu0 %v2829
    %3343 = vmatpush.bf16.msra.mxu0 %v2826
    %3344 = vmatpush.bf16.msra.mxu0 %v2823
    %3345 = vmatpush.bf16.msra.mxu0 %v2820
    %3346 = vmatpush.bf16.msra.mxu0 %v2817
    %3347 = vmatmul.bf16.gmra.mxu0 %v3312
    %v3348 = vpop.f32.mrf.mxu0
    %v3349 = vadd.f32 %v2734, %v3348
    %v3350 = vpop.f32.mrf.mxu0
    %3351 = vdwg.mxu0
    %v3352 = vadd.f32 %v3309, %v3323
    %v3353 = vxor.u32 %v3352, 2147483648
    %v3354 = vmul.f32 %v3353, 1.442695
    %v3355 = vpow.pop %v3354
    %v3356 = vadd.f32 %v3355, 1.0
    %v3357 = vrcp.pop %v3356
    %v3358 = vmul.f32 %v3356, %v3357
    %v3359 = vsub.f32 1.0, %v3358
    %v3360 = vmul.f32 %v3357, %v3359
    %v3361 = vadd.f32 %v3357, %v3360
    %vm3362 = vweird.f32 %v3356
    %vm3363 = vweird.f32 %v3357
    %vm3364 = vmor %vm3362, %vm3363
    %v3365 = vsel %vm3364, %v3357, %v3361
    %v3366 = vand.u32 2147483647, %v3356
    %vm3367 = vcmp.eq.f32.partialorder %v3366, 8.507059e+37
    %v3368 = vand.u32 %v3356, 2147483648
    %v3369 = vor.u32 1.1754944e-38, %v3368
    %v3370 = vsel %vm3367, %v3369, %v3365
    %v3371 = vmul.f32 1.0, %v3370
    %v3372 = vadd.f32 %v3310, %v3336
    %v3373 = vxor.u32 %v3372, 2147483648
    %v3374 = vmul.f32 %v3373, 1.442695
    %v3375 = vpow.pop %v3374
    %v3376 = vadd.f32 %v3375, 1.0
    %v3377 = vrcp.pop %v3376
    %v3378 = vmul.f32 %v3376, %v3377
    %v3379 = vsub.f32 1.0, %v3378
    %v3380 = vmul.f32 %v3377, %v3379
    %v3381 = vadd.f32 %v3377, %v3380
    %vm3382 = vweird.f32 %v3376
    %vm3383 = vweird.f32 %v3377
    %vm3384 = vmor %vm3382, %vm3383
    %v3385 = vsel %vm3384, %v3377, %v3381
    %v3386 = vand.u32 2147483647, %v3376
    %vm3387 = vcmp.eq.f32.partialorder %v3386, 8.507059e+37
    %v3388 = vand.u32 %v3376, 2147483648
    %v3389 = vor.u32 1.1754944e-38, %v3388
    %v3390 = vsel %vm3387, %v3389, %v3385
    %v3391 = vmul.f32 1.0, %v3390
    %v3392 = vmul.f32 %v3371, %v3349
    %v3393 = vadd.f32 %v3311, %v3392
    %v3394 = vtanh.pop %v3393
    %v3395 = vsub.f32 1.0, %v3391
    %v3396 = vmul.f32 %v3395, %v3394
    %v3397 = vmul.f32 %v3391, %v3308
    %v3398 = vadd.f32 %v3396, %v3397
    %v3399 = vsel %vm400, %v2634, %v2621
    %v3400 = vsel %vm401, %v2663, %v2650
    %v3401 = vsel %vm402, %v2692, %v2679
    %v3402 = vpack.c.bf16 %v3398, %v3398
    %3403 = vmatpush.bf16.msra.mxu0 %v2836
    %3404 = vmatpush.bf16.msra.mxu0 %v2833
    %3405 = vmatpush.bf16.msra.mxu0 %v2830
    %3406 = vmatpush.bf16.msra.mxu0 %v2827
    %3407 = vmatpush.bf16.msra.mxu0 %v2824
    %3408 = vmatpush.bf16.msra.mxu0 %v2821
    %3409 = vmatpush.bf16.msra.mxu0 %v2818
    %3410 = vmatpush.bf16.msra.mxu0 %v2815
    %3411 = vmatmul.bf16.gmra.mxu0 %v3402
    %v3412 = vpop.f32.mrf.mxu0
    %v3413 = vadd.f32 %v2732, %v3412
    %v3414 = vpop.f32.mrf.mxu0
    %3415 = vdwg.mxu0
    %3416 = vmatpush.bf16.msra.mxu0 %v2837
    %3417 = vmatpush.bf16.msra.mxu0 %v2834
    %3418 = vmatpush.bf16.msra.mxu0 %v2831
    %3419 = vmatpush.bf16.msra.mxu0 %v2828
    %3420 = vmatpush.bf16.msra.mxu0 %v2825
    %3421 = vmatpush.bf16.msra.mxu0 %v2822
    %3422 = vmatpush.bf16.msra.mxu0 %v2819
    %3423 = vmatpush.bf16.msra.mxu0 %v2816
    %3424 = vmatmul.bf16.gmra.mxu0 %v3402
    %v3425 = vpop.f32.mrf.mxu0
    %v3426 = vadd.f32 %v2733, %v3425
    %v3427 = vpop.f32.mrf.mxu0
    %3428 = vdwg.mxu0
    %3429 = vmatpush.bf16.msra.mxu0 %v2838
    %3430 = vmatpush.bf16.msra.mxu0 %v2835
    %3431 = vmatpush.bf16.msra.mxu0 %v2832
    %3432 = vmatpush.bf16.msra.mxu0 %v2829
    %3433 = vmatpush.bf16.msra.mxu0 %v2826
    %3434 = vmatpush.bf16.msra.mxu0 %v2823
    %3435 = vmatpush.bf16.msra.mxu0 %v2820
    %3436 = vmatpush.bf16.msra.mxu0 %v2817
    %3437 = vmatmul.bf16.gmra.mxu0 %v3402
    %v3438 = vpop.f32.mrf.mxu0
    %v3439 = vadd.f32 %v2734, %v3438
    %v3440 = vpop.f32.mrf.mxu0
    %3441 = vdwg.mxu0
    %v3442 = vadd.f32 %v3399, %v3413
    %v3443 = vxor.u32 %v3442, 2147483648
    %v3444 = vmul.f32 %v3443, 1.442695
    %v3445 = vpow.pop %v3444
    %v3446 = vadd.f32 %v3445, 1.0
    %v3447 = vrcp.pop %v3446
    %v3448 = vmul.f32 %v3446, %v3447
    %v3449 = vsub.f32 1.0, %v3448
    %v3450 = vmul.f32 %v3447, %v3449
    %v3451 = vadd.f32 %v3447, %v3450
    %vm3452 = vweird.f32 %v3446
    %vm3453 = vweird.f32 %v3447
    %vm3454 = vmor %vm3452, %vm3453
    %v3455 = vsel %vm3454, %v3447, %v3451
    %v3456 = vand.u32 2147483647, %v3446
    %vm3457 = vcmp.eq.f32.partialorder %v3456, 8.507059e+37
    %v3458 = vand.u32 %v3446, 2147483648
    %v3459 = vor.u32 1.1754944e-38, %v3458
    %v3460 = vsel %vm3457, %v3459, %v3455
    %v3461 = vmul.f32 1.0, %v3460
    %v3462 = vadd.f32 %v3400, %v3426
    %v3463 = vxor.u32 %v3462, 2147483648
    %v3464 = vmul.f32 %v3463, 1.442695
    %v3465 = vpow.pop %v3464
    %v3466 = vadd.f32 %v3465, 1.0
    %v3467 = vrcp.pop %v3466
    %v3468 = vmul.f32 %v3466, %v3467
    %v3469 = vsub.f32 1.0, %v3468
    %v3470 = vmul.f32 %v3467, %v3469
    %v3471 = vadd.f32 %v3467, %v3470
    %vm3472 = vweird.f32 %v3466
    %vm3473 = vweird.f32 %v3467
    %vm3474 = vmor %vm3472, %vm3473
    %v3475 = vsel %vm3474, %v3467, %v3471
    %v3476 = vand.u32 2147483647, %v3466
    %vm3477 = vcmp.eq.f32.partialorder %v3476, 8.507059e+37
    %v3478 = vand.u32 %v3466, 2147483648
    %v3479 = vor.u32 1.1754944e-38, %v3478
    %v3480 = vsel %vm3477, %v3479, %v3475
    %v3481 = vmul.f32 1.0, %v3480
    %v3482 = vmul.f32 %v3461, %v3439
    %v3483 = vadd.f32 %v3401, %v3482
    %v3484 = vtanh.pop %v3483
    %v3485 = vsub.f32 1.0, %v3481
    %v3486 = vmul.f32 %v3485, %v3484
    %v3487 = vmul.f32 %v3481, %v3398
    %v3488 = vadd.f32 %v3486, %v3487
    %v3489 = vsel %vm400, %v2636, %v2619
    %v3490 = vsel %vm401, %v2665, %v2648
    %v3491 = vsel %vm402, %v2694, %v2677
    %v3492 = vpack.c.bf16 %v3488, %v3488
    %3493 = vmatpush.bf16.msra.mxu0 %v2836
    %3494 = vmatpush.bf16.msra.mxu0 %v2833
    %3495 = vmatpush.bf16.msra.mxu0 %v2830
    %3496 = vmatpush.bf16.msra.mxu0 %v2827
    %3497 = vmatpush.bf16.msra.mxu0 %v2824
    %3498 = vmatpush.bf16.msra.mxu0 %v2821
    %3499 = vmatpush.bf16.msra.mxu0 %v2818
    %3500 = vmatpush.bf16.msra.mxu0 %v2815
    %3501 = vmatmul.bf16.gmra.mxu0 %v3492
    %v3502 = vpop.f32.mrf.mxu0
    %v3503 = vadd.f32 %v2732, %v3502
    %v3504 = vpop.f32.mrf.mxu0
    %3505 = vdwg.mxu0
    %3506 = vmatpush.bf16.msra.mxu0 %v2837
    %3507 = vmatpush.bf16.msra.mxu0 %v2834
    %3508 = vmatpush.bf16.msra.mxu0 %v2831
    %3509 = vmatpush.bf16.msra.mxu0 %v2828
    %3510 = vmatpush.bf16.msra.mxu0 %v2825
    %3511 = vmatpush.bf16.msra.mxu0 %v2822
    %3512 = vmatpush.bf16.msra.mxu0 %v2819
    %3513 = vmatpush.bf16.msra.mxu0 %v2816
    %3514 = vmatmul.bf16.gmra.mxu0 %v3492
    %v3515 = vpop.f32.mrf.mxu0
    %v3516 = vadd.f32 %v2733, %v3515
    %v3517 = vpop.f32.mrf.mxu0
    %3518 = vdwg.mxu0
    %3519 = vmatpush.bf16.msra.mxu0 %v2838
    %3520 = vmatpush.bf16.msra.mxu0 %v2835
    %3521 = vmatpush.bf16.msra.mxu0 %v2832
    %3522 = vmatpush.bf16.msra.mxu0 %v2829
    %3523 = vmatpush.bf16.msra.mxu0 %v2826
    %3524 = vmatpush.bf16.msra.mxu0 %v2823
    %3525 = vmatpush.bf16.msra.mxu0 %v2820
    %3526 = vmatpush.bf16.msra.mxu0 %v2817
    %3527 = vmatmul.bf16.gmra.mxu0 %v3492
    %v3528 = vpop.f32.mrf.mxu0
    %v3529 = vadd.f32 %v2734, %v3528
    %v3530 = vpop.f32.mrf.mxu0
    %3531 = vdwg.mxu0
    %v3532 = vadd.f32 %v3489, %v3503
    %v3533 = vxor.u32 %v3532, 2147483648
    %v3534 = vmul.f32 %v3533, 1.442695
    %v3535 = vpow.pop %v3534
    %v3536 = vadd.f32 %v3535, 1.0
    %v3537 = vrcp.pop %v3536
    %v3538 = vmul.f32 %v3536, %v3537
    %v3539 = vsub.f32 1.0, %v3538
    %v3540 = vmul.f32 %v3537, %v3539
    %v3541 = vadd.f32 %v3537, %v3540
    %vm3542 = vweird.f32 %v3536
    %vm3543 = vweird.f32 %v3537
    %vm3544 = vmor %vm3542, %vm3543
    %v3545 = vsel %vm3544, %v3537, %v3541
    %v3546 = vand.u32 2147483647, %v3536
    %vm3547 = vcmp.eq.f32.partialorder %v3546, 8.507059e+37
    %v3548 = vand.u32 %v3536, 2147483648
    %v3549 = vor.u32 1.1754944e-38, %v3548
    %v3550 = vsel %vm3547, %v3549, %v3545
    %v3551 = vmul.f32 1.0, %v3550
    %v3552 = vadd.f32 %v3490, %v3516
    %v3553 = vxor.u32 %v3552, 2147483648
    %v3554 = vmul.f32 %v3553, 1.442695
    %v3555 = vpow.pop %v3554
    %v3556 = vadd.f32 %v3555, 1.0
    %v3557 = vrcp.pop %v3556
    %v3558 = vmul.f32 %v3556, %v3557
    %v3559 = vsub.f32 1.0, %v3558
    %v3560 = vmul.f32 %v3557, %v3559
    %v3561 = vadd.f32 %v3557, %v3560
    %vm3562 = vweird.f32 %v3556
    %vm3563 = vweird.f32 %v3557
    %vm3564 = vmor %vm3562, %vm3563
    %v3565 = vsel %vm3564, %v3557, %v3561
    %v3566 = vand.u32 2147483647, %v3556
    %vm3567 = vcmp.eq.f32.partialorder %v3566, 8.507059e+37
    %v3568 = vand.u32 %v3556, 2147483648
    %v3569 = vor.u32 1.1754944e-38, %v3568
    %v3570 = vsel %vm3567, %v3569, %v3565
    %v3571 = vmul.f32 1.0, %v3570
    %v3572 = vmul.f32 %v3551, %v3529
    %v3573 = vadd.f32 %v3491, %v3572
    %v3574 = vtanh.pop %v3573
    %v3575 = vsub.f32 1.0, %v3571
    %v3576 = vmul.f32 %v3575, %v3574
    %v3577 = vmul.f32 %v3571, %v3488
    %v3578 = vadd.f32 %v3576, %v3577
    %3580 = vrot.lane.b32.xlu0 %v2948, 96
    %v3581 = vpop.permute.xlu0 %3580
    %vm3583 = vcmask 261120
    %v3584 = vsel %vm3583, %v3578, %v3581
    %3586 = vrot.lane.b32.xlu0 %v3578, 96
    %v3587 = vpop.permute.xlu0 %3586
    %3589 = vrot.lane.b32.xlu0 %v2948, 64
    %v3590 = vpop.permute.xlu0 %3589
    %v3592 = vsel %vm3583, %v3587, %v3590
    %v3593 = vld [vmem:[%s3] sm:$0x3]
    %v3594 = vsel %vm623, %v3584, 0.0
    %3595 = vadd.xlane.f32.xlu0 %v3594
    %v3596 = vpop.xlane.xlu0 %3595
    %v3597 = vrcp.pop 64.0
    %v3598 = vmul.f32 64.0, %v3597
    %v3599 = vsub.f32 1.0, %v3598
    %v3600 = vmul.f32 %v3597, %v3599
    %v3601 = vadd.f32 %v3597, %v3600
    %vm3602 = vweird.f32 %v3597
    %v3603 = vsel %vm3602, %v3597, %v3601
    %v3604 = vmul.f32 %v3596, %v3603
    %v3605 = vsub.f32 %v3584, %v3604
    %v3606 = vmul.f32 %v3605, %v3605
    %v3607 = vsel %vm623, %v3606, 0.0
    %3608 = vadd.xlane.f32.xlu0 %v3607
    %v3609 = vpop.xlane.xlu0 %3608
    %v3610 = vmul.f32 %v3609, %v3603
    %v3611 = vadd.f32 %v3610, 1e-05
    %v3612 = vrsqrt.pop %v3611
    %v3613 = vmul.f32 %v3612, %v3611
    %v3614 = vmul.f32 %v3613, %v3612
    %v3615 = vmul.f32 0.5, %v3614
    %v3616 = vsub.f32 1.5, %v3615
    %v3617 = vmul.f32 %v3612, %v3616
    %vm3618 = vweird.f32 %v3611
    %vm3619 = vweird.f32 %v3612
    %vm3620 = vmor %vm3618, %vm3619
    %v3621 = vsel %vm3620, %v3612, %v3617
    %v3622 = vmul.f32 %v3605, %v3621
    %v3623 = vperm.slane %v3593, 0
    %v3624 = vmul.f32 %v3622, %v3623
    %v3625 = vperm.slane %v3593, 1
    %v3626 = vadd.f32 %v3624, %v3625
    %v3627 = vsel %vm623, %v3592, 0.0
    %3628 = vadd.xlane.f32.xlu0 %v3627
    %v3629 = vpop.xlane.xlu0 %3628
    %v3630 = vmul.f32 %v3629, %v3603
    %v3631 = vsub.f32 %v3592, %v3630
    %v3632 = vmul.f32 %v3631, %v3631
    %v3633 = vsel %vm623, %v3632, 0.0
    %3634 = vadd.xlane.f32.xlu0 %v3633
    %v3635 = vpop.xlane.xlu0 %3634
    %v3636 = vmul.f32 %v3635, %v3603
    %v3637 = vadd.f32 %v3636, 1e-05
    %v3638 = vrsqrt.pop %v3637
    %v3639 = vmul.f32 %v3638, %v3637
    %v3640 = vmul.f32 %v3639, %v3638
    %v3641 = vmul.f32 0.5, %v3640
    %v3642 = vsub.f32 1.5, %v3641
    %v3643 = vmul.f32 %v3638, %v3642
    %vm3644 = vweird.f32 %v3637
    %vm3645 = vweird.f32 %v3638
    %vm3646 = vmor %vm3644, %vm3645
    %v3647 = vsel %vm3646, %v3638, %v3643
    %v3648 = vmul.f32 %v3631, %v3647
    %3650 = vrot.lane.b32.xlu0 %v3623, 64
    %v3651 = vpop.permute.xlu0 %3650
    %v3653 = vmul.f32 %v3648, %v3651
    %3655 = vrot.lane.b32.xlu0 %v3625, 64
    %v3656 = vpop.permute.xlu0 %3655
    %v3658 = vadd.f32 %v3653, %v3656
    %3660 = vrot.lane.b32.xlu0 %v3658, 64
    %v3661 = vpop.permute.xlu0 %3660
    %v3663 = vsel %vm623, %v3626, %v3661
    %v3664 = vld [vmem:[%s4] sm:$0xff]
    %v3665 = vld [vmem:[%s4 + $0x8] sm:$0xff]
    %v3666 = vld [vmem:[%s4 + $0x10] sm:$0xff]
    %v3667 = vld [vmem:[%s4 + $0x18] sm:$0xff]
    %v3668 = vld [vmem:[%s4 + $0x20] sm:$0xff]
    %v3669 = vld [vmem:[%s4 + $0x28] sm:$0xff]
    %v3670 = vld [vmem:[%s4 + $0x30] sm:$0xff]
    %v3671 = vld [vmem:[%s4 + $0x38] sm:$0xff]
    %v3672 = vld [vmem:[%s4 + $0x40] sm:$0xff]
    %v3673 = vld [vmem:[%s4 + $0x48] sm:$0xff]
    %v3674 = vld [vmem:[%s4 + $0x50] sm:$0xff]
    %v3675 = vld [vmem:[%s4 + $0x58] sm:$0xff]
    %v3676 = vld [vmem:[%s4 + $0x60] sm:$0xff]
    %v3677 = vld [vmem:[%s4 + $0x68] sm:$0xff]
    %v3678 = vld [vmem:[%s4 + $0x70] sm:$0xff]
    %v3679 = vld [vmem:[%s4 + $0x78] sm:$0xff]
    %v3680 = vld [vmem:[%s4 + $0x80] sm:$0xff]
    %v3681 = vld [vmem:[%s4 + $0x88] sm:$0xff]
    %v3682 = vld [vmem:[%s4 + $0x90] sm:$0xff]
    %v3683 = vld [vmem:[%s4 + $0x98] sm:$0xff]
    %v3684 = vld [vmem:[%s4 + $0xa0] sm:$0xff]
    %v3685 = vld [vmem:[%s4 + $0xa8] sm:$0xff]
    %v3686 = vld [vmem:[%s5] sm:$0x7]
    %v3687 = vperm.slane %v3686, 0
    %3688 = vmatpush.msra.mxu0 %v3679
    %3689 = vmatpush.msra.mxu0 %v3678
    %3690 = vmatpush.msra.mxu0 %v3677
    %3691 = vmatpush.msra.mxu0 %v3676
    %3692 = vmatpush.msra.mxu0 %v3675
    %3693 = vmatpush.msra.mxu0 %v3674
    %3694 = vmatpush.msra.mxu0 %v3673
    %3695 = vmatpush.msra.mxu0 %v3672
    %3696 = vmatpush.msra.mxu0 %v3671
    %3697 = vmatpush.msra.mxu0 %v3670
    %3698 = vmatpush.msra.mxu0 %v3669
    %3699 = vmatpush.msra.mxu0 %v3668
    %3700 = vmatpush.msra.mxu0 %v3667
    %3701 = vmatpush.msra.mxu0 %v3666
    %3702 = vmatpush.msra.mxu0 %v3665
    %3703 = vmatpush.msra.mxu0 %v3664
    %3704 = vmatmul.f32.gmra.mxu0 %v3663
    %v3705 = vpop.f32.mrf.mxu0
    %v3706 = vadd.f32 %v3687, %v3705
    %3707 = vdwg.mxu0
    %v3708 = vmax.f32 %v3706, 0.0
    %v3709 = vperm.slane %v3686, 1
    %v3711 = vsel %vm3583, %v3708, 0
    %3713 = vmatpush.msra.mxu0 0.0
    %3714 = vmatpush.msra.mxu0 0.0
    %3715 = vmatpush.msra.mxu0 0.0
    %3716 = vmatpush.msra.mxu0 0.0
    %3717 = vmatpush.msra.mxu0 0.0
    %3718 = vmatpush.msra.mxu0 0.0
    %3719 = vmatpush.msra.mxu0 0.0
    %3720 = vmatpush.msra.mxu0 0.0
    %3721 = vmatpush.msra.mxu0 0.0
    %3722 = vmatpush.msra.mxu0 0.0
    %3723 = vmatpush.msra.mxu0 0.0
    %3724 = vmatpush.msra.mxu0 0.0
    %3725 = vmatpush.msra.mxu0 %v3683
    %3726 = vmatpush.msra.mxu0 %v3682
    %3727 = vmatpush.msra.mxu0 %v3681
    %3728 = vmatpush.msra.mxu0 %v3680
    %3729 = vmatmul.f32.gmra.mxu0 %v3711
    %v3730 = vpop.f32.mrf.mxu0
    %v3731 = vadd.f32 %v3709, %v3730
    %3732 = vdwg.mxu0
    %v3733 = vmax.f32 %v3731, 0.0
    %v3734 = vperm.slane %v3686, 2
    %vm3735 = vcmask 130048
    %v3737 = vsel %vm3735, %v3733, 0
    %3739 = vmatpush.msra.mxu0 0.0
    %3740 = vmatpush.msra.mxu0 0.0
    %3741 = vmatpush.msra.mxu0 0.0
    %3742 = vmatpush.msra.mxu0 0.0
    %3743 = vmatpush.msra.mxu0 0.0
    %3744 = vmatpush.msra.mxu0 0.0
    %3745 = vmatpush.msra.mxu0 0.0
    %3746 = vmatpush.msra.mxu0 0.0
    %3747 = vmatpush.msra.mxu0 0.0
    %3748 = vmatpush.msra.mxu0 0.0
    %3749 = vmatpush.msra.mxu0 0.0
    %3750 = vmatpush.msra.mxu0 0.0
    %3751 = vmatpush.msra.mxu0 0.0
    %3752 = vmatpush.msra.mxu0 0.0
    %3753 = vmatpush.msra.mxu0 %v3685
    %3754 = vmatpush.msra.mxu0 %v3684
    %3755 = vmatmul.f32.gmra.mxu0 %v3737
    %v3756 = vpop.f32.mrf.mxu0
    %v3757 = vadd.f32 %v3734, %v3756
    %3758 = vdwg.mxu0
    %v3759 = vxor.u32 %v3757, 2147483648
    %v3760 = vmul.f32 %v3759, 1.442695
    %v3761 = vpow.pop %v3760
    %v3762 = vadd.f32 %v3761, 1.0
    %v3763 = vrcp.pop %v3762
    %v3764 = vmul.f32 %v3762, %v3763
    %v3765 = vsub.f32 1.0, %v3764
    %v3766 = vmul.f32 %v3763, %v3765
    %v3767 = vadd.f32 %v3763, %v3766
    %vm3768 = vweird.f32 %v3762
    %vm3769 = vweird.f32 %v3763
    %vm3770 = vmor %vm3768, %vm3769
    %v3771 = vsel %vm3770, %v3763, %v3767
    %v3772 = vand.u32 2147483647, %v3762
    %vm3773 = vcmp.eq.f32.partialorder %v3772, 8.507059e+37
    %v3774 = vand.u32 %v3762, 2147483648
    %v3775 = vor.u32 1.1754944e-38, %v3774
    %v3776 = vsel %vm3773, %v3775, %v3771
    %v3777 = vmul.f32 1.0, %v3776
    %vm3778 = vcmask 7168
    %3779 = vst.msk [vmem:[%s6] sm:$0xff] %vm3778, %v3777
    // Predicated region
    $region30: #{tpu_custom_call.1} parent=1 // pred_check
      _
    $region31: #{tpu_custom_call.1} parent=1 // pred_check_branch
      %3781 = sbr.rel (0) target = $region33
    $region32: #{tpu_custom_call.1} parent=1 // pred_region
      _
    $region33: #{tpu_custom_call.1} parent=1 // pred_fallthru
      _
    // Predicated region
    $region34: #{tpu_custom_call.1} parent=1 // pred_check
      _
    $region35: #{tpu_custom_call.1} parent=1 // pred_check_branch
      %3783 = sbr.rel (0) target = $region37
    $region36: #{tpu_custom_call.1} parent=1 // pred_region
      _
    $region37: #{tpu_custom_call.1} parent=1 // pred_fallthru
      _
    %3784 = vsyncpa [#allocation5], 1

</llo_original>
